<compile_context>
chip_gen: v6e
topology: v6e:2x2x1
jax: 0.10.0
libtpu: 0.0.40
codegen_flags: <defaults>
</compile_context>

<pallas_src>
import numpy as np
import jax
import jax.numpy as jnp
from jax.experimental import pallas as pl
from jax.experimental.pallas import tpu as pltpu

BN_EPS = 1e-5
KSIZE = 3
STRIDE = 2


# ----------------------------- constant selector builders (numpy, build-time) ----------

def _h_select(ho, hi):
    """HS[kh, i, h] = 1 iff h == 2*i + kh   (height tap selection)."""
    hs = np.zeros((KSIZE, ho, hi), np.float32)
    for kh in range(KSIZE):
        for i in range(ho):
            hs[kh, i, STRIDE * i + kh] = 1.0
    return hs


def _w_select(n, wi, wo):
    """SelW[kw, n*wi + w, n*wo + j] = 1 iff w == 2*j + kw   (block-diagonal over batch n)."""
    sw = np.zeros((KSIZE, n * wi, n * wo), np.float32)
    for kw in range(KSIZE):
        for b in range(n):
            for j in range(wo):
                sw[kw, b * wi + STRIDE * j + kw, b * wo + j] = 1.0
    return sw


def _chan_select(ho, cout):
    """CS[i*cout + co, c] = 1 iff co == c   (periodic channel selector)."""
    return np.tile(np.eye(cout, dtype=np.float32), (ho, 1))


# ----------------------------------- fused kernel --------------------------------------

def _make_kernel(dims, n):
    n_layers = len(dims)

    def kernel(*refs):
        x_ref = refs[0]
        lrefs = refs[1:1 + n_layers]          # per-layer stacked L (bf16)
        selw_ref = refs[1 + n_layers]         # (L*3, max_NWi, max_NWo) bf16, zero-padded
        cs_ref = refs[2 + n_layers]           # (HoCout_max, Cout)  f32
        cst_ref = refs[3 + n_layers]          # (Cout, HoCout_max)  f32
        gb_ref = refs[4 + n_layers]           # (L, Cout, 2)        f32  [:, :, 0]=gamma
        out_ref = refs[-1]

        a = x_ref[...]                        # (H0*C0, N*W0) bf16, rows=(h,c), cols=(n,w)
        for li, d in enumerate(dims):
            hoc = d["ho"] * d["cout"]
            nwi = n * d["wi"]
            nwo = n * d["wo"]

            # ---- Conv2d(3x3, stride 2, valid); bias dropped (cancelled by BN) -------
            # One big MXU op covers all height taps of all three width taps at once.
            v = jnp.dot(lrefs[li][...], a.astype(jnp.bfloat16),
                        preferred_element_type=jnp.float32)          # (3*hoc, nwi)
            acc = None
            for kw in range(KSIZE):
                vk = v[kw * hoc:(kw + 1) * hoc, :].astype(jnp.bfloat16)
                sw = selw_ref[li * KSIZE + kw, 0:nwi, 0:nwo]          # 0/1 width gather
                t = jnp.dot(vk, sw, preferred_element_type=jnp.float32)
                acc = t if acc is None else acc + t
            # acc: (hoc, nwo) f32, rows=(i,co), cols=(n,j)

            # ---- BatchNorm2d (training-mode batch stats, one pass) + ReLU -----------
            inv_m = 1.0 / float(n * d["ho"] * d["wo"])
            row_s = jnp.sum(acc, axis=1, keepdims=True)               # (hoc, 1)
            row_ss = jnp.sum(acc * acc, axis=1, keepdims=True)        # (hoc, 1)
            stats = jnp.concatenate([row_s, row_ss], axis=1)          # (hoc, 2)
            ms = jnp.dot(cst_ref[:, 0:hoc], stats,
                         preferred_element_type=jnp.float32) * inv_m  # (Cout, 2)
            mean = ms[:, 0:1]
            var = jnp.maximum(ms[:, 1:2] - mean * mean, 0.0)
            gb = gb_ref[li]                                           # (Cout, 2)
            scale = gb[:, 0:1] * jax.lax.rsqrt(var + BN_EPS)
            shift = gb[:, 1:2] - mean * scale
            st = jnp.concatenate([scale, shift], axis=1)              # (Cout, 2)
            svt = jnp.dot(cs_ref[0:hoc, :], st,
                          preferred_element_type=jnp.float32)         # (hoc, 2)
            a = jnp.maximum(acc * svt[:, 0:1] + svt[:, 1:2], 0.0)

        out_ref[...] = a

    return kernel


# ------------------------------------ wrapper ------------------------------------------

def make_conv_module(params, batch, h0, w0):
    """Build all selector / folded-weight constants ONCE (hoisted out of the per-call
    jitted path) and return a jitted forward(x) matching the PyTorch conv_module in
    training mode (batch-statistics BatchNorm)."""
    n = batch
    dims = []
    hi, wi, cin = h0, w0, 1
    for (wt, _b, _g, _bt) in params:
        cout = int(wt.shape[0])
        ho = (hi - KSIZE) // STRIDE + 1
        wo = (wi - KSIZE) // STRIDE + 1
        assert ho >= 1 and wo >= 1, "input too small for four stride-2 valid 3x3 convs"
        dims.append(dict(hi=hi, wi=wi, ho=ho, wo=wo, cin=cin, cout=cout))
        hi, wi, cin = ho, wo, cout
    # NOTE: shared channel selector / gamma-beta stack assumes uniform Cout (true here).
    assert all(d["cout"] == dims[0]["cout"] for d in dims)

    n_layers = len(dims)
    max_nwi = max(n * d["wi"] for d in dims)
    max_nwo = max(n * d["wo"] for d in dims)

    # Stacked per-tap conv matrices and padded width-selector stack.
    lmats = []
    selw_all = np.zeros((n_layers * KSIZE, max_nwi, max_nwo), np.float32)
    for li, ((wt, _b, _g, _bt), d) in enumerate(zip(params, dims)):
        # Conv bias intentionally dropped: exactly cancelled by the training-mode BN
        # mean subtraction that immediately follows the conv.
        hs = _h_select(d["ho"], d["hi"])                              # (3, ho, hi)
        # L[kw, i*Cout+co, h*Cin+ci] = sum_kh [h == 2i+kh] * W[co,ci,kh,kw], kw-major rows.
        lm = np.einsum("kih,ockw->wiohc", hs, np.asarray(wt, np.float32))
        lm = lm.reshape(KSIZE * d["ho"] * d["cout"], d["hi"] * d["cin"])
        lmats.append(jnp.asarray(lm, jnp.bfloat16))
        selw_all[li * KSIZE:(li + 1) * KSIZE, : n * d["wi"], : n * d["wo"]] = \
            _w_select(n, d["wi"], d["wo"])
    selw_all = jnp.asarray(selw_all, jnp.bfloat16)

    cout = dims[0]["cout"]
    ho_max = max(d["ho"] for d in dims)
    cs_np = _chan_select(ho_max, cout)                                # (ho_max*cout, cout)
    csel = jnp.asarray(cs_np, jnp.float32)
    cselt = jnp.asarray(np.ascontiguousarray(cs_np.T), jnp.float32)
    gb = jnp.asarray(np.stack(
        [np.stack([np.asarray(g, np.float32), np.asarray(bt, np.float32)], axis=-1)
         for (_w, _b, g, bt) in params], axis=0))                     # (L, Cout, 2)

    consts = tuple(lmats) + (selw_all, csel, cselt, gb)

    dlast = dims[-1]
    out_rows = dlast["ho"] * dlast["cout"]
    out_cols = n * dlast["wo"]

    call = pl.pallas_call(
        _make_kernel(dims, n),
        out_shape=jax.ShapeDtypeStruct((out_rows, out_cols), jnp.float32),
        in_specs=[pl.BlockSpec(memory_space=pltpu.MemorySpace.VMEM)] * (1 + len(consts)),
        out_specs=pl.BlockSpec(memory_space=pltpu.MemorySpace.VMEM),
        compiler_params=pltpu.CompilerParams(vmem_limit_bytes=32 * 1024 * 1024),
    )

    def forward(x_nchw, consts_):
        assert x_nchw.shape == (n, 1, h0, w0), x_nchw.shape
        # kernel activation layout: rows=(h,c) h-major, cols=(n,w) n-major; bf16 for the MXU.
        x2 = jnp.transpose(x_nchw[:, 0, :, :], (1, 0, 2)).reshape(h0, n * w0)
        y = call(x2.astype(jnp.bfloat16), *consts_)
        # (Ho*Cout, N*Wo) rows=(i,co), cols=(n,j)  ->  (N, Cout, Ho, Wo)
        y = y.reshape(dlast["ho"], dlast["cout"], n, dlast["wo"])
        return jnp.transpose(y, (2, 1, 0, 3))

    fwd = jax.jit(forward)
    return (lambda x: fwd(x, consts)), dims


# ------------------------------ params / reference / main ------------------------------

def init_params(key):
    """Deterministic init mirroring PyTorch defaults (uniform +-1/sqrt(fan_in);
    BN gamma=1, beta=0).  Conv bias is kept for parity with the PyTorch module but is
    unused by the kernel (training-mode BN cancels it exactly)."""
    layer_defs = [(1, 8), (8, 8), (8, 8), (8, 8)]  # (Cin, Cout), k=3
    params = []
    for (cin, cout) in layer_defs:
        key, kw_, kb_ = jax.random.split(key, 3)
        fan_in = cin * 3 * 3
        bound = 1.0 / np.sqrt(fan_in)
        w = jax.random.uniform(kw_, (cout, cin, 3, 3), jnp.float32, -bound, bound)
        b = jax.random.uniform(kb_, (cout,), jnp.float32, -bound, bound)
        gamma = jnp.ones((cout,), jnp.float32)
        beta = jnp.zeros((cout,), jnp.float32)
        params.append((w, b, gamma, beta))
    return params


def _reference_forward(x, params):
    """Pure-JAX reference (with bias, two-pass BN) for the correctness check."""
    y = x
    for (w, b, g, bt) in params:
        y = jax.lax.conv_general_dilated(
            y, w, window_strides=(STRIDE, STRIDE), padding="VALID",
            dimension_numbers=("NCHW", "OIHW", "NCHW"))
        y = y + b.reshape(1, -1, 1, 1)
        mean = jnp.mean(y, axis=(0, 2, 3), keepdims=True)
        var = jnp.mean((y - mean) ** 2, axis=(0, 2, 3), keepdims=True)
        y = (y - mean) * jax.lax.rsqrt(var + BN_EPS)
        y = jnp.maximum(y * g.reshape(1, -1, 1, 1) + bt.reshape(1, -1, 1, 1), 0.0)
    return y


if __name__ == "__main__":
    key = jax.random.PRNGKey(0)
    k_x, k_p = jax.random.split(key)

    # Input must be >= 31x31 spatially for four stride-2 valid 3x3 convs.
    N, H0, W0 = 2, 64, 64
    x = jax.random.normal(k_x, (N, 1, H0, W0), dtype=jnp.float32)  # NCHW
    params = init_params(k_p)

    fwd, dims = make_conv_module(params, batch=N, h0=H0, w0=W0)

    out = jax.block_until_ready(fwd(x))

    assert out.shape == (N, 8, dims[-1]["ho"], dims[-1]["wo"]), out.shape
    assert out.shape == (2, 8, 3, 3), out.shape
    assert out.dtype == jnp.float32
    assert bool(jnp.all(out >= 0.0))  # ReLU output

    ref = jax.block_until_ready(jax.jit(_reference_forward)(x, params))
    # bf16 matmul operands (f32 accumulation) -> slightly looser tolerance than pure f32.
    np.testing.assert_allclose(np.asarray(out), np.asarray(ref), rtol=2e-2, atol=2e-2)

    print("KERNEL_OK")
</pallas_src>

<mosaic_0001>
module attributes {stable_mosaic.version = 11 : i64} {
  func.func @kernel(%arg0: memref<64x128xbf16, #tpu.memory_space<vmem>>, %arg1: memref<744x64xbf16, #tpu.memory_space<vmem>>, %arg2: memref<360x248xbf16, #tpu.memory_space<vmem>>, %arg3: memref<168x120xbf16, #tpu.memory_space<vmem>>, %arg4: memref<72x56xbf16, #tpu.memory_space<vmem>>, %arg5: memref<12x128x62xbf16, #tpu.memory_space<vmem>>, %arg6: memref<248x8xf32, #tpu.memory_space<vmem>>, %arg7: memref<8x248xf32, #tpu.memory_space<vmem>>, %arg8: memref<4x8x2xf32, #tpu.memory_space<vmem>>, %arg9: memref<24x6xf32, #tpu.memory_space<vmem>>) attributes {dimension_semantics = [], scalar_prefetch = 0 : i64, scratch_operands = 0 : i64, tpu.core_type = #tpu.core_type<tc>} {
    %c0 = arith.constant 0 : index
    %c0_0 = arith.constant 0 : index
    %0 = vector.load %arg0[%c0, %c0_0] : memref<64x128xbf16, #tpu.memory_space<vmem>>, vector<64x128xbf16>
    %c0_1 = arith.constant 0 : index
    %c0_2 = arith.constant 0 : index
    %1 = vector.load %arg1[%c0_1, %c0_2] : memref<744x64xbf16, #tpu.memory_space<vmem>>, vector<744x64xbf16>
    %cst = arith.constant dense<0.000000e+00> : vector<744x128xf32>
    %2 = tpu.matmul %1, %0, %cst {dimension_numbers = #tpu.dot_dimension_numbers<[1], [0], [0], [1], [0, 0, 1, 1], [], []>} : vector<744x64xbf16>, vector<64x128xbf16>, vector<744x128xf32> -> vector<744x128xf32>
    %3 = vector.extract_strided_slice %2 {offsets = [0, 0], sizes = [248, 128], strides = [1, 1]} : vector<744x128xf32> to vector<248x128xf32>
    %4 = arith.truncf %3 : vector<248x128xf32> to vector<248x128xbf16>
    %c0_3 = arith.constant 0 : index
    %c0_4 = arith.constant 0 : index
    %c0_5 = arith.constant 0 : index
    %5 = vector.load %arg5[%c0_3, %c0_4, %c0_5] : memref<12x128x62xbf16, #tpu.memory_space<vmem>>, vector<1x128x62xbf16>
    %6 = vector.shape_cast %5 : vector<1x128x62xbf16> to vector<128x62xbf16>
    %cst_6 = arith.constant dense<0.000000e+00> : vector<248x62xf32>
    %7 = tpu.matmul %4, %6, %cst_6 {dimension_numbers = #tpu.dot_dimension_numbers<[1], [0], [0], [1], [0, 0, 1, 1], [], []>} : vector<248x128xbf16>, vector<128x62xbf16>, vector<248x62xf32> -> vector<248x62xf32>
    %8 = vector.extract_strided_slice %2 {offsets = [248, 0], sizes = [248, 128], strides = [1, 1]} : vector<744x128xf32> to vector<248x128xf32>
    %9 = arith.truncf %8 : vector<248x128xf32> to vector<248x128xbf16>
    %c1 = arith.constant 1 : index
    %c0_7 = arith.constant 0 : index
    %c0_8 = arith.constant 0 : index
    %10 = vector.load %arg5[%c1, %c0_7, %c0_8] : memref<12x128x62xbf16, #tpu.memory_space<vmem>>, vector<1x128x62xbf16>
    %11 = vector.shape_cast %10 : vector<1x128x62xbf16> to vector<128x62xbf16>
    %cst_9 = arith.constant dense<0.000000e+00> : vector<248x62xf32>
    %12 = tpu.matmul %9, %11, %cst_9 {dimension_numbers = #tpu.dot_dimension_numbers<[1], [0], [0], [1], [0, 0, 1, 1], [], []>} : vector<248x128xbf16>, vector<128x62xbf16>, vector<248x62xf32> -> vector<248x62xf32>
    %13 = arith.addf %7, %12 : vector<248x62xf32>
    %14 = vector.extract_strided_slice %2 {offsets = [496, 0], sizes = [248, 128], strides = [1, 1]} : vector<744x128xf32> to vector<248x128xf32>
    %15 = arith.truncf %14 : vector<248x128xf32> to vector<248x128xbf16>
    %c2 = arith.constant 2 : index
    %c0_10 = arith.constant 0 : index
    %c0_11 = arith.constant 0 : index
    %16 = vector.load %arg5[%c2, %c0_10, %c0_11] : memref<12x128x62xbf16, #tpu.memory_space<vmem>>, vector<1x128x62xbf16>
    %17 = vector.shape_cast %16 : vector<1x128x62xbf16> to vector<128x62xbf16>
    %cst_12 = arith.constant dense<0.000000e+00> : vector<248x62xf32>
    %18 = tpu.matmul %15, %17, %cst_12 {dimension_numbers = #tpu.dot_dimension_numbers<[1], [0], [0], [1], [0, 0, 1, 1], [], []>} : vector<248x128xbf16>, vector<128x62xbf16>, vector<248x62xf32> -> vector<248x62xf32>
    %19 = arith.addf %13, %18 : vector<248x62xf32>
    %cst_13 = arith.constant dense<0.000000e+00> : vector<248xf32>
    %20 = vector.multi_reduction <add>, %19, %cst_13 [1] : vector<248x62xf32> to vector<248xf32>
    %21 = vector.shape_cast %20 : vector<248xf32> to vector<248x1xf32>
    %22 = arith.mulf %19, %19 : vector<248x62xf32>
    %cst_14 = arith.constant dense<0.000000e+00> : vector<248xf32>
    %23 = vector.multi_reduction <add>, %22, %cst_14 [1] : vector<248x62xf32> to vector<248xf32>
    %24 = vector.shape_cast %23 : vector<248xf32> to vector<248x1xf32>
    %25 = tpu.concatenate %21, %24 in 1 : vector<248x1xf32>, vector<248x1xf32> -> vector<248x2xf32>
    %c0_15 = arith.constant 0 : index
    %c0_16 = arith.constant 0 : index
    %26 = vector.load %arg7[%c0_15, %c0_16] : memref<8x248xf32, #tpu.memory_space<vmem>>, vector<8x248xf32>
    %cst_17 = arith.constant dense<0.000000e+00> : vector<8x2xf32>
    %27 = tpu.matmul %26, %25, %cst_17 {dimension_numbers = #tpu.dot_dimension_numbers<[1], [0], [0], [1], [0, 0, 1, 1], [], []>} : vector<8x248xf32>, vector<248x2xf32>, vector<8x2xf32> -> vector<8x2xf32>
    %cst_18 = arith.constant 5.20291389E-4 : f32
    %28 = vector.broadcast %cst_18 : f32 to vector<8x2xf32>
    %29 = arith.mulf %27, %28 : vector<8x2xf32>
    %30 = vector.extract_strided_slice %29 {offsets = [0, 0], sizes = [8, 1], strides = [1, 1]} : vector<8x2xf32> to vector<8x1xf32>
    %31 = vector.extract_strided_slice %29 {offsets = [0, 1], sizes = [8, 1], strides = [1, 1]} : vector<8x2xf32> to vector<8x1xf32>
    %32 = arith.mulf %30, %30 : vector<8x1xf32>
    %33 = arith.subf %31, %32 : vector<8x1xf32>
    %cst_19 = arith.constant 0.000000e+00 : f32
    %34 = vector.broadcast %cst_19 : f32 to vector<8x1xf32>
    %35 = arith.maximumf %33, %34 : vector<8x1xf32>
    %c0_20 = arith.constant 0 : index
    %c0_21 = arith.constant 0 : index
    %c0_22 = arith.constant 0 : index
    %36 = vector.load %arg8[%c0_20, %c0_21, %c0_22] : memref<4x8x2xf32, #tpu.memory_space<vmem>>, vector<1x8x2xf32>
    %37 = vector.shape_cast %36 : vector<1x8x2xf32> to vector<8x2xf32>
    %38 = vector.extract_strided_slice %37 {offsets = [0, 0], sizes = [8, 1], strides = [1, 1]} : vector<8x2xf32> to vector<8x1xf32>
    %cst_23 = arith.constant 9.99999974E-6 : f32
    %39 = vector.broadcast %cst_23 : f32 to vector<8x1xf32>
    %40 = arith.addf %35, %39 : vector<8x1xf32>
    %41 = math.rsqrt %40 : vector<8x1xf32>
    %42 = arith.mulf %38, %41 : vector<8x1xf32>
    %43 = vector.extract_strided_slice %37 {offsets = [0, 1], sizes = [8, 1], strides = [1, 1]} : vector<8x2xf32> to vector<8x1xf32>
    %44 = arith.mulf %30, %42 : vector<8x1xf32>
    %45 = arith.subf %43, %44 : vector<8x1xf32>
    %46 = tpu.concatenate %42, %45 in 1 : vector<8x1xf32>, vector<8x1xf32> -> vector<8x2xf32>
    %c0_24 = arith.constant 0 : index
    %c0_25 = arith.constant 0 : index
    %47 = vector.load %arg6[%c0_24, %c0_25] : memref<248x8xf32, #tpu.memory_space<vmem>>, vector<248x8xf32>
    %cst_26 = arith.constant dense<0.000000e+00> : vector<248x2xf32>
    %48 = tpu.matmul %47, %46, %cst_26 {dimension_numbers = #tpu.dot_dimension_numbers<[1], [0], [0], [1], [0, 0, 1, 1], [], []>} : vector<248x8xf32>, vector<8x2xf32>, vector<248x2xf32> -> vector<248x2xf32>
    %49 = vector.extract_strided_slice %48 {offsets = [0, 0], sizes = [248, 1], strides = [1, 1]} : vector<248x2xf32> to vector<248x1xf32>
    %50 = vector.broadcast %49 : vector<248x1xf32> to vector<248x62xf32>
    %51 = arith.mulf %19, %50 : vector<248x62xf32>
    %52 = vector.extract_strided_slice %48 {offsets = [0, 1], sizes = [248, 1], strides = [1, 1]} : vector<248x2xf32> to vector<248x1xf32>
    %53 = vector.broadcast %52 : vector<248x1xf32> to vector<248x62xf32>
    %54 = arith.addf %51, %53 : vector<248x62xf32>
    %cst_27 = arith.constant 0.000000e+00 : f32
    %55 = vector.broadcast %cst_27 : f32 to vector<248x62xf32>
    %56 = arith.maximumf %54, %55 : vector<248x62xf32>
    %c0_28 = arith.constant 0 : index
    %c0_29 = arith.constant 0 : index
    %57 = vector.load %arg2[%c0_28, %c0_29] : memref<360x248xbf16, #tpu.memory_space<vmem>>, vector<360x248xbf16>
    %58 = arith.truncf %56 : vector<248x62xf32> to vector<248x62xbf16>
    %cst_30 = arith.constant dense<0.000000e+00> : vector<360x62xf32>
    %59 = tpu.matmul %57, %58, %cst_30 {dimension_numbers = #tpu.dot_dimension_numbers<[1], [0], [0], [1], [0, 0, 1, 1], [], []>} : vector<360x248xbf16>, vector<248x62xbf16>, vector<360x62xf32> -> vector<360x62xf32>
    %60 = vector.extract_strided_slice %59 {offsets = [0, 0], sizes = [120, 62], strides = [1, 1]} : vector<360x62xf32> to vector<120x62xf32>
    %61 = arith.truncf %60 : vector<120x62xf32> to vector<120x62xbf16>
    %c3 = arith.constant 3 : index
    %c0_31 = arith.constant 0 : index
    %c0_32 = arith.constant 0 : index
    %62 = vector.load %arg5[%c3, %c0_31, %c0_32] : memref<12x128x62xbf16, #tpu.memory_space<vmem>>, vector<1x62x30xbf16>
    %63 = vector.shape_cast %62 : vector<1x62x30xbf16> to vector<62x30xbf16>
    %cst_33 = arith.constant dense<0.000000e+00> : vector<120x30xf32>
    %64 = tpu.matmul %61, %63, %cst_33 {dimension_numbers = #tpu.dot_dimension_numbers<[1], [0], [0], [1], [0, 0, 1, 1], [], []>} : vector<120x62xbf16>, vector<62x30xbf16>, vector<120x30xf32> -> vector<120x30xf32>
    %65 = vector.extract_strided_slice %59 {offsets = [120, 0], sizes = [120, 62], strides = [1, 1]} : vector<360x62xf32> to vector<120x62xf32>
    %66 = arith.truncf %65 : vector<120x62xf32> to vector<120x62xbf16>
    %c4 = arith.constant 4 : index
    %c0_34 = arith.constant 0 : index
    %c0_35 = arith.constant 0 : index
    %67 = vector.load %arg5[%c4, %c0_34, %c0_35] : memref<12x128x62xbf16, #tpu.memory_space<vmem>>, vector<1x62x30xbf16>
    %68 = vector.shape_cast %67 : vector<1x62x30xbf16> to vector<62x30xbf16>
    %cst_36 = arith.constant dense<0.000000e+00> : vector<120x30xf32>
    %69 = tpu.matmul %66, %68, %cst_36 {dimension_numbers = #tpu.dot_dimension_numbers<[1], [0], [0], [1], [0, 0, 1, 1], [], []>} : vector<120x62xbf16>, vector<62x30xbf16>, vector<120x30xf32> -> vector<120x30xf32>
    %70 = arith.addf %64, %69 : vector<120x30xf32>
    %71 = vector.extract_strided_slice %59 {offsets = [240, 0], sizes = [120, 62], strides = [1, 1]} : vector<360x62xf32> to vector<120x62xf32>
    %72 = arith.truncf %71 : vector<120x62xf32> to vector<120x62xbf16>
    %c5 = arith.constant 5 : index
    %c0_37 = arith.constant 0 : index
    %c0_38 = arith.constant 0 : index
    %73 = vector.load %arg5[%c5, %c0_37, %c0_38] : memref<12x128x62xbf16, #tpu.memory_space<vmem>>, vector<1x62x30xbf16>
    %74 = vector.shape_cast %73 : vector<1x62x30xbf16> to vector<62x30xbf16>
    %cst_39 = arith.constant dense<0.000000e+00> : vector<120x30xf32>
    %75 = tpu.matmul %72, %74, %cst_39 {dimension_numbers = #tpu.dot_dimension_numbers<[1], [0], [0], [1], [0, 0, 1, 1], [], []>} : vector<120x62xbf16>, vector<62x30xbf16>, vector<120x30xf32> -> vector<120x30xf32>
    %76 = arith.addf %70, %75 : vector<120x30xf32>
    %cst_40 = arith.constant dense<0.000000e+00> : vector<120xf32>
    %77 = vector.multi_reduction <add>, %76, %cst_40 [1] : vector<120x30xf32> to vector<120xf32>
    %78 = vector.shape_cast %77 : vector<120xf32> to vector<120x1xf32>
    %79 = arith.mulf %76, %76 : vector<120x30xf32>
    %cst_41 = arith.constant dense<0.000000e+00> : vector<120xf32>
    %80 = vector.multi_reduction <add>, %79, %cst_41 [1] : vector<120x30xf32> to vector<120xf32>
    %81 = vector.shape_cast %80 : vector<120xf32> to vector<120x1xf32>
    %82 = tpu.concatenate %78, %81 in 1 : vector<120x1xf32>, vector<120x1xf32> -> vector<120x2xf32>
    %c0_42 = arith.constant 0 : index
    %c0_43 = arith.constant 0 : index
    %83 = vector.load %arg7[%c0_42, %c0_43] : memref<8x248xf32, #tpu.memory_space<vmem>>, vector<8x120xf32>
    %cst_44 = arith.constant dense<0.000000e+00> : vector<8x2xf32>
    %84 = tpu.matmul %83, %82, %cst_44 {dimension_numbers = #tpu.dot_dimension_numbers<[1], [0], [0], [1], [0, 0, 1, 1], [], []>} : vector<8x120xf32>, vector<120x2xf32>, vector<8x2xf32> -> vector<8x2xf32>
    %cst_45 = arith.constant 0.00222222228 : f32
    %85 = vector.broadcast %cst_45 : f32 to vector<8x2xf32>
    %86 = arith.mulf %84, %85 : vector<8x2xf32>
    %87 = vector.extract_strided_slice %86 {offsets = [0, 0], sizes = [8, 1], strides = [1, 1]} : vector<8x2xf32> to vector<8x1xf32>
    %88 = vector.extract_strided_slice %86 {offsets = [0, 1], sizes = [8, 1], strides = [1, 1]} : vector<8x2xf32> to vector<8x1xf32>
    %89 = arith.mulf %87, %87 : vector<8x1xf32>
    %90 = arith.subf %88, %89 : vector<8x1xf32>
    %cst_46 = arith.constant 0.000000e+00 : f32
    %91 = vector.broadcast %cst_46 : f32 to vector<8x1xf32>
    %92 = arith.maximumf %90, %91 : vector<8x1xf32>
    %c1_47 = arith.constant 1 : index
    %c0_48 = arith.constant 0 : index
    %c0_49 = arith.constant 0 : index
    %93 = vector.load %arg8[%c1_47, %c0_48, %c0_49] : memref<4x8x2xf32, #tpu.memory_space<vmem>>, vector<1x8x2xf32>
    %94 = vector.shape_cast %93 : vector<1x8x2xf32> to vector<8x2xf32>
    %95 = vector.extract_strided_slice %94 {offsets = [0, 0], sizes = [8, 1], strides = [1, 1]} : vector<8x2xf32> to vector<8x1xf32>
    %cst_50 = arith.constant 9.99999974E-6 : f32
    %96 = vector.broadcast %cst_50 : f32 to vector<8x1xf32>
    %97 = arith.addf %92, %96 : vector<8x1xf32>
    %98 = math.rsqrt %97 : vector<8x1xf32>
    %99 = arith.mulf %95, %98 : vector<8x1xf32>
    %100 = vector.extract_strided_slice %94 {offsets = [0, 1], sizes = [8, 1], strides = [1, 1]} : vector<8x2xf32> to vector<8x1xf32>
    %101 = arith.mulf %87, %99 : vector<8x1xf32>
    %102 = arith.subf %100, %101 : vector<8x1xf32>
    %103 = tpu.concatenate %99, %102 in 1 : vector<8x1xf32>, vector<8x1xf32> -> vector<8x2xf32>
    %c0_51 = arith.constant 0 : index
    %c0_52 = arith.constant 0 : index
    %104 = vector.load %arg6[%c0_51, %c0_52] : memref<248x8xf32, #tpu.memory_space<vmem>>, vector<120x8xf32>
    %cst_53 = arith.constant dense<0.000000e+00> : vector<120x2xf32>
    %105 = tpu.matmul %104, %103, %cst_53 {dimension_numbers = #tpu.dot_dimension_numbers<[1], [0], [0], [1], [0, 0, 1, 1], [], []>} : vector<120x8xf32>, vector<8x2xf32>, vector<120x2xf32> -> vector<120x2xf32>
    %106 = vector.extract_strided_slice %105 {offsets = [0, 0], sizes = [120, 1], strides = [1, 1]} : vector<120x2xf32> to vector<120x1xf32>
    %107 = vector.broadcast %106 : vector<120x1xf32> to vector<120x30xf32>
    %108 = arith.mulf %76, %107 : vector<120x30xf32>
    %109 = vector.extract_strided_slice %105 {offsets = [0, 1], sizes = [120, 1], strides = [1, 1]} : vector<120x2xf32> to vector<120x1xf32>
    %110 = vector.broadcast %109 : vector<120x1xf32> to vector<120x30xf32>
    %111 = arith.addf %108, %110 : vector<120x30xf32>
    %cst_54 = arith.constant 0.000000e+00 : f32
    %112 = vector.broadcast %cst_54 : f32 to vector<120x30xf32>
    %113 = arith.maximumf %111, %112 : vector<120x30xf32>
    %c0_55 = arith.constant 0 : index
    %c0_56 = arith.constant 0 : index
    %114 = vector.load %arg3[%c0_55, %c0_56] : memref<168x120xbf16, #tpu.memory_space<vmem>>, vector<168x120xbf16>
    %115 = arith.truncf %113 : vector<120x30xf32> to vector<120x30xbf16>
    %cst_57 = arith.constant dense<0.000000e+00> : vector<168x30xf32>
    %116 = tpu.matmul %114, %115, %cst_57 {dimension_numbers = #tpu.dot_dimension_numbers<[1], [0], [0], [1], [0, 0, 1, 1], [], []>} : vector<168x120xbf16>, vector<120x30xbf16>, vector<168x30xf32> -> vector<168x30xf32>
    %117 = vector.extract_strided_slice %116 {offsets = [0, 0], sizes = [56, 30], strides = [1, 1]} : vector<168x30xf32> to vector<56x30xf32>
    %118 = arith.truncf %117 : vector<56x30xf32> to vector<56x30xbf16>
    %c6 = arith.constant 6 : index
    %c0_58 = arith.constant 0 : index
    %c0_59 = arith.constant 0 : index
    %119 = vector.load %arg5[%c6, %c0_58, %c0_59] : memref<12x128x62xbf16, #tpu.memory_space<vmem>>, vector<1x30x14xbf16>
    %120 = vector.shape_cast %119 : vector<1x30x14xbf16> to vector<30x14xbf16>
    %cst_60 = arith.constant dense<0.000000e+00> : vector<56x14xf32>
    %121 = tpu.matmul %118, %120, %cst_60 {dimension_numbers = #tpu.dot_dimension_numbers<[1], [0], [0], [1], [0, 0, 1, 1], [], []>} : vector<56x30xbf16>, vector<30x14xbf16>, vector<56x14xf32> -> vector<56x14xf32>
    %122 = vector.extract_strided_slice %116 {offsets = [56, 0], sizes = [56, 30], strides = [1, 1]} : vector<168x30xf32> to vector<56x30xf32>
    %123 = arith.truncf %122 : vector<56x30xf32> to vector<56x30xbf16>
    %c7 = arith.constant 7 : index
    %c0_61 = arith.constant 0 : index
    %c0_62 = arith.constant 0 : index
    %124 = vector.load %arg5[%c7, %c0_61, %c0_62] : memref<12x128x62xbf16, #tpu.memory_space<vmem>>, vector<1x30x14xbf16>
    %125 = vector.shape_cast %124 : vector<1x30x14xbf16> to vector<30x14xbf16>
    %cst_63 = arith.constant dense<0.000000e+00> : vector<56x14xf32>
    %126 = tpu.matmul %123, %125, %cst_63 {dimension_numbers = #tpu.dot_dimension_numbers<[1], [0], [0], [1], [0, 0, 1, 1], [], []>} : vector<56x30xbf16>, vector<30x14xbf16>, vector<56x14xf32> -> vector<56x14xf32>
    %127 = arith.addf %121, %126 : vector<56x14xf32>
    %128 = vector.extract_strided_slice %116 {offsets = [112, 0], sizes = [56, 30], strides = [1, 1]} : vector<168x30xf32> to vector<56x30xf32>
    %129 = arith.truncf %128 : vector<56x30xf32> to vector<56x30xbf16>
    %c8 = arith.constant 8 : index
    %c0_64 = arith.constant 0 : index
    %c0_65 = arith.constant 0 : index
    %130 = vector.load %arg5[%c8, %c0_64, %c0_65] : memref<12x128x62xbf16, #tpu.memory_space<vmem>>, vector<1x30x14xbf16>
    %131 = vector.shape_cast %130 : vector<1x30x14xbf16> to vector<30x14xbf16>
    %cst_66 = arith.constant dense<0.000000e+00> : vector<56x14xf32>
    %132 = tpu.matmul %129, %131, %cst_66 {dimension_numbers = #tpu.dot_dimension_numbers<[1], [0], [0], [1], [0, 0, 1, 1], [], []>} : vector<56x30xbf16>, vector<30x14xbf16>, vector<56x14xf32> -> vector<56x14xf32>
    %133 = arith.addf %127, %132 : vector<56x14xf32>
    %cst_67 = arith.constant dense<0.000000e+00> : vector<56xf32>
    %134 = vector.multi_reduction <add>, %133, %cst_67 [1] : vector<56x14xf32> to vector<56xf32>
    %135 = vector.shape_cast %134 : vector<56xf32> to vector<56x1xf32>
    %136 = arith.mulf %133, %133 : vector<56x14xf32>
    %cst_68 = arith.constant dense<0.000000e+00> : vector<56xf32>
    %137 = vector.multi_reduction <add>, %136, %cst_68 [1] : vector<56x14xf32> to vector<56xf32>
    %138 = vector.shape_cast %137 : vector<56xf32> to vector<56x1xf32>
    %139 = tpu.concatenate %135, %138 in 1 : vector<56x1xf32>, vector<56x1xf32> -> vector<56x2xf32>
    %c0_69 = arith.constant 0 : index
    %c0_70 = arith.constant 0 : index
    %140 = vector.load %arg7[%c0_69, %c0_70] : memref<8x248xf32, #tpu.memory_space<vmem>>, vector<8x56xf32>
    %cst_71 = arith.constant dense<0.000000e+00> : vector<8x2xf32>
    %141 = tpu.matmul %140, %139, %cst_71 {dimension_numbers = #tpu.dot_dimension_numbers<[1], [0], [0], [1], [0, 0, 1, 1], [], []>} : vector<8x56xf32>, vector<56x2xf32>, vector<8x2xf32> -> vector<8x2xf32>
    %cst_72 = arith.constant 0.0102040814 : f32
    %142 = vector.broadcast %cst_72 : f32 to vector<8x2xf32>
    %143 = arith.mulf %141, %142 : vector<8x2xf32>
    %144 = vector.extract_strided_slice %143 {offsets = [0, 0], sizes = [8, 1], strides = [1, 1]} : vector<8x2xf32> to vector<8x1xf32>
    %145 = vector.extract_strided_slice %143 {offsets = [0, 1], sizes = [8, 1], strides = [1, 1]} : vector<8x2xf32> to vector<8x1xf32>
    %146 = arith.mulf %144, %144 : vector<8x1xf32>
    %147 = arith.subf %145, %146 : vector<8x1xf32>
    %cst_73 = arith.constant 0.000000e+00 : f32
    %148 = vector.broadcast %cst_73 : f32 to vector<8x1xf32>
    %149 = arith.maximumf %147, %148 : vector<8x1xf32>
    %c2_74 = arith.constant 2 : index
    %c0_75 = arith.constant 0 : index
    %c0_76 = arith.constant 0 : index
    %150 = vector.load %arg8[%c2_74, %c0_75, %c0_76] : memref<4x8x2xf32, #tpu.memory_space<vmem>>, vector<1x8x2xf32>
    %151 = vector.shape_cast %150 : vector<1x8x2xf32> to vector<8x2xf32>
    %152 = vector.extract_strided_slice %151 {offsets = [0, 0], sizes = [8, 1], strides = [1, 1]} : vector<8x2xf32> to vector<8x1xf32>
    %cst_77 = arith.constant 9.99999974E-6 : f32
    %153 = vector.broadcast %cst_77 : f32 to vector<8x1xf32>
    %154 = arith.addf %149, %153 : vector<8x1xf32>
    %155 = math.rsqrt %154 : vector<8x1xf32>
    %156 = arith.mulf %152, %155 : vector<8x1xf32>
    %157 = vector.extract_strided_slice %151 {offsets = [0, 1], sizes = [8, 1], strides = [1, 1]} : vector<8x2xf32> to vector<8x1xf32>
    %158 = arith.mulf %144, %156 : vector<8x1xf32>
    %159 = arith.subf %157, %158 : vector<8x1xf32>
    %160 = tpu.concatenate %156, %159 in 1 : vector<8x1xf32>, vector<8x1xf32> -> vector<8x2xf32>
    %c0_78 = arith.constant 0 : index
    %c0_79 = arith.constant 0 : index
    %161 = vector.load %arg6[%c0_78, %c0_79] : memref<248x8xf32, #tpu.memory_space<vmem>>, vector<56x8xf32>
    %cst_80 = arith.constant dense<0.000000e+00> : vector<56x2xf32>
    %162 = tpu.matmul %161, %160, %cst_80 {dimension_numbers = #tpu.dot_dimension_numbers<[1], [0], [0], [1], [0, 0, 1, 1], [], []>} : vector<56x8xf32>, vector<8x2xf32>, vector<56x2xf32> -> vector<56x2xf32>
    %163 = vector.extract_strided_slice %162 {offsets = [0, 0], sizes = [56, 1], strides = [1, 1]} : vector<56x2xf32> to vector<56x1xf32>
    %164 = vector.broadcast %163 : vector<56x1xf32> to vector<56x14xf32>
    %165 = arith.mulf %133, %164 : vector<56x14xf32>
    %166 = vector.extract_strided_slice %162 {offsets = [0, 1], sizes = [56, 1], strides = [1, 1]} : vector<56x2xf32> to vector<56x1xf32>
    %167 = vector.broadcast %166 : vector<56x1xf32> to vector<56x14xf32>
    %168 = arith.addf %165, %167 : vector<56x14xf32>
    %cst_81 = arith.constant 0.000000e+00 : f32
    %169 = vector.broadcast %cst_81 : f32 to vector<56x14xf32>
    %170 = arith.maximumf %168, %169 : vector<56x14xf32>
    %c0_82 = arith.constant 0 : index
    %c0_83 = arith.constant 0 : index
    %171 = vector.load %arg4[%c0_82, %c0_83] : memref<72x56xbf16, #tpu.memory_space<vmem>>, vector<72x56xbf16>
    %172 = arith.truncf %170 : vector<56x14xf32> to vector<56x14xbf16>
    %cst_84 = arith.constant dense<0.000000e+00> : vector<72x14xf32>
    %173 = tpu.matmul %171, %172, %cst_84 {dimension_numbers = #tpu.dot_dimension_numbers<[1], [0], [0], [1], [0, 0, 1, 1], [], []>} : vector<72x56xbf16>, vector<56x14xbf16>, vector<72x14xf32> -> vector<72x14xf32>
    %174 = vector.extract_strided_slice %173 {offsets = [0, 0], sizes = [24, 14], strides = [1, 1]} : vector<72x14xf32> to vector<24x14xf32>
    %175 = arith.truncf %174 : vector<24x14xf32> to vector<24x14xbf16>
    %c9 = arith.constant 9 : index
    %c0_85 = arith.constant 0 : index
    %c0_86 = arith.constant 0 : index
    %176 = vector.load %arg5[%c9, %c0_85, %c0_86] : memref<12x128x62xbf16, #tpu.memory_space<vmem>>, vector<1x14x6xbf16>
    %177 = vector.shape_cast %176 : vector<1x14x6xbf16> to vector<14x6xbf16>
    %cst_87 = arith.constant dense<0.000000e+00> : vector<24x6xf32>
    %178 = tpu.matmul %175, %177, %cst_87 {dimension_numbers = #tpu.dot_dimension_numbers<[1], [0], [0], [1], [0, 0, 1, 1], [], []>} : vector<24x14xbf16>, vector<14x6xbf16>, vector<24x6xf32> -> vector<24x6xf32>
    %179 = vector.extract_strided_slice %173 {offsets = [24, 0], sizes = [24, 14], strides = [1, 1]} : vector<72x14xf32> to vector<24x14xf32>
    %180 = arith.truncf %179 : vector<24x14xf32> to vector<24x14xbf16>
    %c10 = arith.constant 10 : index
    %c0_88 = arith.constant 0 : index
    %c0_89 = arith.constant 0 : index
    %181 = vector.load %arg5[%c10, %c0_88, %c0_89] : memref<12x128x62xbf16, #tpu.memory_space<vmem>>, vector<1x14x6xbf16>
    %182 = vector.shape_cast %181 : vector<1x14x6xbf16> to vector<14x6xbf16>
    %cst_90 = arith.constant dense<0.000000e+00> : vector<24x6xf32>
    %183 = tpu.matmul %180, %182, %cst_90 {dimension_numbers = #tpu.dot_dimension_numbers<[1], [0], [0], [1], [0, 0, 1, 1], [], []>} : vector<24x14xbf16>, vector<14x6xbf16>, vector<24x6xf32> -> vector<24x6xf32>
    %184 = arith.addf %178, %183 : vector<24x6xf32>
    %185 = vector.extract_strided_slice %173 {offsets = [48, 0], sizes = [24, 14], strides = [1, 1]} : vector<72x14xf32> to vector<24x14xf32>
    %186 = arith.truncf %185 : vector<24x14xf32> to vector<24x14xbf16>
    %c11 = arith.constant 11 : index
    %c0_91 = arith.constant 0 : index
    %c0_92 = arith.constant 0 : index
    %187 = vector.load %arg5[%c11, %c0_91, %c0_92] : memref<12x128x62xbf16, #tpu.memory_space<vmem>>, vector<1x14x6xbf16>
    %188 = vector.shape_cast %187 : vector<1x14x6xbf16> to vector<14x6xbf16>
    %cst_93 = arith.constant dense<0.000000e+00> : vector<24x6xf32>
    %189 = tpu.matmul %186, %188, %cst_93 {dimension_numbers = #tpu.dot_dimension_numbers<[1], [0], [0], [1], [0, 0, 1, 1], [], []>} : vector<24x14xbf16>, vector<14x6xbf16>, vector<24x6xf32> -> vector<24x6xf32>
    %190 = arith.addf %184, %189 : vector<24x6xf32>
    %cst_94 = arith.constant dense<0.000000e+00> : vector<24xf32>
    %191 = vector.multi_reduction <add>, %190, %cst_94 [1] : vector<24x6xf32> to vector<24xf32>
    %192 = vector.shape_cast %191 : vector<24xf32> to vector<24x1xf32>
    %193 = arith.mulf %190, %190 : vector<24x6xf32>
    %cst_95 = arith.constant dense<0.000000e+00> : vector<24xf32>
    %194 = vector.multi_reduction <add>, %193, %cst_95 [1] : vector<24x6xf32> to vector<24xf32>
    %195 = vector.shape_cast %194 : vector<24xf32> to vector<24x1xf32>
    %196 = tpu.concatenate %192, %195 in 1 : vector<24x1xf32>, vector<24x1xf32> -> vector<24x2xf32>
    %c0_96 = arith.constant 0 : index
    %c0_97 = arith.constant 0 : index
    %197 = vector.load %arg7[%c0_96, %c0_97] : memref<8x248xf32, #tpu.memory_space<vmem>>, vector<8x24xf32>
    %cst_98 = arith.constant dense<0.000000e+00> : vector<8x2xf32>
    %198 = tpu.matmul %197, %196, %cst_98 {dimension_numbers = #tpu.dot_dimension_numbers<[1], [0], [0], [1], [0, 0, 1, 1], [], []>} : vector<8x24xf32>, vector<24x2xf32>, vector<8x2xf32> -> vector<8x2xf32>
    %cst_99 = arith.constant 0.055555556 : f32
    %199 = vector.broadcast %cst_99 : f32 to vector<8x2xf32>
    %200 = arith.mulf %198, %199 : vector<8x2xf32>
    %201 = vector.extract_strided_slice %200 {offsets = [0, 0], sizes = [8, 1], strides = [1, 1]} : vector<8x2xf32> to vector<8x1xf32>
    %202 = vector.extract_strided_slice %200 {offsets = [0, 1], sizes = [8, 1], strides = [1, 1]} : vector<8x2xf32> to vector<8x1xf32>
    %203 = arith.mulf %201, %201 : vector<8x1xf32>
    %204 = arith.subf %202, %203 : vector<8x1xf32>
    %cst_100 = arith.constant 0.000000e+00 : f32
    %205 = vector.broadcast %cst_100 : f32 to vector<8x1xf32>
    %206 = arith.maximumf %204, %205 : vector<8x1xf32>
    %c3_101 = arith.constant 3 : index
    %c0_102 = arith.constant 0 : index
    %c0_103 = arith.constant 0 : index
    %207 = vector.load %arg8[%c3_101, %c0_102, %c0_103] : memref<4x8x2xf32, #tpu.memory_space<vmem>>, vector<1x8x2xf32>
    %208 = vector.shape_cast %207 : vector<1x8x2xf32> to vector<8x2xf32>
    %209 = vector.extract_strided_slice %208 {offsets = [0, 0], sizes = [8, 1], strides = [1, 1]} : vector<8x2xf32> to vector<8x1xf32>
    %cst_104 = arith.constant 9.99999974E-6 : f32
    %210 = vector.broadcast %cst_104 : f32 to vector<8x1xf32>
    %211 = arith.addf %206, %210 : vector<8x1xf32>
    %212 = math.rsqrt %211 : vector<8x1xf32>
    %213 = arith.mulf %209, %212 : vector<8x1xf32>
    %214 = vector.extract_strided_slice %208 {offsets = [0, 1], sizes = [8, 1], strides = [1, 1]} : vector<8x2xf32> to vector<8x1xf32>
    %215 = arith.mulf %201, %213 : vector<8x1xf32>
    %216 = arith.subf %214, %215 : vector<8x1xf32>
    %217 = tpu.concatenate %213, %216 in 1 : vector<8x1xf32>, vector<8x1xf32> -> vector<8x2xf32>
    %c0_105 = arith.constant 0 : index
    %c0_106 = arith.constant 0 : index
    %218 = vector.load %arg6[%c0_105, %c0_106] : memref<248x8xf32, #tpu.memory_space<vmem>>, vector<24x8xf32>
    %cst_107 = arith.constant dense<0.000000e+00> : vector<24x2xf32>
    %219 = tpu.matmul %218, %217, %cst_107 {dimension_numbers = #tpu.dot_dimension_numbers<[1], [0], [0], [1], [0, 0, 1, 1], [], []>} : vector<24x8xf32>, vector<8x2xf32>, vector<24x2xf32> -> vector<24x2xf32>
    %220 = vector.extract_strided_slice %219 {offsets = [0, 0], sizes = [24, 1], strides = [1, 1]} : vector<24x2xf32> to vector<24x1xf32>
    %221 = vector.broadcast %220 : vector<24x1xf32> to vector<24x6xf32>
    %222 = arith.mulf %190, %221 : vector<24x6xf32>
    %223 = vector.extract_strided_slice %219 {offsets = [0, 1], sizes = [24, 1], strides = [1, 1]} : vector<24x2xf32> to vector<24x1xf32>
    %224 = vector.broadcast %223 : vector<24x1xf32> to vector<24x6xf32>
    %225 = arith.addf %222, %224 : vector<24x6xf32>
    %cst_108 = arith.constant 0.000000e+00 : f32
    %226 = vector.broadcast %cst_108 : f32 to vector<24x6xf32>
    %227 = arith.maximumf %225, %226 : vector<24x6xf32>
    %c0_109 = arith.constant 0 : index
    %c0_110 = arith.constant 0 : index
    %228 = vector.load %arg9[%c0_109, %c0_110] : memref<24x6xf32, #tpu.memory_space<vmem>>, vector<24x6xf32>
    tpu.vector_store %arg9[%c0_109, %c0_110], %227 {strides = array<i32>} : memref<24x6xf32, #tpu.memory_space<vmem>>, vector<24x6xf32>,
    return
  }
}

</mosaic_0001>

<llo_original>
// kernel: forward.1
$region0: #{forward.1}
  #allocation0 [shape = 'u32[]', space=smem, size = 0x4, offset = 0x4, fixed_abs, tag = 'smem constant byte address 0x4 - core index']
  #allocation1 [shape = 'u32[144,128]{1,0:T(1,128)}', space=vmem, size = 0x12000, scoped, tag = 'internal scratch']
  %s0 = inlined_call_operand.vmem [shape: bf16[64,128], index: 0, kind: input, shape index: {}]
  %s1 = inlined_call_operand.vmem [shape: bf16[744,64], index: 1, kind: input, shape index: {}]
  %s2 = inlined_call_operand.vmem [shape: bf16[360,248], index: 2, kind: input, shape index: {}]
  %s3 = inlined_call_operand.vmem [shape: bf16[168,120], index: 3, kind: input, shape index: {}]
  %s4 = inlined_call_operand.vmem [shape: bf16[72,56], index: 4, kind: input, shape index: {}]
  %s5 = inlined_call_operand.vmem [shape: bf16[12,128,62], index: 5, kind: input, shape index: {}]
  %s6 = inlined_call_operand.vmem [shape: f32[248,8], index: 6, kind: input, shape index: {}]
  %s7 = inlined_call_operand.vmem [shape: f32[8,248], index: 7, kind: input, shape index: {}]
  %s8 = inlined_call_operand.vmem [shape: f32[4,8,2], index: 8, kind: input, shape index: {}]
  %s9 = inlined_call_operand.vmem [shape: f32[24,6], index: 9, kind: output, shape index: {}]
  %s10 = sld [smem:[#allocation0]]
  $region46: #{forward.1} parent=0
    _
  %s12 = ssub.s32 1, %s10
  %s13 = scalar_select 0, %s12, %s10
  // Predicated region
  $region2: #{forward.1} parent=0 // pred_check
    _
  $region3: #{forward.1} parent=0 // pred_check_branch
    %15 = sbr.rel (0) target = $region5
  $region4: #{forward.1} parent=0 // pred_region
    _
  $region5: #{forward.1} parent=0 // pred_fallthru
    _
  // Predicated region
  $region6: #{forward.1} parent=0 // pred_check
    _
  $region7: #{forward.1} parent=0 // pred_check_branch
    %17 = sbr.rel (0) target = $region9
  $region8: #{forward.1} parent=0 // pred_region
    _
  $region9: #{forward.1} parent=0 // pred_fallthru
    _
  // Predicated region
  $region10: #{forward.1} parent=0 // pred_check
    _
  $region11: #{forward.1} parent=0 // pred_check_branch
    %19 = sbr.rel (0) target = $region13
  $region12: #{forward.1} parent=0 // pred_region
    _
  $region13: #{forward.1} parent=0 // pred_fallthru
    _
  // Predicated region
  $region14: #{forward.1} parent=0 // pred_check
    _
  $region15: #{forward.1} parent=0 // pred_check_branch
    %21 = sbr.rel (0) target = $region17
  $region16: #{forward.1} parent=0 // pred_region
    _
  $region17: #{forward.1} parent=0 // pred_fallthru
    _
  // Predicated region
  $region18: #{forward.1} parent=0 // pred_check
    _
  $region19: #{forward.1} parent=0 // pred_check_branch
    %23 = sbr.rel (0) target = $region21
  $region20: #{forward.1} parent=0 // pred_region
    _
  $region21: #{forward.1} parent=0 // pred_fallthru
    _
  // Predicated region
  $region22: #{forward.1} parent=0 // pred_check
    _
  $region23: #{forward.1} parent=0 // pred_check_branch
    %25 = sbr.rel (0) target = $region25
  $region24: #{forward.1} parent=0 // pred_region
    _
  $region25: #{forward.1} parent=0 // pred_fallthru
    _
  // Predicated region
  $region26: #{forward.1} parent=0 // pred_check
    _
  $region27: #{forward.1} parent=0 // pred_check_branch
    %27 = sbr.rel (0) target = $region29
  $region28: #{forward.1} parent=0 // pred_region
    _
  $region29: #{forward.1} parent=0 // pred_fallthru
    _
  // Predicated region
  $region30: #{forward.1} parent=0 // pred_check
    _
  $region31: #{forward.1} parent=0 // pred_check_branch
    %29 = sbr.rel (0) target = $region33
  $region32: #{forward.1} parent=0 // pred_region
    _
  $region33: #{forward.1} parent=0 // pred_fallthru
    _
  // Predicated region
  $region34: #{forward.1} parent=0 // pred_check
    _
  $region35: #{forward.1} parent=0 // pred_check_branch
    %31 = sbr.rel (0) target = $region37
  $region36: #{forward.1} parent=0 // pred_region
    _
  $region37: #{forward.1} parent=0 // pred_fallthru
    _
  %v33 = vld [vmem:[%s0] sm:$0xf]
  %v34 = vld [vmem:[%s0 + $0x4] sm:$0xf]
  %v35 = vld [vmem:[%s0 + $0x8] sm:$0xf]
  %v36 = vld [vmem:[%s0 + $0xc] sm:$0xf]
  %v37 = vld [vmem:[%s0 + $0x10] sm:$0xf]
  %v38 = vld [vmem:[%s0 + $0x14] sm:$0xf]
  %v39 = vld [vmem:[%s0 + $0x18] sm:$0xf]
  %v40 = vld [vmem:[%s0 + $0x1c] sm:$0xf]
  %v41 = vld [vmem:[%s1] sm:$0xf]
  %v42 = vld [vmem:[%s1 + $0x4] sm:$0xf]
  %v43 = vld [vmem:[%s1 + $0x8] sm:$0xf]
  %v44 = vld [vmem:[%s1 + $0xc] sm:$0xf]
  %v45 = vld [vmem:[%s1 + $0x10] sm:$0xf]
  %v46 = vld [vmem:[%s1 + $0x14] sm:$0xf]
  %v47 = vld [vmem:[%s1 + $0x18] sm:$0xf]
  %v48 = vld [vmem:[%s1 + $0x1c] sm:$0xf]
  %v49 = vld [vmem:[%s1 + $0x20] sm:$0xf]
  %v50 = vld [vmem:[%s1 + $0x24] sm:$0xf]
  %v51 = vld [vmem:[%s1 + $0x28] sm:$0xf]
  %v52 = vld [vmem:[%s1 + $0x2c] sm:$0xf]
  %v53 = vld [vmem:[%s1 + $0x30] sm:$0xf]
  %v54 = vld [vmem:[%s1 + $0x34] sm:$0xf]
  %v55 = vld [vmem:[%s1 + $0x38] sm:$0xf]
  %v56 = vld [vmem:[%s1 + $0x3c] sm:$0xf]
  %v57 = vld [vmem:[%s1 + $0x40] sm:$0xf]
  %v58 = vld [vmem:[%s1 + $0x44] sm:$0xf]
  %v59 = vld [vmem:[%s1 + $0x48] sm:$0xf]
  %v60 = vld [vmem:[%s1 + $0x4c] sm:$0xf]
  %v61 = vld [vmem:[%s1 + $0x50] sm:$0xf]
  %v62 = vld [vmem:[%s1 + $0x54] sm:$0xf]
  %v63 = vld [vmem:[%s1 + $0x58] sm:$0xf]
  %v64 = vld [vmem:[%s1 + $0x5c] sm:$0xf]
  %v65 = vld [vmem:[%s1 + $0x60] sm:$0xf]
  %v66 = vld [vmem:[%s1 + $0x64] sm:$0xf]
  %v67 = vld [vmem:[%s1 + $0x68] sm:$0xf]
  %v68 = vld [vmem:[%s1 + $0x6c] sm:$0xf]
  %v69 = vld [vmem:[%s1 + $0x70] sm:$0xf]
  %v70 = vld [vmem:[%s1 + $0x74] sm:$0xf]
  %v71 = vld [vmem:[%s1 + $0x78] sm:$0xf]
  %v72 = vld [vmem:[%s1 + $0x7c] sm:$0xf]
  %v73 = vld [vmem:[%s1 + $0x80] sm:$0xf]
  %v74 = vld [vmem:[%s1 + $0x84] sm:$0xf]
  %v75 = vld [vmem:[%s1 + $0x88] sm:$0xf]
  %v76 = vld [vmem:[%s1 + $0x8c] sm:$0xf]
  %v77 = vld [vmem:[%s1 + $0x90] sm:$0xf]
  %v78 = vld [vmem:[%s1 + $0x94] sm:$0xf]
  %v79 = vld [vmem:[%s1 + $0x98] sm:$0xf]
  %v80 = vld [vmem:[%s1 + $0x9c] sm:$0xf]
  %v81 = vld [vmem:[%s1 + $0xa0] sm:$0xf]
  %v82 = vld [vmem:[%s1 + $0xa4] sm:$0xf]
  %v83 = vld [vmem:[%s1 + $0xa8] sm:$0xf]
  %v84 = vld [vmem:[%s1 + $0xac] sm:$0xf]
  %v85 = vld [vmem:[%s1 + $0xb0] sm:$0xf]
  %v86 = vld [vmem:[%s1 + $0xb4] sm:$0xf]
  %v87 = vld [vmem:[%s1 + $0xb8] sm:$0xf]
  %v88 = vld [vmem:[%s1 + $0xbc] sm:$0xf]
  %v89 = vld [vmem:[%s1 + $0xc0] sm:$0xf]
  %v90 = vld [vmem:[%s1 + $0xc4] sm:$0xf]
  %v91 = vld [vmem:[%s1 + $0xc8] sm:$0xf]
  %v92 = vld [vmem:[%s1 + $0xcc] sm:$0xf]
  %v93 = vld [vmem:[%s1 + $0xd0] sm:$0xf]
  %v94 = vld [vmem:[%s1 + $0xd4] sm:$0xf]
  %v95 = vld [vmem:[%s1 + $0xd8] sm:$0xf]
  %v96 = vld [vmem:[%s1 + $0xdc] sm:$0xf]
  %v97 = vld [vmem:[%s1 + $0xe0] sm:$0xf]
  %v98 = vld [vmem:[%s1 + $0xe4] sm:$0xf]
  %v99 = vld [vmem:[%s1 + $0xe8] sm:$0xf]
  %v100 = vld [vmem:[%s1 + $0xec] sm:$0xf]
  %v101 = vld [vmem:[%s1 + $0xf0] sm:$0xf]
  %v102 = vld [vmem:[%s1 + $0xf4] sm:$0xf]
  %v103 = vld [vmem:[%s1 + $0xf8] sm:$0xf]
  %v104 = vld [vmem:[%s1 + $0xfc] sm:$0xf]
  %v105 = vld [vmem:[%s1 + $0x100] sm:$0xf]
  %v106 = vld [vmem:[%s1 + $0x104] sm:$0xf]
  %v107 = vld [vmem:[%s1 + $0x108] sm:$0xf]
  %v108 = vld [vmem:[%s1 + $0x10c] sm:$0xf]
  %v109 = vld [vmem:[%s1 + $0x110] sm:$0xf]
  %v110 = vld [vmem:[%s1 + $0x114] sm:$0xf]
  %v111 = vld [vmem:[%s1 + $0x118] sm:$0xf]
  %v112 = vld [vmem:[%s1 + $0x11c] sm:$0xf]
  %v113 = vld [vmem:[%s1 + $0x120] sm:$0xf]
  %v114 = vld [vmem:[%s1 + $0x124] sm:$0xf]
  %v115 = vld [vmem:[%s1 + $0x128] sm:$0xf]
  %v116 = vld [vmem:[%s1 + $0x12c] sm:$0xf]
  %v117 = vld [vmem:[%s1 + $0x130] sm:$0xf]
  %v118 = vld [vmem:[%s1 + $0x134] sm:$0xf]
  %v119 = vld [vmem:[%s1 + $0x138] sm:$0xf]
  %v120 = vld [vmem:[%s1 + $0x13c] sm:$0xf]
  %v121 = vld [vmem:[%s1 + $0x140] sm:$0xf]
  %v122 = vld [vmem:[%s1 + $0x144] sm:$0xf]
  %v123 = vld [vmem:[%s1 + $0x148] sm:$0xf]
  %v124 = vld [vmem:[%s1 + $0x14c] sm:$0xf]
  %v125 = vld [vmem:[%s1 + $0x150] sm:$0xf]
  %v126 = vld [vmem:[%s1 + $0x154] sm:$0xf]
  %v127 = vld [vmem:[%s1 + $0x158] sm:$0xf]
  %v128 = vld [vmem:[%s1 + $0x15c] sm:$0xf]
  %v129 = vld [vmem:[%s1 + $0x160] sm:$0xf]
  %v130 = vld [vmem:[%s1 + $0x164] sm:$0xf]
  %v131 = vld [vmem:[%s1 + $0x168] sm:$0xf]
  %v132 = vld [vmem:[%s1 + $0x16c] sm:$0xf]
  %v133 = vld [vmem:[%s1 + $0x170] sm:$0xf]
  %v227 = vunpack.c.l.b16 %v41
  %v228 = vunpack.c.l.b16 %v42
  %v229 = vunpack.c.l.b16 %v43
  %v230 = vunpack.c.l.b16 %v44
  %v231 = vunpack.c.l.b16 %v45
  %v232 = vunpack.c.l.b16 %v46
  %v233 = vunpack.c.l.b16 %v47
  %v234 = vunpack.c.l.b16 %v48
  %v235 = vunpack.c.l.b16 %v49
  %v236 = vunpack.c.l.b16 %v50
  %v237 = vunpack.c.l.b16 %v51
  %v238 = vunpack.c.l.b16 %v52
  %v239 = vunpack.c.l.b16 %v53
  %v240 = vunpack.c.l.b16 %v54
  %v241 = vunpack.c.l.b16 %v55
  %v242 = vunpack.c.l.b16 %v56
  %v243 = vunpack.c.l.b16 %v57
  %v244 = vunpack.c.l.b16 %v58
  %v245 = vunpack.c.l.b16 %v59
  %v246 = vunpack.c.l.b16 %v60
  %v247 = vunpack.c.l.b16 %v61
  %v248 = vunpack.c.l.b16 %v62
  %v249 = vunpack.c.l.b16 %v63
  %v250 = vunpack.c.l.b16 %v64
  %v251 = vunpack.c.l.b16 %v65
  %v252 = vunpack.c.l.b16 %v66
  %v253 = vunpack.c.l.b16 %v67
  %v254 = vunpack.c.l.b16 %v68
  %v255 = vunpack.c.l.b16 %v69
  %v256 = vunpack.c.l.b16 %v70
  %v257 = vunpack.c.l.b16 %v71
  %v258 = vunpack.c.l.b16 %v72
  %v259 = vunpack.c.l.b16 %v73
  %v260 = vunpack.c.l.b16 %v74
  %v261 = vunpack.c.l.b16 %v75
  %v262 = vunpack.c.l.b16 %v76
  %v263 = vunpack.c.l.b16 %v77
  %v264 = vunpack.c.l.b16 %v78
  %v265 = vunpack.c.l.b16 %v79
  %v266 = vunpack.c.l.b16 %v80
  %v267 = vunpack.c.l.b16 %v81
  %v268 = vunpack.c.l.b16 %v82
  %v269 = vunpack.c.l.b16 %v83
  %v270 = vunpack.c.l.b16 %v84
  %v271 = vunpack.c.l.b16 %v85
  %v272 = vunpack.c.l.b16 %v86
  %v273 = vunpack.c.l.b16 %v87
  %v274 = vunpack.c.l.b16 %v88
  %v275 = vunpack.c.l.b16 %v89
  %v276 = vunpack.c.l.b16 %v90
  %v277 = vunpack.c.l.b16 %v91
  %v278 = vunpack.c.l.b16 %v92
  %v279 = vunpack.c.l.b16 %v93
  %v280 = vunpack.c.l.b16 %v94
  %v281 = vunpack.c.l.b16 %v95
  %v282 = vunpack.c.l.b16 %v96
  %v283 = vunpack.c.l.b16 %v97
  %v284 = vunpack.c.l.b16 %v98
  %v285 = vunpack.c.l.b16 %v99
  %v286 = vunpack.c.l.b16 %v100
  %v287 = vunpack.c.l.b16 %v101
  %v288 = vunpack.c.l.b16 %v102
  %v289 = vunpack.c.l.b16 %v103
  %v290 = vunpack.c.l.b16 %v104
  %v291 = vunpack.c.l.b16 %v105
  %v292 = vunpack.c.l.b16 %v106
  %v293 = vunpack.c.l.b16 %v107
  %v294 = vunpack.c.l.b16 %v108
  %v295 = vunpack.c.l.b16 %v109
  %v296 = vunpack.c.l.b16 %v110
  %v297 = vunpack.c.l.b16 %v111
  %v298 = vunpack.c.l.b16 %v112
  %v299 = vunpack.c.l.b16 %v113
  %v300 = vunpack.c.l.b16 %v114
  %v301 = vunpack.c.l.b16 %v115
  %v302 = vunpack.c.l.b16 %v116
  %v303 = vunpack.c.l.b16 %v117
  %v304 = vunpack.c.l.b16 %v118
  %v305 = vunpack.c.l.b16 %v119
  %v306 = vunpack.c.l.b16 %v120
  %v307 = vunpack.c.l.b16 %v121
  %v308 = vunpack.c.l.b16 %v122
  %v309 = vunpack.c.l.b16 %v123
  %v310 = vunpack.c.l.b16 %v124
  %v311 = vunpack.c.l.b16 %v125
  %v312 = vunpack.c.l.b16 %v126
  %v313 = vunpack.c.l.b16 %v127
  %v314 = vunpack.c.l.b16 %v128
  %v315 = vunpack.c.l.b16 %v129
  %v316 = vunpack.c.l.b16 %v130
  %v317 = vunpack.c.l.b16 %v131
  %v318 = vunpack.c.l.b16 %v132
  %v319 = vunpack.c.l.b16 %v133
  %v320 = vpack.c.b16 %v228, %v227
  %v321 = vpack.c.b16 %v230, %v229
  %v322 = vpack.c.b16 %v232, %v231
  %v323 = vpack.c.b16 %v234, %v233
  %v324 = vpack.c.b16 %v236, %v235
  %v325 = vpack.c.b16 %v238, %v237
  %v326 = vpack.c.b16 %v240, %v239
  %v327 = vpack.c.b16 %v242, %v241
  %v328 = vpack.c.b16 %v244, %v243
  %v329 = vpack.c.b16 %v246, %v245
  %v330 = vpack.c.b16 %v248, %v247
  %v331 = vpack.c.b16 %v250, %v249
  %v332 = vpack.c.b16 %v252, %v251
  %v333 = vpack.c.b16 %v254, %v253
  %v334 = vpack.c.b16 %v256, %v255
  %v335 = vpack.c.b16 %v258, %v257
  %v336 = vpack.c.b16 %v260, %v259
  %v337 = vpack.c.b16 %v262, %v261
  %v338 = vpack.c.b16 %v264, %v263
  %v339 = vpack.c.b16 %v266, %v265
  %v340 = vpack.c.b16 %v268, %v267
  %v341 = vpack.c.b16 %v270, %v269
  %v342 = vpack.c.b16 %v272, %v271
  %v343 = vpack.c.b16 %v274, %v273
  %v344 = vpack.c.b16 %v276, %v275
  %v345 = vpack.c.b16 %v278, %v277
  %v346 = vpack.c.b16 %v280, %v279
  %v347 = vpack.c.b16 %v282, %v281
  %v348 = vpack.c.b16 %v284, %v283
  %v349 = vpack.c.b16 %v286, %v285
  %v350 = vpack.c.b16 %v288, %v287
  %v351 = vpack.c.b16 %v290, %v289
  %v352 = vpack.c.b16 %v292, %v291
  %v353 = vpack.c.b16 %v294, %v293
  %v354 = vpack.c.b16 %v296, %v295
  %v355 = vpack.c.b16 %v298, %v297
  %v356 = vpack.c.b16 %v300, %v299
  %v357 = vpack.c.b16 %v302, %v301
  %v358 = vpack.c.b16 %v304, %v303
  %v359 = vpack.c.b16 %v306, %v305
  %v360 = vpack.c.b16 %v308, %v307
  %v361 = vpack.c.b16 %v310, %v309
  %v362 = vpack.c.b16 %v312, %v311
  %v363 = vpack.c.b16 %v314, %v313
  %v364 = vpack.c.b16 %v316, %v315
  %v365 = vpack.c.b16 %v318, %v317
  %v366 = vpack.c.b16 %v319, %v319
  %v375 = vunpack.c.l.b16 %v33
  %v376 = vunpack.c.l.b16 %v34
  %v377 = vunpack.c.l.b16 %v35
  %v378 = vunpack.c.l.b16 %v36
  %v379 = vunpack.c.l.b16 %v37
  %v380 = vunpack.c.l.b16 %v38
  %v381 = vunpack.c.l.b16 %v39
  %v382 = vunpack.c.l.b16 %v40
  %v383 = vpack.c.b16 %v376, %v375
  %v384 = vpack.c.b16 %v378, %v377
  %v385 = vpack.c.b16 %v380, %v379
  %v386 = vpack.c.b16 %v382, %v381
  %vm391 = vcmask 523264
  %v393 = vsel %vm391, %v320, 0
  %v396 = vsel %vm391, %v321, 0
  %v399 = vsel %vm391, %v322, 0
  %v402 = vsel %vm391, %v323, 0
  %v405 = vsel %vm391, %v324, 0
  %v408 = vsel %vm391, %v325, 0
  %v411 = vsel %vm391, %v326, 0
  %v414 = vsel %vm391, %v327, 0
  %v417 = vsel %vm391, %v328, 0
  %v420 = vsel %vm391, %v329, 0
  %v423 = vsel %vm391, %v330, 0
  %v426 = vsel %vm391, %v331, 0
  %v429 = vsel %vm391, %v332, 0
  %v432 = vsel %vm391, %v333, 0
  %v435 = vsel %vm391, %v334, 0
  %v438 = vsel %vm391, %v335, 0
  %v441 = vsel %vm391, %v336, 0
  %v444 = vsel %vm391, %v337, 0
  %v447 = vsel %vm391, %v338, 0
  %v450 = vsel %vm391, %v339, 0
  %v453 = vsel %vm391, %v340, 0
  %v456 = vsel %vm391, %v341, 0
  %v459 = vsel %vm391, %v342, 0
  %v462 = vsel %vm391, %v343, 0
  %v465 = vsel %vm391, %v344, 0
  %v468 = vsel %vm391, %v345, 0
  %v471 = vsel %vm391, %v346, 0
  %v474 = vsel %vm391, %v347, 0
  %v477 = vsel %vm391, %v348, 0
  %v480 = vsel %vm391, %v349, 0
  %v483 = vsel %vm391, %v350, 0
  %v486 = vsel %vm391, %v351, 0
  %v489 = vsel %vm391, %v352, 0
  %v492 = vsel %vm391, %v353, 0
  %v495 = vsel %vm391, %v354, 0
  %v498 = vsel %vm391, %v355, 0
  %v501 = vsel %vm391, %v356, 0
  %v504 = vsel %vm391, %v357, 0
  %v507 = vsel %vm391, %v358, 0
  %v510 = vsel %vm391, %v359, 0
  %v513 = vsel %vm391, %v360, 0
  %v516 = vsel %vm391, %v361, 0
  %v519 = vsel %vm391, %v362, 0
  %v522 = vsel %vm391, %v363, 0
  %v525 = vsel %vm391, %v364, 0
  %v528 = vsel %vm391, %v365, 0
  %v531 = vsel %vm391, %v366, 0
  %533 = vmatprep.subr.bf16.mxu0 0
  %534 = vmatpush1.bf16.msra.mxu0 0
  %535 = vmatprep.subr.bf16.mxu0 0
  %536 = vmatpush1.bf16.msra.mxu0 0
  %537 = vmatprep.subr.bf16.mxu0 0
  %538 = vmatpush1.bf16.msra.mxu0 0
  %539 = vmatprep.subr.bf16.mxu0 0
  %540 = vmatpush1.bf16.msra.mxu0 0
  %541 = vmatprep.subr.bf16.mxu0 0
  %542 = vmatpush1.bf16.msra.mxu0 %v386
  %543 = vmatprep.subr.bf16.mxu0 0
  %544 = vmatpush1.bf16.msra.mxu0 %v385
  %545 = vmatprep.subr.bf16.mxu0 0
  %546 = vmatpush1.bf16.msra.mxu0 %v384
  %547 = vmatprep.subr.bf16.mxu0 0
  %548 = vmatpush1.bf16.msra.mxu0 %v383
  %549 = vmatprep.subr.bf16.mxu0 0
  %550 = vmatpush2.bf16.msra.mxu0 0
  %551 = vmatprep.subr.bf16.mxu0 0
  %552 = vmatpush2.bf16.msra.mxu0 0
  %553 = vmatprep.subr.bf16.mxu0 0
  %554 = vmatpush2.bf16.msra.mxu0 0
  %555 = vmatprep.subr.bf16.mxu0 0
  %556 = vmatpush2.bf16.msra.mxu0 0
  %557 = vmatprep.subr.bf16.mxu0 0
  %558 = vmatpush2.bf16.msra.mxu0 0
  %559 = vmatprep.subr.bf16.mxu0 0
  %560 = vmatpush2.bf16.msra.mxu0 0
  %561 = vmatprep.subr.bf16.mxu0 0
  %562 = vmatpush2.bf16.msra.mxu0 0
  %563 = vmatprep.subr.bf16.mxu0 0
  %564 = vmatpush2.bf16.msra.mxu0 0
  %565 = vmatprep.mubr.bf16.mxu0 0
  %566 = vmatmul.mubr.bf16.gmra.mxu0 %v393
  %v567 = vpop.f32.mrf.mxu0
  %v568 = vadd.f32 0.0, %v567
  %v569 = vpop.f32.mrf.mxu0
  %v570 = vpop.f32.mrf.mxu0
  %v571 = vadd.f32 0.0, %v570
  %v572 = vpop.f32.mrf.mxu0
  %573 = vmatprep.mubr.bf16.mxu0 0
  %574 = vmatmul.mubr.bf16.gmra.mxu0 %v396
  %v575 = vpop.f32.mrf.mxu0
  %v576 = vadd.f32 0.0, %v575
  %v577 = vpop.f32.mrf.mxu0
  %v578 = vpop.f32.mrf.mxu0
  %v579 = vadd.f32 0.0, %v578
  %v580 = vpop.f32.mrf.mxu0
  %581 = vmatprep.mubr.bf16.mxu0 0
  %582 = vmatmul.mubr.bf16.gmra.mxu0 %v399
  %v583 = vpop.f32.mrf.mxu0
  %v584 = vadd.f32 0.0, %v583
  %v585 = vpop.f32.mrf.mxu0
  %v586 = vpop.f32.mrf.mxu0
  %v587 = vadd.f32 0.0, %v586
  %v588 = vpop.f32.mrf.mxu0
  %589 = vmatprep.mubr.bf16.mxu0 0
  %590 = vmatmul.mubr.bf16.gmra.mxu0 %v402
  %v591 = vpop.f32.mrf.mxu0
  %v592 = vadd.f32 0.0, %v591
  %v593 = vpop.f32.mrf.mxu0
  %v594 = vpop.f32.mrf.mxu0
  %v595 = vadd.f32 0.0, %v594
  %v596 = vpop.f32.mrf.mxu0
  %597 = vmatprep.mubr.bf16.mxu0 0
  %598 = vmatmul.mubr.bf16.gmra.mxu0 %v405
  %v599 = vpop.f32.mrf.mxu0
  %v600 = vadd.f32 0.0, %v599
  %v601 = vpop.f32.mrf.mxu0
  %v602 = vpop.f32.mrf.mxu0
  %v603 = vadd.f32 0.0, %v602
  %v604 = vpop.f32.mrf.mxu0
  %605 = vmatprep.mubr.bf16.mxu0 0
  %606 = vmatmul.mubr.bf16.gmra.mxu0 %v408
  %v607 = vpop.f32.mrf.mxu0
  %v608 = vadd.f32 0.0, %v607
  %v609 = vpop.f32.mrf.mxu0
  %v610 = vpop.f32.mrf.mxu0
  %v611 = vadd.f32 0.0, %v610
  %v612 = vpop.f32.mrf.mxu0
  %613 = vmatprep.mubr.bf16.mxu0 0
  %614 = vmatmul.mubr.bf16.gmra.mxu0 %v411
  %v615 = vpop.f32.mrf.mxu0
  %v616 = vadd.f32 0.0, %v615
  %v617 = vpop.f32.mrf.mxu0
  %v618 = vpop.f32.mrf.mxu0
  %v619 = vadd.f32 0.0, %v618
  %v620 = vpop.f32.mrf.mxu0
  %621 = vmatprep.mubr.bf16.mxu0 0
  %622 = vmatmul.mubr.bf16.gmra.mxu0 %v414
  %v623 = vpop.f32.mrf.mxu0
  %v624 = vadd.f32 0.0, %v623
  %v625 = vpop.f32.mrf.mxu0
  %v626 = vpop.f32.mrf.mxu0
  %v627 = vadd.f32 0.0, %v626
  %v628 = vpop.f32.mrf.mxu0
  %629 = vmatprep.mubr.bf16.mxu0 0
  %630 = vmatmul.mubr.bf16.gmra.mxu0 %v417
  %v631 = vpop.f32.mrf.mxu0
  %v632 = vadd.f32 0.0, %v631
  %v633 = vpop.f32.mrf.mxu0
  %v634 = vpop.f32.mrf.mxu0
  %v635 = vadd.f32 0.0, %v634
  %v636 = vpop.f32.mrf.mxu0
  %637 = vmatprep.mubr.bf16.mxu0 0
  %638 = vmatmul.mubr.bf16.gmra.mxu0 %v420
  %v639 = vpop.f32.mrf.mxu0
  %v640 = vadd.f32 0.0, %v639
  %v641 = vpop.f32.mrf.mxu0
  %v642 = vpop.f32.mrf.mxu0
  %v643 = vadd.f32 0.0, %v642
  %v644 = vpop.f32.mrf.mxu0
  %645 = vmatprep.mubr.bf16.mxu0 0
  %646 = vmatmul.mubr.bf16.gmra.mxu0 %v423
  %v647 = vpop.f32.mrf.mxu0
  %v648 = vadd.f32 0.0, %v647
  %v649 = vpop.f32.mrf.mxu0
  %v650 = vpop.f32.mrf.mxu0
  %v651 = vadd.f32 0.0, %v650
  %v652 = vpop.f32.mrf.mxu0
  %653 = vmatprep.mubr.bf16.mxu0 0
  %654 = vmatmul.mubr.bf16.gmra.mxu0 %v426
  %v655 = vpop.f32.mrf.mxu0
  %v656 = vadd.f32 0.0, %v655
  %v657 = vpop.f32.mrf.mxu0
  %v658 = vpop.f32.mrf.mxu0
  %v659 = vadd.f32 0.0, %v658
  %v660 = vpop.f32.mrf.mxu0
  %661 = vmatprep.mubr.bf16.mxu0 0
  %662 = vmatmul.mubr.bf16.gmra.mxu0 %v429
  %v663 = vpop.f32.mrf.mxu0
  %v664 = vadd.f32 0.0, %v663
  %v665 = vpop.f32.mrf.mxu0
  %v666 = vpop.f32.mrf.mxu0
  %v667 = vadd.f32 0.0, %v666
  %v668 = vpop.f32.mrf.mxu0
  %669 = vmatprep.mubr.bf16.mxu0 0
  %670 = vmatmul.mubr.bf16.gmra.mxu0 %v432
  %v671 = vpop.f32.mrf.mxu0
  %v672 = vadd.f32 0.0, %v671
  %v673 = vpop.f32.mrf.mxu0
  %v674 = vpop.f32.mrf.mxu0
  %v675 = vadd.f32 0.0, %v674
  %v676 = vpop.f32.mrf.mxu0
  %677 = vmatprep.mubr.bf16.mxu0 0
  %678 = vmatmul.mubr.bf16.gmra.mxu0 %v435
  %v679 = vpop.f32.mrf.mxu0
  %v680 = vadd.f32 0.0, %v679
  %v681 = vpop.f32.mrf.mxu0
  %v682 = vpop.f32.mrf.mxu0
  %v683 = vadd.f32 0.0, %v682
  %v684 = vpop.f32.mrf.mxu0
  %685 = vmatprep.mubr.bf16.mxu0 0
  %686 = vmatmul.mubr.bf16.gmra.mxu0 %v438
  %v687 = vpop.f32.mrf.mxu0
  %v688 = vadd.f32 0.0, %v687
  %v689 = vpop.f32.mrf.mxu0
  %v690 = vpop.f32.mrf.mxu0
  %v691 = vadd.f32 0.0, %v690
  %v692 = vpop.f32.mrf.mxu0
  %693 = vmatprep.mubr.bf16.mxu0 0
  %694 = vmatmul.mubr.bf16.gmra.mxu0 %v441
  %v695 = vpop.f32.mrf.mxu0
  %v696 = vadd.f32 0.0, %v695
  %v697 = vpop.f32.mrf.mxu0
  %v698 = vpop.f32.mrf.mxu0
  %v699 = vadd.f32 0.0, %v698
  %v700 = vpop.f32.mrf.mxu0
  %701 = vmatprep.mubr.bf16.mxu0 0
  %702 = vmatmul.mubr.bf16.gmra.mxu0 %v444
  %v703 = vpop.f32.mrf.mxu0
  %v704 = vadd.f32 0.0, %v703
  %v705 = vpop.f32.mrf.mxu0
  %v706 = vpop.f32.mrf.mxu0
  %v707 = vadd.f32 0.0, %v706
  %v708 = vpop.f32.mrf.mxu0
  %709 = vmatprep.mubr.bf16.mxu0 0
  %710 = vmatmul.mubr.bf16.gmra.mxu0 %v447
  %v711 = vpop.f32.mrf.mxu0
  %v712 = vadd.f32 0.0, %v711
  %v713 = vpop.f32.mrf.mxu0
  %v714 = vpop.f32.mrf.mxu0
  %v715 = vadd.f32 0.0, %v714
  %v716 = vpop.f32.mrf.mxu0
  %717 = vmatprep.mubr.bf16.mxu0 0
  %718 = vmatmul.mubr.bf16.gmra.mxu0 %v450
  %v719 = vpop.f32.mrf.mxu0
  %v720 = vadd.f32 0.0, %v719
  %v721 = vpop.f32.mrf.mxu0
  %v722 = vpop.f32.mrf.mxu0
  %v723 = vadd.f32 0.0, %v722
  %v724 = vpop.f32.mrf.mxu0
  %725 = vmatprep.mubr.bf16.mxu0 0
  %726 = vmatmul.mubr.bf16.gmra.mxu0 %v453
  %v727 = vpop.f32.mrf.mxu0
  %v728 = vadd.f32 0.0, %v727
  %v729 = vpop.f32.mrf.mxu0
  %v730 = vpop.f32.mrf.mxu0
  %v731 = vadd.f32 0.0, %v730
  %v732 = vpop.f32.mrf.mxu0
  %733 = vmatprep.mubr.bf16.mxu0 0
  %734 = vmatmul.mubr.bf16.gmra.mxu0 %v456
  %v735 = vpop.f32.mrf.mxu0
  %v736 = vadd.f32 0.0, %v735
  %v737 = vpop.f32.mrf.mxu0
  %v738 = vpop.f32.mrf.mxu0
  %v739 = vadd.f32 0.0, %v738
  %v740 = vpop.f32.mrf.mxu0
  %741 = vmatprep.mubr.bf16.mxu0 0
  %742 = vmatmul.mubr.bf16.gmra.mxu0 %v459
  %v743 = vpop.f32.mrf.mxu0
  %v744 = vadd.f32 0.0, %v743
  %v745 = vpop.f32.mrf.mxu0
  %v746 = vpop.f32.mrf.mxu0
  %v747 = vadd.f32 0.0, %v746
  %v748 = vpop.f32.mrf.mxu0
  %749 = vmatprep.mubr.bf16.mxu0 0
  %750 = vmatmul.mubr.bf16.gmra.mxu0 %v462
  %v751 = vpop.f32.mrf.mxu0
  %v752 = vadd.f32 0.0, %v751
  %v753 = vpop.f32.mrf.mxu0
  %v754 = vpop.f32.mrf.mxu0
  %v755 = vadd.f32 0.0, %v754
  %v756 = vpop.f32.mrf.mxu0
  %757 = vmatprep.mubr.bf16.mxu0 0
  %758 = vmatmul.mubr.bf16.gmra.mxu0 %v465
  %v759 = vpop.f32.mrf.mxu0
  %v760 = vadd.f32 0.0, %v759
  %v761 = vpop.f32.mrf.mxu0
  %v762 = vpop.f32.mrf.mxu0
  %v763 = vadd.f32 0.0, %v762
  %v764 = vpop.f32.mrf.mxu0
  %765 = vmatprep.mubr.bf16.mxu0 0
  %766 = vmatmul.mubr.bf16.gmra.mxu0 %v468
  %v767 = vpop.f32.mrf.mxu0
  %v768 = vadd.f32 0.0, %v767
  %v769 = vpop.f32.mrf.mxu0
  %v770 = vpop.f32.mrf.mxu0
  %v771 = vadd.f32 0.0, %v770
  %v772 = vpop.f32.mrf.mxu0
  %773 = vmatprep.mubr.bf16.mxu0 0
  %774 = vmatmul.mubr.bf16.gmra.mxu0 %v471
  %v775 = vpop.f32.mrf.mxu0
  %v776 = vadd.f32 0.0, %v775
  %v777 = vpop.f32.mrf.mxu0
  %v778 = vpop.f32.mrf.mxu0
  %v779 = vadd.f32 0.0, %v778
  %v780 = vpop.f32.mrf.mxu0
  %781 = vmatprep.mubr.bf16.mxu0 0
  %782 = vmatmul.mubr.bf16.gmra.mxu0 %v474
  %v783 = vpop.f32.mrf.mxu0
  %v784 = vadd.f32 0.0, %v783
  %v785 = vpop.f32.mrf.mxu0
  %v786 = vpop.f32.mrf.mxu0
  %v787 = vadd.f32 0.0, %v786
  %v788 = vpop.f32.mrf.mxu0
  %789 = vmatprep.mubr.bf16.mxu0 0
  %790 = vmatmul.mubr.bf16.gmra.mxu0 %v477
  %v791 = vpop.f32.mrf.mxu0
  %v792 = vadd.f32 0.0, %v791
  %v793 = vpop.f32.mrf.mxu0
  %v794 = vpop.f32.mrf.mxu0
  %v795 = vadd.f32 0.0, %v794
  %v796 = vpop.f32.mrf.mxu0
  %797 = vmatprep.mubr.bf16.mxu0 0
  %798 = vmatmul.mubr.bf16.gmra.mxu0 %v480
  %v799 = vpop.f32.mrf.mxu0
  %v800 = vadd.f32 0.0, %v799
  %v801 = vpop.f32.mrf.mxu0
  %v802 = vpop.f32.mrf.mxu0
  %v803 = vadd.f32 0.0, %v802
  %v804 = vpop.f32.mrf.mxu0
  %805 = vmatprep.mubr.bf16.mxu0 0
  %806 = vmatmul.mubr.bf16.gmra.mxu0 %v483
  %v807 = vpop.f32.mrf.mxu0
  %v808 = vadd.f32 0.0, %v807
  %v809 = vpop.f32.mrf.mxu0
  %v810 = vpop.f32.mrf.mxu0
  %v811 = vadd.f32 0.0, %v810
  %v812 = vpop.f32.mrf.mxu0
  %813 = vmatprep.mubr.bf16.mxu0 0
  %814 = vmatmul.mubr.bf16.gmra.mxu0 %v486
  %v815 = vpop.f32.mrf.mxu0
  %v816 = vadd.f32 0.0, %v815
  %v817 = vpop.f32.mrf.mxu0
  %v818 = vpop.f32.mrf.mxu0
  %v819 = vadd.f32 0.0, %v818
  %v820 = vpop.f32.mrf.mxu0
  %821 = vmatprep.mubr.bf16.mxu0 0
  %822 = vmatmul.mubr.bf16.gmra.mxu0 %v489
  %v823 = vpop.f32.mrf.mxu0
  %v824 = vadd.f32 0.0, %v823
  %v825 = vpop.f32.mrf.mxu0
  %v826 = vpop.f32.mrf.mxu0
  %v827 = vadd.f32 0.0, %v826
  %v828 = vpop.f32.mrf.mxu0
  %829 = vmatprep.mubr.bf16.mxu0 0
  %830 = vmatmul.mubr.bf16.gmra.mxu0 %v492
  %v831 = vpop.f32.mrf.mxu0
  %v832 = vadd.f32 0.0, %v831
  %v833 = vpop.f32.mrf.mxu0
  %v834 = vpop.f32.mrf.mxu0
  %v835 = vadd.f32 0.0, %v834
  %v836 = vpop.f32.mrf.mxu0
  %837 = vmatprep.mubr.bf16.mxu0 0
  %838 = vmatmul.mubr.bf16.gmra.mxu0 %v495
  %v839 = vpop.f32.mrf.mxu0
  %v840 = vadd.f32 0.0, %v839
  %v841 = vpop.f32.mrf.mxu0
  %v842 = vpop.f32.mrf.mxu0
  %v843 = vadd.f32 0.0, %v842
  %v844 = vpop.f32.mrf.mxu0
  %845 = vmatprep.mubr.bf16.mxu0 0
  %846 = vmatmul.mubr.bf16.gmra.mxu0 %v498
  %v847 = vpop.f32.mrf.mxu0
  %v848 = vadd.f32 0.0, %v847
  %v849 = vpop.f32.mrf.mxu0
  %v850 = vpop.f32.mrf.mxu0
  %v851 = vadd.f32 0.0, %v850
  %v852 = vpop.f32.mrf.mxu0
  %853 = vmatprep.mubr.bf16.mxu0 0
  %854 = vmatmul.mubr.bf16.gmra.mxu0 %v501
  %v855 = vpop.f32.mrf.mxu0
  %v856 = vadd.f32 0.0, %v855
  %v857 = vpop.f32.mrf.mxu0
  %v858 = vpop.f32.mrf.mxu0
  %v859 = vadd.f32 0.0, %v858
  %v860 = vpop.f32.mrf.mxu0
  %861 = vmatprep.mubr.bf16.mxu0 0
  %862 = vmatmul.mubr.bf16.gmra.mxu0 %v504
  %v863 = vpop.f32.mrf.mxu0
  %v864 = vadd.f32 0.0, %v863
  %v865 = vpop.f32.mrf.mxu0
  %v866 = vpop.f32.mrf.mxu0
  %v867 = vadd.f32 0.0, %v866
  %v868 = vpop.f32.mrf.mxu0
  %869 = vmatprep.mubr.bf16.mxu0 0
  %870 = vmatmul.mubr.bf16.gmra.mxu0 %v507
  %v871 = vpop.f32.mrf.mxu0
  %v872 = vadd.f32 0.0, %v871
  %v873 = vpop.f32.mrf.mxu0
  %v874 = vpop.f32.mrf.mxu0
  %v875 = vadd.f32 0.0, %v874
  %v876 = vpop.f32.mrf.mxu0
  %877 = vmatprep.mubr.bf16.mxu0 0
  %878 = vmatmul.mubr.bf16.gmra.mxu0 %v510
  %v879 = vpop.f32.mrf.mxu0
  %v880 = vadd.f32 0.0, %v879
  %v881 = vpop.f32.mrf.mxu0
  %v882 = vpop.f32.mrf.mxu0
  %v883 = vadd.f32 0.0, %v882
  %v884 = vpop.f32.mrf.mxu0
  %885 = vmatprep.mubr.bf16.mxu0 0
  %886 = vmatmul.mubr.bf16.gmra.mxu0 %v513
  %v887 = vpop.f32.mrf.mxu0
  %v888 = vadd.f32 0.0, %v887
  %v889 = vpop.f32.mrf.mxu0
  %v890 = vpop.f32.mrf.mxu0
  %v891 = vadd.f32 0.0, %v890
  %v892 = vpop.f32.mrf.mxu0
  %893 = vmatprep.mubr.bf16.mxu0 0
  %894 = vmatmul.mubr.bf16.gmra.mxu0 %v516
  %v895 = vpop.f32.mrf.mxu0
  %v896 = vadd.f32 0.0, %v895
  %v897 = vpop.f32.mrf.mxu0
  %v898 = vpop.f32.mrf.mxu0
  %v899 = vadd.f32 0.0, %v898
  %v900 = vpop.f32.mrf.mxu0
  %901 = vmatprep.mubr.bf16.mxu0 0
  %902 = vmatmul.mubr.bf16.gmra.mxu0 %v519
  %v903 = vpop.f32.mrf.mxu0
  %v904 = vadd.f32 0.0, %v903
  %v905 = vpop.f32.mrf.mxu0
  %v906 = vpop.f32.mrf.mxu0
  %v907 = vadd.f32 0.0, %v906
  %v908 = vpop.f32.mrf.mxu0
  %909 = vmatprep.mubr.bf16.mxu0 0
  %910 = vmatmul.mubr.bf16.gmra.mxu0 %v522
  %v911 = vpop.f32.mrf.mxu0
  %v912 = vadd.f32 0.0, %v911
  %v913 = vpop.f32.mrf.mxu0
  %v914 = vpop.f32.mrf.mxu0
  %v915 = vadd.f32 0.0, %v914
  %v916 = vpop.f32.mrf.mxu0
  %917 = vmatprep.mubr.bf16.mxu0 0
  %918 = vmatmul.mubr.bf16.gmra.mxu0 %v525
  %v919 = vpop.f32.mrf.mxu0
  %v920 = vadd.f32 0.0, %v919
  %v921 = vpop.f32.mrf.mxu0
  %v922 = vpop.f32.mrf.mxu0
  %v923 = vadd.f32 0.0, %v922
  %v924 = vpop.f32.mrf.mxu0
  %925 = vmatprep.mubr.bf16.mxu0 0
  %926 = vmatmul.mubr.bf16.gmra.mxu0 %v528
  %v927 = vpop.f32.mrf.mxu0
  %v928 = vadd.f32 0.0, %v927
  %v929 = vpop.f32.mrf.mxu0
  %v930 = vpop.f32.mrf.mxu0
  %v931 = vadd.f32 0.0, %v930
  %v932 = vpop.f32.mrf.mxu0
  %933 = vmatprep.mubr.bf16.mxu0 0
  %934 = vmatmul.mubr.bf16.gmra.mxu0 %v531
  %v935 = vpop.f32.mrf.mxu0
  %v936 = vadd.f32 0.0, %v935
  %v937 = vpop.f32.mrf.mxu0
  %v938 = vpop.f32.mrf.mxu0
  %v939 = vpop.f32.mrf.mxu0
  %940 = vdwg.mxu0
  %v941 = vpack.c.bf16 %v571, %v568
  %v942 = vpack.c.bf16 %v579, %v576
  %v943 = vpack.c.bf16 %v587, %v584
  %v944 = vpack.c.bf16 %v595, %v592
  %v945 = vpack.c.bf16 %v603, %v600
  %v946 = vpack.c.bf16 %v611, %v608
  %v947 = vpack.c.bf16 %v619, %v616
  %v948 = vpack.c.bf16 %v627, %v624
  %v949 = vpack.c.bf16 %v635, %v632
  %v950 = vpack.c.bf16 %v643, %v640
  %v951 = vpack.c.bf16 %v651, %v648
  %v952 = vpack.c.bf16 %v659, %v656
  %v953 = vpack.c.bf16 %v667, %v664
  %v954 = vpack.c.bf16 %v675, %v672
  %v955 = vpack.c.bf16 %v683, %v680
  %v956 = vpack.c.bf16 %v688, %v688
  %v957 = vld [vmem:[%s5] sm:$0xf]
  %v958 = vld [vmem:[%s5 + $0x4] sm:$0xf]
  %v959 = vld [vmem:[%s5 + $0x8] sm:$0xf]
  %v960 = vld [vmem:[%s5 + $0xc] sm:$0xf]
  %v961 = vld [vmem:[%s5 + $0x10] sm:$0xf]
  %v962 = vld [vmem:[%s5 + $0x14] sm:$0xf]
  %v963 = vld [vmem:[%s5 + $0x18] sm:$0xf]
  %v964 = vld [vmem:[%s5 + $0x1c] sm:$0xf]
  %v965 = vld [vmem:[%s5 + $0x20] sm:$0xf]
  %v966 = vld [vmem:[%s5 + $0x24] sm:$0xf]
  %v967 = vld [vmem:[%s5 + $0x28] sm:$0xf]
  %v968 = vld [vmem:[%s5 + $0x2c] sm:$0xf]
  %v969 = vld [vmem:[%s5 + $0x30] sm:$0xf]
  %v970 = vld [vmem:[%s5 + $0x34] sm:$0xf]
  %v971 = vld [vmem:[%s5 + $0x38] sm:$0xf]
  %v972 = vld [vmem:[%s5 + $0x3c] sm:$0xf]
  %v973 = vpack.c.bf16 %v696, %v691
  %v974 = vpack.c.bf16 %v704, %v699
  %v975 = vpack.c.bf16 %v712, %v707
  %v976 = vpack.c.bf16 %v720, %v715
  %v977 = vpack.c.bf16 %v728, %v723
  %v978 = vpack.c.bf16 %v736, %v731
  %v979 = vpack.c.bf16 %v744, %v739
  %v980 = vpack.c.bf16 %v752, %v747
  %v981 = vpack.c.bf16 %v760, %v755
  %v982 = vpack.c.bf16 %v768, %v763
  %v983 = vpack.c.bf16 %v776, %v771
  %v984 = vpack.c.bf16 %v784, %v779
  %v985 = vpack.c.bf16 %v792, %v787
  %v986 = vpack.c.bf16 %v800, %v795
  %v987 = vpack.c.bf16 %v808, %v803
  %v988 = vpack.c.bf16 %v811, %v811
  %s989 = scalar_lea.vmem %s5, 64
  %v990 = vld [vmem:[%s989] sm:$0xf]
  %v991 = vld [vmem:[%s989 + $0x4] sm:$0xf]
  %v992 = vld [vmem:[%s989 + $0x8] sm:$0xf]
  %v993 = vld [vmem:[%s989 + $0xc] sm:$0xf]
  %v994 = vld [vmem:[%s989 + $0x10] sm:$0xf]
  %v995 = vld [vmem:[%s989 + $0x14] sm:$0xf]
  %v996 = vld [vmem:[%s989 + $0x18] sm:$0xf]
  %v997 = vld [vmem:[%s989 + $0x1c] sm:$0xf]
  %v998 = vld [vmem:[%s989 + $0x20] sm:$0xf]
  %v999 = vld [vmem:[%s989 + $0x24] sm:$0xf]
  %v1000 = vld [vmem:[%s989 + $0x28] sm:$0xf]
  %v1001 = vld [vmem:[%s989 + $0x2c] sm:$0xf]
  %v1002 = vld [vmem:[%s989 + $0x30] sm:$0xf]
  %v1003 = vld [vmem:[%s989 + $0x34] sm:$0xf]
  %v1004 = vld [vmem:[%s989 + $0x38] sm:$0xf]
  %v1005 = vld [vmem:[%s989 + $0x3c] sm:$0xf]
  %v1022 = vunpack.c.l.b16 %v990
  %v1023 = vunpack.c.l.b16 %v991
  %v1024 = vunpack.c.l.b16 %v992
  %v1025 = vunpack.c.l.b16 %v993
  %v1026 = vunpack.c.l.b16 %v994
  %v1027 = vunpack.c.l.b16 %v995
  %v1028 = vunpack.c.l.b16 %v996
  %v1029 = vunpack.c.l.b16 %v997
  %v1030 = vunpack.c.l.b16 %v998
  %v1031 = vunpack.c.l.b16 %v999
  %v1032 = vunpack.c.l.b16 %v1000
  %v1033 = vunpack.c.l.b16 %v1001
  %v1034 = vunpack.c.l.b16 %v1002
  %v1035 = vunpack.c.l.b16 %v1003
  %v1036 = vunpack.c.l.b16 %v1004
  %v1037 = vunpack.c.l.b16 %v1005
  %v1038 = vpack.c.b16 %v1023, %v1022
  %v1039 = vpack.c.b16 %v1025, %v1024
  %v1040 = vpack.c.b16 %v1027, %v1026
  %v1041 = vpack.c.b16 %v1029, %v1028
  %v1042 = vpack.c.b16 %v1031, %v1030
  %v1043 = vpack.c.b16 %v1033, %v1032
  %v1044 = vpack.c.b16 %v1035, %v1034
  %v1045 = vpack.c.b16 %v1037, %v1036
  %1054 = vmatprep.subr.bf16.mxu0 0
  %1055 = vmatpush1.bf16.msra.mxu0 %v1045
  %1056 = vmatprep.subr.bf16.mxu0 0
  %1057 = vmatpush1.bf16.msra.mxu0 %v1044
  %1058 = vmatprep.subr.bf16.mxu0 0
  %1059 = vmatpush1.bf16.msra.mxu0 %v1043
  %1060 = vmatprep.subr.bf16.mxu0 0
  %1061 = vmatpush1.bf16.msra.mxu0 %v1042
  %1062 = vmatprep.subr.bf16.mxu0 0
  %1063 = vmatpush1.bf16.msra.mxu0 %v1041
  %1064 = vmatprep.subr.bf16.mxu0 0
  %1065 = vmatpush1.bf16.msra.mxu0 %v1040
  %1066 = vmatprep.subr.bf16.mxu0 0
  %1067 = vmatpush1.bf16.msra.mxu0 %v1039
  %1068 = vmatprep.subr.bf16.mxu0 0
  %1069 = vmatpush1.bf16.msra.mxu0 %v1038
  %1070 = vmatprep.subr.bf16.mxu0 0
  %1071 = vmatpush2.bf16.msra.mxu0 0
  %1072 = vmatprep.subr.bf16.mxu0 0
  %1073 = vmatpush2.bf16.msra.mxu0 0
  %1074 = vmatprep.subr.bf16.mxu0 0
  %1075 = vmatpush2.bf16.msra.mxu0 0
  %1076 = vmatprep.subr.bf16.mxu0 0
  %1077 = vmatpush2.bf16.msra.mxu0 0
  %1078 = vmatprep.subr.bf16.mxu0 0
  %1079 = vmatpush2.bf16.msra.mxu0 0
  %1080 = vmatprep.subr.bf16.mxu0 0
  %1081 = vmatpush2.bf16.msra.mxu0 0
  %1082 = vmatprep.subr.bf16.mxu0 0
  %1083 = vmatpush2.bf16.msra.mxu0 0
  %1084 = vmatprep.subr.bf16.mxu0 0
  %1085 = vmatpush2.bf16.msra.mxu0 0
  %1086 = vmatprep.mubr.bf16.mxu0 0
  %1087 = vmatmul.mubr.bf16.gmra.mxu0 %v973
  %v1088 = vpop.f32.mrf.mxu0
  %v1089 = vadd.f32 0.0, %v1088
  %v1090 = vpop.f32.mrf.mxu0
  %v1091 = vpop.f32.mrf.mxu0
  %v1092 = vadd.f32 0.0, %v1091
  %v1093 = vpop.f32.mrf.mxu0
  %1094 = vmatprep.mubr.bf16.mxu0 0
  %1095 = vmatmul.mubr.bf16.gmra.mxu0 %v974
  %v1096 = vpop.f32.mrf.mxu0
  %v1097 = vadd.f32 0.0, %v1096
  %v1098 = vpop.f32.mrf.mxu0
  %v1099 = vpop.f32.mrf.mxu0
  %v1100 = vadd.f32 0.0, %v1099
  %v1101 = vpop.f32.mrf.mxu0
  %1102 = vmatprep.mubr.bf16.mxu0 0
  %1103 = vmatmul.mubr.bf16.gmra.mxu0 %v975
  %v1104 = vpop.f32.mrf.mxu0
  %v1105 = vadd.f32 0.0, %v1104
  %v1106 = vpop.f32.mrf.mxu0
  %v1107 = vpop.f32.mrf.mxu0
  %v1108 = vadd.f32 0.0, %v1107
  %v1109 = vpop.f32.mrf.mxu0
  %1110 = vmatprep.mubr.bf16.mxu0 0
  %1111 = vmatmul.mubr.bf16.gmra.mxu0 %v976
  %v1112 = vpop.f32.mrf.mxu0
  %v1113 = vadd.f32 0.0, %v1112
  %v1114 = vpop.f32.mrf.mxu0
  %v1115 = vpop.f32.mrf.mxu0
  %v1116 = vadd.f32 0.0, %v1115
  %v1117 = vpop.f32.mrf.mxu0
  %1118 = vmatprep.mubr.bf16.mxu0 0
  %1119 = vmatmul.mubr.bf16.gmra.mxu0 %v977
  %v1120 = vpop.f32.mrf.mxu0
  %v1121 = vadd.f32 0.0, %v1120
  %v1122 = vpop.f32.mrf.mxu0
  %v1123 = vpop.f32.mrf.mxu0
  %v1124 = vadd.f32 0.0, %v1123
  %v1125 = vpop.f32.mrf.mxu0
  %1126 = vmatprep.mubr.bf16.mxu0 0
  %1127 = vmatmul.mubr.bf16.gmra.mxu0 %v978
  %v1128 = vpop.f32.mrf.mxu0
  %v1129 = vadd.f32 0.0, %v1128
  %v1130 = vpop.f32.mrf.mxu0
  %v1131 = vpop.f32.mrf.mxu0
  %v1132 = vadd.f32 0.0, %v1131
  %v1133 = vpop.f32.mrf.mxu0
  %1134 = vmatprep.mubr.bf16.mxu0 0
  %1135 = vmatmul.mubr.bf16.gmra.mxu0 %v979
  %v1136 = vpop.f32.mrf.mxu0
  %v1137 = vadd.f32 0.0, %v1136
  %v1138 = vpop.f32.mrf.mxu0
  %v1139 = vpop.f32.mrf.mxu0
  %v1140 = vadd.f32 0.0, %v1139
  %v1141 = vpop.f32.mrf.mxu0
  %1142 = vmatprep.mubr.bf16.mxu0 0
  %1143 = vmatmul.mubr.bf16.gmra.mxu0 %v980
  %v1144 = vpop.f32.mrf.mxu0
  %v1145 = vadd.f32 0.0, %v1144
  %v1146 = vpop.f32.mrf.mxu0
  %v1147 = vpop.f32.mrf.mxu0
  %v1148 = vadd.f32 0.0, %v1147
  %v1149 = vpop.f32.mrf.mxu0
  %1150 = vmatprep.mubr.bf16.mxu0 0
  %1151 = vmatmul.mubr.bf16.gmra.mxu0 %v981
  %v1152 = vpop.f32.mrf.mxu0
  %v1153 = vadd.f32 0.0, %v1152
  %v1154 = vpop.f32.mrf.mxu0
  %v1155 = vpop.f32.mrf.mxu0
  %v1156 = vadd.f32 0.0, %v1155
  %v1157 = vpop.f32.mrf.mxu0
  %1158 = vmatprep.mubr.bf16.mxu0 0
  %1159 = vmatmul.mubr.bf16.gmra.mxu0 %v982
  %v1160 = vpop.f32.mrf.mxu0
  %v1161 = vadd.f32 0.0, %v1160
  %v1162 = vpop.f32.mrf.mxu0
  %v1163 = vpop.f32.mrf.mxu0
  %v1164 = vadd.f32 0.0, %v1163
  %v1165 = vpop.f32.mrf.mxu0
  %1166 = vmatprep.mubr.bf16.mxu0 0
  %1167 = vmatmul.mubr.bf16.gmra.mxu0 %v983
  %v1168 = vpop.f32.mrf.mxu0
  %v1169 = vadd.f32 0.0, %v1168
  %v1170 = vpop.f32.mrf.mxu0
  %v1171 = vpop.f32.mrf.mxu0
  %v1172 = vadd.f32 0.0, %v1171
  %v1173 = vpop.f32.mrf.mxu0
  %1174 = vmatprep.mubr.bf16.mxu0 0
  %1175 = vmatmul.mubr.bf16.gmra.mxu0 %v984
  %v1176 = vpop.f32.mrf.mxu0
  %v1177 = vadd.f32 0.0, %v1176
  %v1178 = vpop.f32.mrf.mxu0
  %v1179 = vpop.f32.mrf.mxu0
  %v1180 = vadd.f32 0.0, %v1179
  %v1181 = vpop.f32.mrf.mxu0
  %1182 = vmatprep.mubr.bf16.mxu0 0
  %1183 = vmatmul.mubr.bf16.gmra.mxu0 %v985
  %v1184 = vpop.f32.mrf.mxu0
  %v1185 = vadd.f32 0.0, %v1184
  %v1186 = vpop.f32.mrf.mxu0
  %v1187 = vpop.f32.mrf.mxu0
  %v1188 = vadd.f32 0.0, %v1187
  %v1189 = vpop.f32.mrf.mxu0
  %1190 = vmatprep.mubr.bf16.mxu0 0
  %1191 = vmatmul.mubr.bf16.gmra.mxu0 %v986
  %v1192 = vpop.f32.mrf.mxu0
  %v1193 = vadd.f32 0.0, %v1192
  %v1194 = vpop.f32.mrf.mxu0
  %v1195 = vpop.f32.mrf.mxu0
  %v1196 = vadd.f32 0.0, %v1195
  %v1197 = vpop.f32.mrf.mxu0
  %1198 = vmatprep.mubr.bf16.mxu0 0
  %1199 = vmatmul.mubr.bf16.gmra.mxu0 %v987
  %v1200 = vpop.f32.mrf.mxu0
  %v1201 = vadd.f32 0.0, %v1200
  %v1202 = vpop.f32.mrf.mxu0
  %v1203 = vpop.f32.mrf.mxu0
  %v1204 = vadd.f32 0.0, %v1203
  %v1205 = vpop.f32.mrf.mxu0
  %1206 = vmatprep.mubr.bf16.mxu0 0
  %1207 = vmatmul.mubr.bf16.gmra.mxu0 %v988
  %v1208 = vpop.f32.mrf.mxu0
  %v1209 = vadd.f32 0.0, %v1208
  %v1210 = vpop.f32.mrf.mxu0
  %v1211 = vpop.f32.mrf.mxu0
  %v1212 = vpop.f32.mrf.mxu0
  %1213 = vdwg.mxu0
  %v1230 = vunpack.c.l.b16 %v957
  %v1231 = vunpack.c.l.b16 %v958
  %v1232 = vunpack.c.l.b16 %v959
  %v1233 = vunpack.c.l.b16 %v960
  %v1234 = vunpack.c.l.b16 %v961
  %v1235 = vunpack.c.l.b16 %v962
  %v1236 = vunpack.c.l.b16 %v963
  %v1237 = vunpack.c.l.b16 %v964
  %v1238 = vunpack.c.l.b16 %v965
  %v1239 = vunpack.c.l.b16 %v966
  %v1240 = vunpack.c.l.b16 %v967
  %v1241 = vunpack.c.l.b16 %v968
  %v1242 = vunpack.c.l.b16 %v969
  %v1243 = vunpack.c.l.b16 %v970
  %v1244 = vunpack.c.l.b16 %v971
  %v1245 = vunpack.c.l.b16 %v972
  %v1246 = vpack.c.b16 %v1231, %v1230
  %v1247 = vpack.c.b16 %v1233, %v1232
  %v1248 = vpack.c.b16 %v1235, %v1234
  %v1249 = vpack.c.b16 %v1237, %v1236
  %v1250 = vpack.c.b16 %v1239, %v1238
  %v1251 = vpack.c.b16 %v1241, %v1240
  %v1252 = vpack.c.b16 %v1243, %v1242
  %v1253 = vpack.c.b16 %v1245, %v1244
  %1262 = vmatprep.subr.bf16.mxu0 0
  %1263 = vmatpush1.bf16.msra.mxu0 %v1253
  %1264 = vmatprep.subr.bf16.mxu0 0
  %1265 = vmatpush1.bf16.msra.mxu0 %v1252
  %1266 = vmatprep.subr.bf16.mxu0 0
  %1267 = vmatpush1.bf16.msra.mxu0 %v1251
  %1268 = vmatprep.subr.bf16.mxu0 0
  %1269 = vmatpush1.bf16.msra.mxu0 %v1250
  %1270 = vmatprep.subr.bf16.mxu0 0
  %1271 = vmatpush1.bf16.msra.mxu0 %v1249
  %1272 = vmatprep.subr.bf16.mxu0 0
  %1273 = vmatpush1.bf16.msra.mxu0 %v1248
  %1274 = vmatprep.subr.bf16.mxu0 0
  %1275 = vmatpush1.bf16.msra.mxu0 %v1247
  %1276 = vmatprep.subr.bf16.mxu0 0
  %1277 = vmatpush1.bf16.msra.mxu0 %v1246
  %1278 = vmatprep.subr.bf16.mxu0 0
  %1279 = vmatpush2.bf16.msra.mxu0 0
  %1280 = vmatprep.subr.bf16.mxu0 0
  %1281 = vmatpush2.bf16.msra.mxu0 0
  %1282 = vmatprep.subr.bf16.mxu0 0
  %1283 = vmatpush2.bf16.msra.mxu0 0
  %1284 = vmatprep.subr.bf16.mxu0 0
  %1285 = vmatpush2.bf16.msra.mxu0 0
  %1286 = vmatprep.subr.bf16.mxu0 0
  %1287 = vmatpush2.bf16.msra.mxu0 0
  %1288 = vmatprep.subr.bf16.mxu0 0
  %1289 = vmatpush2.bf16.msra.mxu0 0
  %1290 = vmatprep.subr.bf16.mxu0 0
  %1291 = vmatpush2.bf16.msra.mxu0 0
  %1292 = vmatprep.subr.bf16.mxu0 0
  %1293 = vmatpush2.bf16.msra.mxu0 0
  %1294 = vmatprep.mubr.bf16.mxu0 0
  %1295 = vmatmul.mubr.bf16.gmra.mxu0 %v941
  %v1296 = vpop.f32.mrf.mxu0
  %v1297 = vadd.f32 %v1089, %v1296
  %v1298 = vpop.f32.mrf.mxu0
  %v1299 = vpop.f32.mrf.mxu0
  %v1300 = vadd.f32 %v1092, %v1299
  %v1301 = vpop.f32.mrf.mxu0
  %1302 = vmatprep.mubr.bf16.mxu0 0
  %1303 = vmatmul.mubr.bf16.gmra.mxu0 %v942
  %v1304 = vpop.f32.mrf.mxu0
  %v1305 = vadd.f32 %v1097, %v1304
  %v1306 = vpop.f32.mrf.mxu0
  %v1307 = vpop.f32.mrf.mxu0
  %v1308 = vadd.f32 %v1100, %v1307
  %v1309 = vpop.f32.mrf.mxu0
  %1310 = vmatprep.mubr.bf16.mxu0 0
  %1311 = vmatmul.mubr.bf16.gmra.mxu0 %v943
  %v1312 = vpop.f32.mrf.mxu0
  %v1313 = vadd.f32 %v1105, %v1312
  %v1314 = vpop.f32.mrf.mxu0
  %v1315 = vpop.f32.mrf.mxu0
  %v1316 = vadd.f32 %v1108, %v1315
  %v1317 = vpop.f32.mrf.mxu0
  %1318 = vmatprep.mubr.bf16.mxu0 0
  %1319 = vmatmul.mubr.bf16.gmra.mxu0 %v944
  %v1320 = vpop.f32.mrf.mxu0
  %v1321 = vadd.f32 %v1113, %v1320
  %v1322 = vpop.f32.mrf.mxu0
  %v1323 = vpop.f32.mrf.mxu0
  %v1324 = vadd.f32 %v1116, %v1323
  %v1325 = vpop.f32.mrf.mxu0
  %1326 = vmatprep.mubr.bf16.mxu0 0
  %1327 = vmatmul.mubr.bf16.gmra.mxu0 %v945
  %v1328 = vpop.f32.mrf.mxu0
  %v1329 = vadd.f32 %v1121, %v1328
  %v1330 = vpop.f32.mrf.mxu0
  %v1331 = vpop.f32.mrf.mxu0
  %v1332 = vadd.f32 %v1124, %v1331
  %v1333 = vpop.f32.mrf.mxu0
  %1334 = vmatprep.mubr.bf16.mxu0 0
  %1335 = vmatmul.mubr.bf16.gmra.mxu0 %v946
  %v1336 = vpop.f32.mrf.mxu0
  %v1337 = vadd.f32 %v1129, %v1336
  %v1338 = vpop.f32.mrf.mxu0
  %v1339 = vpop.f32.mrf.mxu0
  %v1340 = vadd.f32 %v1132, %v1339
  %v1341 = vpop.f32.mrf.mxu0
  %1342 = vmatprep.mubr.bf16.mxu0 0
  %1343 = vmatmul.mubr.bf16.gmra.mxu0 %v947
  %v1344 = vpop.f32.mrf.mxu0
  %v1345 = vadd.f32 %v1137, %v1344
  %v1346 = vpop.f32.mrf.mxu0
  %v1347 = vpop.f32.mrf.mxu0
  %v1348 = vadd.f32 %v1140, %v1347
  %v1349 = vpop.f32.mrf.mxu0
  %1350 = vmatprep.mubr.bf16.mxu0 0
  %1351 = vmatmul.mubr.bf16.gmra.mxu0 %v948
  %v1352 = vpop.f32.mrf.mxu0
  %v1353 = vadd.f32 %v1145, %v1352
  %v1354 = vpop.f32.mrf.mxu0
  %v1355 = vpop.f32.mrf.mxu0
  %v1356 = vadd.f32 %v1148, %v1355
  %v1357 = vpop.f32.mrf.mxu0
  %1358 = vmatprep.mubr.bf16.mxu0 0
  %1359 = vmatmul.mubr.bf16.gmra.mxu0 %v949
  %v1360 = vpop.f32.mrf.mxu0
  %v1361 = vadd.f32 %v1153, %v1360
  %v1362 = vpop.f32.mrf.mxu0
  %v1363 = vpop.f32.mrf.mxu0
  %v1364 = vadd.f32 %v1156, %v1363
  %v1365 = vpop.f32.mrf.mxu0
  %1366 = vmatprep.mubr.bf16.mxu0 0
  %1367 = vmatmul.mubr.bf16.gmra.mxu0 %v950
  %v1368 = vpop.f32.mrf.mxu0
  %v1369 = vadd.f32 %v1161, %v1368
  %v1370 = vpop.f32.mrf.mxu0
  %v1371 = vpop.f32.mrf.mxu0
  %v1372 = vadd.f32 %v1164, %v1371
  %v1373 = vpop.f32.mrf.mxu0
  %1374 = vmatprep.mubr.bf16.mxu0 0
  %1375 = vmatmul.mubr.bf16.gmra.mxu0 %v951
  %v1376 = vpop.f32.mrf.mxu0
  %v1377 = vadd.f32 %v1169, %v1376
  %v1378 = vpop.f32.mrf.mxu0
  %v1379 = vpop.f32.mrf.mxu0
  %v1380 = vadd.f32 %v1172, %v1379
  %v1381 = vpop.f32.mrf.mxu0
  %1382 = vmatprep.mubr.bf16.mxu0 0
  %1383 = vmatmul.mubr.bf16.gmra.mxu0 %v952
  %v1384 = vpop.f32.mrf.mxu0
  %v1385 = vadd.f32 %v1177, %v1384
  %v1386 = vpop.f32.mrf.mxu0
  %v1387 = vpop.f32.mrf.mxu0
  %v1388 = vadd.f32 %v1180, %v1387
  %v1389 = vpop.f32.mrf.mxu0
  %1390 = vmatprep.mubr.bf16.mxu0 0
  %1391 = vmatmul.mubr.bf16.gmra.mxu0 %v953
  %v1392 = vpop.f32.mrf.mxu0
  %v1393 = vadd.f32 %v1185, %v1392
  %v1394 = vpop.f32.mrf.mxu0
  %v1395 = vpop.f32.mrf.mxu0
  %v1396 = vadd.f32 %v1188, %v1395
  %v1397 = vpop.f32.mrf.mxu0
  %1398 = vmatprep.mubr.bf16.mxu0 0
  %1399 = vmatmul.mubr.bf16.gmra.mxu0 %v954
  %v1400 = vpop.f32.mrf.mxu0
  %v1401 = vadd.f32 %v1193, %v1400
  %v1402 = vpop.f32.mrf.mxu0
  %v1403 = vpop.f32.mrf.mxu0
  %v1404 = vadd.f32 %v1196, %v1403
  %v1405 = vpop.f32.mrf.mxu0
  %1406 = vmatprep.mubr.bf16.mxu0 0
  %1407 = vmatmul.mubr.bf16.gmra.mxu0 %v955
  %v1408 = vpop.f32.mrf.mxu0
  %v1409 = vadd.f32 %v1201, %v1408
  %v1410 = vpop.f32.mrf.mxu0
  %v1411 = vpop.f32.mrf.mxu0
  %v1412 = vadd.f32 %v1204, %v1411
  %v1413 = vpop.f32.mrf.mxu0
  %1414 = vmatprep.mubr.bf16.mxu0 0
  %1415 = vmatmul.mubr.bf16.gmra.mxu0 %v956
  %v1416 = vpop.f32.mrf.mxu0
  %v1417 = vadd.f32 %v1209, %v1416
  %v1418 = vpop.f32.mrf.mxu0
  %v1419 = vpop.f32.mrf.mxu0
  %v1420 = vpop.f32.mrf.mxu0
  %1421 = vdwg.mxu0
  %v1422 = vpack.c.bf16 %v819, %v816
  %v1423 = vpack.c.bf16 %v827, %v824
  %v1424 = vpack.c.bf16 %v835, %v832
  %v1425 = vpack.c.bf16 %v843, %v840
  %v1426 = vpack.c.bf16 %v851, %v848
  %v1427 = vpack.c.bf16 %v859, %v856
  %v1428 = vpack.c.bf16 %v867, %v864
  %v1429 = vpack.c.bf16 %v875, %v872
  %v1430 = vpack.c.bf16 %v883, %v880
  %v1431 = vpack.c.bf16 %v891, %v888
  %v1432 = vpack.c.bf16 %v899, %v896
  %v1433 = vpack.c.bf16 %v907, %v904
  %v1434 = vpack.c.bf16 %v915, %v912
  %v1435 = vpack.c.bf16 %v923, %v920
  %v1436 = vpack.c.bf16 %v931, %v928
  %v1437 = vpack.c.bf16 %v936, %v936
  %s1438 = scalar_lea.vmem %s5, 128
  %v1439 = vld [vmem:[%s1438] sm:$0xf]
  %v1440 = vld [vmem:[%s1438 + $0x4] sm:$0xf]
  %v1441 = vld [vmem:[%s1438 + $0x8] sm:$0xf]
  %v1442 = vld [vmem:[%s1438 + $0xc] sm:$0xf]
  %v1443 = vld [vmem:[%s1438 + $0x10] sm:$0xf]
  %v1444 = vld [vmem:[%s1438 + $0x14] sm:$0xf]
  %v1445 = vld [vmem:[%s1438 + $0x18] sm:$0xf]
  %v1446 = vld [vmem:[%s1438 + $0x1c] sm:$0xf]
  %v1447 = vld [vmem:[%s1438 + $0x20] sm:$0xf]
  %v1448 = vld [vmem:[%s1438 + $0x24] sm:$0xf]
  %v1449 = vld [vmem:[%s1438 + $0x28] sm:$0xf]
  %v1450 = vld [vmem:[%s1438 + $0x2c] sm:$0xf]
  %v1451 = vld [vmem:[%s1438 + $0x30] sm:$0xf]
  %v1452 = vld [vmem:[%s1438 + $0x34] sm:$0xf]
  %v1453 = vld [vmem:[%s1438 + $0x38] sm:$0xf]
  %v1454 = vld [vmem:[%s1438 + $0x3c] sm:$0xf]
  %v1471 = vunpack.c.l.b16 %v1439
  %v1472 = vunpack.c.l.b16 %v1440
  %v1473 = vunpack.c.l.b16 %v1441
  %v1474 = vunpack.c.l.b16 %v1442
  %v1475 = vunpack.c.l.b16 %v1443
  %v1476 = vunpack.c.l.b16 %v1444
  %v1477 = vunpack.c.l.b16 %v1445
  %v1478 = vunpack.c.l.b16 %v1446
  %v1479 = vunpack.c.l.b16 %v1447
  %v1480 = vunpack.c.l.b16 %v1448
  %v1481 = vunpack.c.l.b16 %v1449
  %v1482 = vunpack.c.l.b16 %v1450
  %v1483 = vunpack.c.l.b16 %v1451
  %v1484 = vunpack.c.l.b16 %v1452
  %v1485 = vunpack.c.l.b16 %v1453
  %v1486 = vunpack.c.l.b16 %v1454
  %v1487 = vpack.c.b16 %v1472, %v1471
  %v1488 = vpack.c.b16 %v1474, %v1473
  %v1489 = vpack.c.b16 %v1476, %v1475
  %v1490 = vpack.c.b16 %v1478, %v1477
  %v1491 = vpack.c.b16 %v1480, %v1479
  %v1492 = vpack.c.b16 %v1482, %v1481
  %v1493 = vpack.c.b16 %v1484, %v1483
  %v1494 = vpack.c.b16 %v1486, %v1485
  %1503 = vmatprep.subr.bf16.mxu0 0
  %1504 = vmatpush1.bf16.msra.mxu0 %v1494
  %1505 = vmatprep.subr.bf16.mxu0 0
  %1506 = vmatpush1.bf16.msra.mxu0 %v1493
  %1507 = vmatprep.subr.bf16.mxu0 0
  %1508 = vmatpush1.bf16.msra.mxu0 %v1492
  %1509 = vmatprep.subr.bf16.mxu0 0
  %1510 = vmatpush1.bf16.msra.mxu0 %v1491
  %1511 = vmatprep.subr.bf16.mxu0 0
  %1512 = vmatpush1.bf16.msra.mxu0 %v1490
  %1513 = vmatprep.subr.bf16.mxu0 0
  %1514 = vmatpush1.bf16.msra.mxu0 %v1489
  %1515 = vmatprep.subr.bf16.mxu0 0
  %1516 = vmatpush1.bf16.msra.mxu0 %v1488
  %1517 = vmatprep.subr.bf16.mxu0 0
  %1518 = vmatpush1.bf16.msra.mxu0 %v1487
  %1519 = vmatprep.subr.bf16.mxu0 0
  %1520 = vmatpush2.bf16.msra.mxu0 0
  %1521 = vmatprep.subr.bf16.mxu0 0
  %1522 = vmatpush2.bf16.msra.mxu0 0
  %1523 = vmatprep.subr.bf16.mxu0 0
  %1524 = vmatpush2.bf16.msra.mxu0 0
  %1525 = vmatprep.subr.bf16.mxu0 0
  %1526 = vmatpush2.bf16.msra.mxu0 0
  %1527 = vmatprep.subr.bf16.mxu0 0
  %1528 = vmatpush2.bf16.msra.mxu0 0
  %1529 = vmatprep.subr.bf16.mxu0 0
  %1530 = vmatpush2.bf16.msra.mxu0 0
  %1531 = vmatprep.subr.bf16.mxu0 0
  %1532 = vmatpush2.bf16.msra.mxu0 0
  %1533 = vmatprep.subr.bf16.mxu0 0
  %1534 = vmatpush2.bf16.msra.mxu0 0
  %1535 = vmatprep.mubr.bf16.mxu0 0
  %1536 = vmatmul.mubr.bf16.gmra.mxu0 %v1422
  %v1537 = vpop.f32.mrf.mxu0
  %v1538 = vadd.f32 0.0, %v1537
  %v1539 = vpop.f32.mrf.mxu0
  %v1540 = vpop.f32.mrf.mxu0
  %v1541 = vadd.f32 0.0, %v1540
  %v1542 = vpop.f32.mrf.mxu0
  %1543 = vmatprep.mubr.bf16.mxu0 0
  %1544 = vmatmul.mubr.bf16.gmra.mxu0 %v1423
  %v1545 = vpop.f32.mrf.mxu0
  %v1546 = vadd.f32 0.0, %v1545
  %v1547 = vpop.f32.mrf.mxu0
  %v1548 = vpop.f32.mrf.mxu0
  %v1549 = vadd.f32 0.0, %v1548
  %v1550 = vpop.f32.mrf.mxu0
  %1551 = vmatprep.mubr.bf16.mxu0 0
  %1552 = vmatmul.mubr.bf16.gmra.mxu0 %v1424
  %v1553 = vpop.f32.mrf.mxu0
  %v1554 = vadd.f32 0.0, %v1553
  %v1555 = vpop.f32.mrf.mxu0
  %v1556 = vpop.f32.mrf.mxu0
  %v1557 = vadd.f32 0.0, %v1556
  %v1558 = vpop.f32.mrf.mxu0
  %1559 = vmatprep.mubr.bf16.mxu0 0
  %1560 = vmatmul.mubr.bf16.gmra.mxu0 %v1425
  %v1561 = vpop.f32.mrf.mxu0
  %v1562 = vadd.f32 0.0, %v1561
  %v1563 = vpop.f32.mrf.mxu0
  %v1564 = vpop.f32.mrf.mxu0
  %v1565 = vadd.f32 0.0, %v1564
  %v1566 = vpop.f32.mrf.mxu0
  %1567 = vmatprep.mubr.bf16.mxu0 0
  %1568 = vmatmul.mubr.bf16.gmra.mxu0 %v1426
  %v1569 = vpop.f32.mrf.mxu0
  %v1570 = vadd.f32 0.0, %v1569
  %v1571 = vpop.f32.mrf.mxu0
  %v1572 = vpop.f32.mrf.mxu0
  %v1573 = vadd.f32 0.0, %v1572
  %v1574 = vpop.f32.mrf.mxu0
  %1575 = vmatprep.mubr.bf16.mxu0 0
  %1576 = vmatmul.mubr.bf16.gmra.mxu0 %v1427
  %v1577 = vpop.f32.mrf.mxu0
  %v1578 = vadd.f32 0.0, %v1577
  %v1579 = vpop.f32.mrf.mxu0
  %v1580 = vpop.f32.mrf.mxu0
  %v1581 = vadd.f32 0.0, %v1580
  %v1582 = vpop.f32.mrf.mxu0
  %1583 = vmatprep.mubr.bf16.mxu0 0
  %1584 = vmatmul.mubr.bf16.gmra.mxu0 %v1428
  %v1585 = vpop.f32.mrf.mxu0
  %v1586 = vadd.f32 0.0, %v1585
  %v1587 = vpop.f32.mrf.mxu0
  %v1588 = vpop.f32.mrf.mxu0
  %v1589 = vadd.f32 0.0, %v1588
  %v1590 = vpop.f32.mrf.mxu0
  %1591 = vmatprep.mubr.bf16.mxu0 0
  %1592 = vmatmul.mubr.bf16.gmra.mxu0 %v1429
  %v1593 = vpop.f32.mrf.mxu0
  %v1594 = vadd.f32 0.0, %v1593
  %v1595 = vpop.f32.mrf.mxu0
  %v1596 = vpop.f32.mrf.mxu0
  %v1597 = vadd.f32 0.0, %v1596
  %v1598 = vpop.f32.mrf.mxu0
  %1599 = vmatprep.mubr.bf16.mxu0 0
  %1600 = vmatmul.mubr.bf16.gmra.mxu0 %v1430
  %v1601 = vpop.f32.mrf.mxu0
  %v1602 = vadd.f32 0.0, %v1601
  %v1603 = vpop.f32.mrf.mxu0
  %v1604 = vpop.f32.mrf.mxu0
  %v1605 = vadd.f32 0.0, %v1604
  %v1606 = vpop.f32.mrf.mxu0
  %1607 = vmatprep.mubr.bf16.mxu0 0
  %1608 = vmatmul.mubr.bf16.gmra.mxu0 %v1431
  %v1609 = vpop.f32.mrf.mxu0
  %v1610 = vadd.f32 0.0, %v1609
  %v1611 = vpop.f32.mrf.mxu0
  %v1612 = vpop.f32.mrf.mxu0
  %v1613 = vadd.f32 0.0, %v1612
  %v1614 = vpop.f32.mrf.mxu0
  %1615 = vmatprep.mubr.bf16.mxu0 0
  %1616 = vmatmul.mubr.bf16.gmra.mxu0 %v1432
  %v1617 = vpop.f32.mrf.mxu0
  %v1618 = vadd.f32 0.0, %v1617
  %v1619 = vpop.f32.mrf.mxu0
  %v1620 = vpop.f32.mrf.mxu0
  %v1621 = vadd.f32 0.0, %v1620
  %v1622 = vpop.f32.mrf.mxu0
  %1623 = vmatprep.mubr.bf16.mxu0 0
  %1624 = vmatmul.mubr.bf16.gmra.mxu0 %v1433
  %v1625 = vpop.f32.mrf.mxu0
  %v1626 = vadd.f32 0.0, %v1625
  %v1627 = vpop.f32.mrf.mxu0
  %v1628 = vpop.f32.mrf.mxu0
  %v1629 = vadd.f32 0.0, %v1628
  %v1630 = vpop.f32.mrf.mxu0
  %1631 = vmatprep.mubr.bf16.mxu0 0
  %1632 = vmatmul.mubr.bf16.gmra.mxu0 %v1434
  %v1633 = vpop.f32.mrf.mxu0
  %v1634 = vadd.f32 0.0, %v1633
  %v1635 = vpop.f32.mrf.mxu0
  %v1636 = vpop.f32.mrf.mxu0
  %v1637 = vadd.f32 0.0, %v1636
  %v1638 = vpop.f32.mrf.mxu0
  %1639 = vmatprep.mubr.bf16.mxu0 0
  %1640 = vmatmul.mubr.bf16.gmra.mxu0 %v1435
  %v1641 = vpop.f32.mrf.mxu0
  %v1642 = vadd.f32 0.0, %v1641
  %v1643 = vpop.f32.mrf.mxu0
  %v1644 = vpop.f32.mrf.mxu0
  %v1645 = vadd.f32 0.0, %v1644
  %v1646 = vpop.f32.mrf.mxu0
  %1647 = vmatprep.mubr.bf16.mxu0 0
  %1648 = vmatmul.mubr.bf16.gmra.mxu0 %v1436
  %v1649 = vpop.f32.mrf.mxu0
  %v1650 = vadd.f32 0.0, %v1649
  %v1651 = vpop.f32.mrf.mxu0
  %v1652 = vpop.f32.mrf.mxu0
  %v1653 = vadd.f32 0.0, %v1652
  %v1654 = vpop.f32.mrf.mxu0
  %1655 = vmatprep.mubr.bf16.mxu0 0
  %1656 = vmatmul.mubr.bf16.gmra.mxu0 %v1437
  %v1657 = vpop.f32.mrf.mxu0
  %v1658 = vadd.f32 0.0, %v1657
  %v1659 = vpop.f32.mrf.mxu0
  %v1660 = vpop.f32.mrf.mxu0
  %v1661 = vpop.f32.mrf.mxu0
  %1662 = vdwg.mxu0
  %v1663 = vadd.f32 %v1297, %v1538
  %v1664 = vadd.f32 %v1300, %v1541
  %v1665 = vadd.f32 %v1305, %v1546
  %v1666 = vadd.f32 %v1308, %v1549
  %v1667 = vadd.f32 %v1313, %v1554
  %v1668 = vadd.f32 %v1316, %v1557
  %v1669 = vadd.f32 %v1321, %v1562
  %v1670 = vadd.f32 %v1324, %v1565
  %v1671 = vadd.f32 %v1329, %v1570
  %v1672 = vadd.f32 %v1332, %v1573
  %v1673 = vadd.f32 %v1337, %v1578
  %v1674 = vadd.f32 %v1340, %v1581
  %v1675 = vadd.f32 %v1345, %v1586
  %v1676 = vadd.f32 %v1348, %v1589
  %v1677 = vadd.f32 %v1353, %v1594
  %v1678 = vadd.f32 %v1356, %v1597
  %v1679 = vadd.f32 %v1361, %v1602
  %v1680 = vadd.f32 %v1364, %v1605
  %v1681 = vadd.f32 %v1369, %v1610
  %v1682 = vadd.f32 %v1372, %v1613
  %v1683 = vadd.f32 %v1377, %v1618
  %v1684 = vadd.f32 %v1380, %v1621
  %v1685 = vadd.f32 %v1385, %v1626
  %v1686 = vadd.f32 %v1388, %v1629
  %v1687 = vadd.f32 %v1393, %v1634
  %v1688 = vadd.f32 %v1396, %v1637
  %v1689 = vadd.f32 %v1401, %v1642
  %v1690 = vadd.f32 %v1404, %v1645
  %v1691 = vadd.f32 %v1409, %v1650
  %v1692 = vadd.f32 %v1412, %v1653
  %v1693 = vadd.f32 %v1417, %v1658
  %vm1694 = vcmask 506880
  %v1695 = vsel %vm1694, %v1663, 0.0
  %1696 = vadd.xlane.f32.xlu0 %v1695
  %v1697 = vpop.xlane.xlu0 %1696
  %v1698 = vsel %vm1694, %v1664, 0.0
  %1699 = vadd.xlane.f32.xlu0 %v1698
  %v1700 = vpop.xlane.xlu0 %1699
  %v1701 = vsel %vm1694, %v1665, 0.0
  %1702 = vadd.xlane.f32.xlu0 %v1701
  %v1703 = vpop.xlane.xlu0 %1702
  %v1704 = vsel %vm1694, %v1666, 0.0
  %1705 = vadd.xlane.f32.xlu0 %v1704
  %v1706 = vpop.xlane.xlu0 %1705
  %v1707 = vsel %vm1694, %v1667, 0.0
  %1708 = vadd.xlane.f32.xlu0 %v1707
  %v1709 = vpop.xlane.xlu0 %1708
  %v1710 = vsel %vm1694, %v1668, 0.0
  %1711 = vadd.xlane.f32.xlu0 %v1710
  %v1712 = vpop.xlane.xlu0 %1711
  %v1713 = vsel %vm1694, %v1669, 0.0
  %1714 = vadd.xlane.f32.xlu0 %v1713
  %v1715 = vpop.xlane.xlu0 %1714
  %v1716 = vsel %vm1694, %v1670, 0.0
  %1717 = vadd.xlane.f32.xlu0 %v1716
  %v1718 = vpop.xlane.xlu0 %1717
  %v1719 = vsel %vm1694, %v1671, 0.0
  %1720 = vadd.xlane.f32.xlu0 %v1719
  %v1721 = vpop.xlane.xlu0 %1720
  %v1722 = vsel %vm1694, %v1672, 0.0
  %1723 = vadd.xlane.f32.xlu0 %v1722
  %v1724 = vpop.xlane.xlu0 %1723
  %v1725 = vsel %vm1694, %v1673, 0.0
  %1726 = vadd.xlane.f32.xlu0 %v1725
  %v1727 = vpop.xlane.xlu0 %1726
  %v1728 = vsel %vm1694, %v1674, 0.0
  %1729 = vadd.xlane.f32.xlu0 %v1728
  %v1730 = vpop.xlane.xlu0 %1729
  %v1731 = vsel %vm1694, %v1675, 0.0
  %1732 = vadd.xlane.f32.xlu0 %v1731
  %v1733 = vpop.xlane.xlu0 %1732
  %v1734 = vsel %vm1694, %v1676, 0.0
  %1735 = vadd.xlane.f32.xlu0 %v1734
  %v1736 = vpop.xlane.xlu0 %1735
  %v1737 = vsel %vm1694, %v1677, 0.0
  %1738 = vadd.xlane.f32.xlu0 %v1737
  %v1739 = vpop.xlane.xlu0 %1738
  %v1740 = vsel %vm1694, %v1678, 0.0
  %1741 = vadd.xlane.f32.xlu0 %v1740
  %v1742 = vpop.xlane.xlu0 %1741
  %v1743 = vsel %vm1694, %v1679, 0.0
  %1744 = vadd.xlane.f32.xlu0 %v1743
  %v1745 = vpop.xlane.xlu0 %1744
  %v1746 = vsel %vm1694, %v1680, 0.0
  %1747 = vadd.xlane.f32.xlu0 %v1746
  %v1748 = vpop.xlane.xlu0 %1747
  %v1749 = vsel %vm1694, %v1681, 0.0
  %1750 = vadd.xlane.f32.xlu0 %v1749
  %v1751 = vpop.xlane.xlu0 %1750
  %v1752 = vsel %vm1694, %v1682, 0.0
  %1753 = vadd.xlane.f32.xlu0 %v1752
  %v1754 = vpop.xlane.xlu0 %1753
  %v1755 = vsel %vm1694, %v1683, 0.0
  %1756 = vadd.xlane.f32.xlu0 %v1755
  %v1757 = vpop.xlane.xlu0 %1756
  %v1758 = vsel %vm1694, %v1684, 0.0
  %1759 = vadd.xlane.f32.xlu0 %v1758
  %v1760 = vpop.xlane.xlu0 %1759
  %v1761 = vsel %vm1694, %v1685, 0.0
  %1762 = vadd.xlane.f32.xlu0 %v1761
  %v1763 = vpop.xlane.xlu0 %1762
  %v1764 = vsel %vm1694, %v1686, 0.0
  %1765 = vadd.xlane.f32.xlu0 %v1764
  %v1766 = vpop.xlane.xlu0 %1765
  %v1767 = vsel %vm1694, %v1687, 0.0
  %1768 = vadd.xlane.f32.xlu0 %v1767
  %v1769 = vpop.xlane.xlu0 %1768
  %v1770 = vsel %vm1694, %v1688, 0.0
  %1771 = vadd.xlane.f32.xlu0 %v1770
  %v1772 = vpop.xlane.xlu0 %1771
  %v1773 = vsel %vm1694, %v1689, 0.0
  %1774 = vadd.xlane.f32.xlu0 %v1773
  %v1775 = vpop.xlane.xlu0 %1774
  %v1776 = vsel %vm1694, %v1690, 0.0
  %1777 = vadd.xlane.f32.xlu0 %v1776
  %v1778 = vpop.xlane.xlu0 %1777
  %v1779 = vsel %vm1694, %v1691, 0.0
  %1780 = vadd.xlane.f32.xlu0 %v1779
  %v1781 = vpop.xlane.xlu0 %1780
  %v1782 = vsel %vm1694, %v1692, 0.0
  %1783 = vadd.xlane.f32.xlu0 %v1782
  %v1784 = vpop.xlane.xlu0 %1783
  %v1785 = vsel %vm1694, %v1693, 0.0
  %1786 = vadd.xlane.f32.xlu0 %v1785
  %v1787 = vpop.xlane.xlu0 %1786
  %v1788 = vmul.f32 %v1663, %v1663
  %v1789 = vmul.f32 %v1664, %v1664
  %v1790 = vmul.f32 %v1665, %v1665
  %v1791 = vmul.f32 %v1666, %v1666
  %v1792 = vmul.f32 %v1667, %v1667
  %v1793 = vmul.f32 %v1668, %v1668
  %v1794 = vmul.f32 %v1669, %v1669
  %v1795 = vmul.f32 %v1670, %v1670
  %v1796 = vmul.f32 %v1671, %v1671
  %v1797 = vmul.f32 %v1672, %v1672
  %v1798 = vmul.f32 %v1673, %v1673
  %v1799 = vmul.f32 %v1674, %v1674
  %v1800 = vmul.f32 %v1675, %v1675
  %v1801 = vmul.f32 %v1676, %v1676
  %v1802 = vmul.f32 %v1677, %v1677
  %v1803 = vmul.f32 %v1678, %v1678
  %v1804 = vmul.f32 %v1679, %v1679
  %v1805 = vmul.f32 %v1680, %v1680
  %v1806 = vmul.f32 %v1681, %v1681
  %v1807 = vmul.f32 %v1682, %v1682
  %v1808 = vmul.f32 %v1683, %v1683
  %v1809 = vmul.f32 %v1684, %v1684
  %v1810 = vmul.f32 %v1685, %v1685
  %v1811 = vmul.f32 %v1686, %v1686
  %v1812 = vmul.f32 %v1687, %v1687
  %v1813 = vmul.f32 %v1688, %v1688
  %v1814 = vmul.f32 %v1689, %v1689
  %v1815 = vmul.f32 %v1690, %v1690
  %v1816 = vmul.f32 %v1691, %v1691
  %v1817 = vmul.f32 %v1692, %v1692
  %v1818 = vmul.f32 %v1693, %v1693
  %v1819 = vsel %vm1694, %v1788, 0.0
  %1820 = vadd.xlane.f32.xlu0 %v1819
  %v1821 = vpop.xlane.xlu0 %1820
  %v1822 = vsel %vm1694, %v1789, 0.0
  %1823 = vadd.xlane.f32.xlu0 %v1822
  %v1824 = vpop.xlane.xlu0 %1823
  %v1825 = vsel %vm1694, %v1790, 0.0
  %1826 = vadd.xlane.f32.xlu0 %v1825
  %v1827 = vpop.xlane.xlu0 %1826
  %v1828 = vsel %vm1694, %v1791, 0.0
  %1829 = vadd.xlane.f32.xlu0 %v1828
  %v1830 = vpop.xlane.xlu0 %1829
  %v1831 = vsel %vm1694, %v1792, 0.0
  %1832 = vadd.xlane.f32.xlu0 %v1831
  %v1833 = vpop.xlane.xlu0 %1832
  %v1834 = vsel %vm1694, %v1793, 0.0
  %1835 = vadd.xlane.f32.xlu0 %v1834
  %v1836 = vpop.xlane.xlu0 %1835
  %v1837 = vsel %vm1694, %v1794, 0.0
  %1838 = vadd.xlane.f32.xlu0 %v1837
  %v1839 = vpop.xlane.xlu0 %1838
  %v1840 = vsel %vm1694, %v1795, 0.0
  %1841 = vadd.xlane.f32.xlu0 %v1840
  %v1842 = vpop.xlane.xlu0 %1841
  %v1843 = vsel %vm1694, %v1796, 0.0
  %1844 = vadd.xlane.f32.xlu0 %v1843
  %v1845 = vpop.xlane.xlu0 %1844
  %v1846 = vsel %vm1694, %v1797, 0.0
  %1847 = vadd.xlane.f32.xlu0 %v1846
  %v1848 = vpop.xlane.xlu0 %1847
  %v1849 = vsel %vm1694, %v1798, 0.0
  %1850 = vadd.xlane.f32.xlu0 %v1849
  %v1851 = vpop.xlane.xlu0 %1850
  %v1852 = vsel %vm1694, %v1799, 0.0
  %1853 = vadd.xlane.f32.xlu0 %v1852
  %v1854 = vpop.xlane.xlu0 %1853
  %v1855 = vsel %vm1694, %v1800, 0.0
  %1856 = vadd.xlane.f32.xlu0 %v1855
  %v1857 = vpop.xlane.xlu0 %1856
  %v1858 = vsel %vm1694, %v1801, 0.0
  %1859 = vadd.xlane.f32.xlu0 %v1858
  %v1860 = vpop.xlane.xlu0 %1859
  %v1861 = vsel %vm1694, %v1802, 0.0
  %1862 = vadd.xlane.f32.xlu0 %v1861
  %v1863 = vpop.xlane.xlu0 %1862
  %v1864 = vsel %vm1694, %v1803, 0.0
  %1865 = vadd.xlane.f32.xlu0 %v1864
  %v1866 = vpop.xlane.xlu0 %1865
  %v1867 = vsel %vm1694, %v1804, 0.0
  %1868 = vadd.xlane.f32.xlu0 %v1867
  %v1869 = vpop.xlane.xlu0 %1868
  %v1870 = vsel %vm1694, %v1805, 0.0
  %1871 = vadd.xlane.f32.xlu0 %v1870
  %v1872 = vpop.xlane.xlu0 %1871
  %v1873 = vsel %vm1694, %v1806, 0.0
  %1874 = vadd.xlane.f32.xlu0 %v1873
  %v1875 = vpop.xlane.xlu0 %1874
  %v1876 = vsel %vm1694, %v1807, 0.0
  %1877 = vadd.xlane.f32.xlu0 %v1876
  %v1878 = vpop.xlane.xlu0 %1877
  %v1879 = vsel %vm1694, %v1808, 0.0
  %1880 = vadd.xlane.f32.xlu0 %v1879
  %v1881 = vpop.xlane.xlu0 %1880
  %v1882 = vsel %vm1694, %v1809, 0.0
  %1883 = vadd.xlane.f32.xlu0 %v1882
  %v1884 = vpop.xlane.xlu0 %1883
  %v1885 = vsel %vm1694, %v1810, 0.0
  %1886 = vadd.xlane.f32.xlu0 %v1885
  %v1887 = vpop.xlane.xlu0 %1886
  %v1888 = vsel %vm1694, %v1811, 0.0
  %1889 = vadd.xlane.f32.xlu0 %v1888
  %v1890 = vpop.xlane.xlu0 %1889
  %v1891 = vsel %vm1694, %v1812, 0.0
  %1892 = vadd.xlane.f32.xlu0 %v1891
  %v1893 = vpop.xlane.xlu0 %1892
  %v1894 = vsel %vm1694, %v1813, 0.0
  %1895 = vadd.xlane.f32.xlu0 %v1894
  %v1896 = vpop.xlane.xlu0 %1895
  %v1897 = vsel %vm1694, %v1814, 0.0
  %1898 = vadd.xlane.f32.xlu0 %v1897
  %v1899 = vpop.xlane.xlu0 %1898
  %v1900 = vsel %vm1694, %v1815, 0.0
  %1901 = vadd.xlane.f32.xlu0 %v1900
  %v1902 = vpop.xlane.xlu0 %1901
  %v1903 = vsel %vm1694, %v1816, 0.0
  %1904 = vadd.xlane.f32.xlu0 %v1903
  %v1905 = vpop.xlane.xlu0 %1904
  %v1906 = vsel %vm1694, %v1817, 0.0
  %1907 = vadd.xlane.f32.xlu0 %v1906
  %v1908 = vpop.xlane.xlu0 %1907
  %v1909 = vsel %vm1694, %v1818, 0.0
  %1910 = vadd.xlane.f32.xlu0 %v1909
  %v1911 = vpop.xlane.xlu0 %1910
  %vm1912 = vcmask 7168
  %v1913 = vsel %vm1912, %v1697, %v1821
  %v1914 = vsel %vm1912, %v1700, %v1824
  %v1915 = vsel %vm1912, %v1703, %v1827
  %v1916 = vsel %vm1912, %v1706, %v1830
  %v1917 = vsel %vm1912, %v1709, %v1833
  %v1918 = vsel %vm1912, %v1712, %v1836
  %v1919 = vsel %vm1912, %v1715, %v1839
  %v1920 = vsel %vm1912, %v1718, %v1842
  %v1921 = vsel %vm1912, %v1721, %v1845
  %v1922 = vsel %vm1912, %v1724, %v1848
  %v1923 = vsel %vm1912, %v1727, %v1851
  %v1924 = vsel %vm1912, %v1730, %v1854
  %v1925 = vsel %vm1912, %v1733, %v1857
  %v1926 = vsel %vm1912, %v1736, %v1860
  %v1927 = vsel %vm1912, %v1739, %v1863
  %v1928 = vsel %vm1912, %v1742, %v1866
  %v1929 = vsel %vm1912, %v1745, %v1869
  %v1930 = vsel %vm1912, %v1748, %v1872
  %v1931 = vsel %vm1912, %v1751, %v1875
  %v1932 = vsel %vm1912, %v1754, %v1878
  %v1933 = vsel %vm1912, %v1757, %v1881
  %v1934 = vsel %vm1912, %v1760, %v1884
  %v1935 = vsel %vm1912, %v1763, %v1887
  %v1936 = vsel %vm1912, %v1766, %v1890
  %v1937 = vsel %vm1912, %v1769, %v1893
  %v1938 = vsel %vm1912, %v1772, %v1896
  %v1939 = vsel %vm1912, %v1775, %v1899
  %v1940 = vsel %vm1912, %v1778, %v1902
  %v1941 = vsel %vm1912, %v1781, %v1905
  %v1942 = vsel %vm1912, %v1784, %v1908
  %v1943 = vsel %vm1912, %v1787, %v1911
  %v1944 = vld [vmem:[%s7] sm:$0xff]
  %v1945 = vld [vmem:[%s7 + $0x8] sm:$0xff]
  %vm1946 = vcmask 982016
  %v1948 = vsel %vm1946, %v1945, 0
  %1950 = vmatprep.subr.mxu0 0.0
  %1951 = vmatpush1.msra.mxu0 %v1928
  %1952 = vmatprep.subr.mxu0 0.0
  %1953 = vmatpush1.msra.mxu0 %v1927
  %1954 = vmatprep.subr.mxu0 0.0
  %1955 = vmatpush1.msra.mxu0 %v1926
  %1956 = vmatprep.subr.mxu0 0.0
  %1957 = vmatpush1.msra.mxu0 %v1925
  %1958 = vmatprep.subr.mxu0 0.0
  %1959 = vmatpush1.msra.mxu0 %v1924
  %1960 = vmatprep.subr.mxu0 0.0
  %1961 = vmatpush1.msra.mxu0 %v1923
  %1962 = vmatprep.subr.mxu0 0.0
  %1963 = vmatpush1.msra.mxu0 %v1922
  %1964 = vmatprep.subr.mxu0 0.0
  %1965 = vmatpush1.msra.mxu0 %v1921
  %1966 = vmatprep.subr.mxu0 0.0
  %1967 = vmatpush1.msra.mxu0 %v1920
  %1968 = vmatprep.subr.mxu0 0.0
  %1969 = vmatpush1.msra.mxu0 %v1919
  %1970 = vmatprep.subr.mxu0 0.0
  %1971 = vmatpush1.msra.mxu0 %v1918
  %1972 = vmatprep.subr.mxu0 0.0
  %1973 = vmatpush1.msra.mxu0 %v1917
  %1974 = vmatprep.subr.mxu0 0.0
  %1975 = vmatpush1.msra.mxu0 %v1916
  %1976 = vmatprep.subr.mxu0 0.0
  %1977 = vmatpush1.msra.mxu0 %v1915
  %1978 = vmatprep.subr.mxu0 0.0
  %1979 = vmatpush1.msra.mxu0 %v1914
  %1980 = vmatprep.subr.mxu0 0.0
  %1981 = vmatpush1.msra.mxu0 %v1913
  %1982 = vmatprep.subr.mxu0 0.0
  %1983 = vmatpush2.msra.mxu0 0.0
  %1984 = vmatprep.subr.mxu0 0.0
  %1985 = vmatpush2.msra.mxu0 %v1943
  %1986 = vmatprep.subr.mxu0 0.0
  %1987 = vmatpush2.msra.mxu0 %v1942
  %1988 = vmatprep.subr.mxu0 0.0
  %1989 = vmatpush2.msra.mxu0 %v1941
  %1990 = vmatprep.subr.mxu0 0.0
  %1991 = vmatpush2.msra.mxu0 %v1940
  %1992 = vmatprep.subr.mxu0 0.0
  %1993 = vmatpush2.msra.mxu0 %v1939
  %1994 = vmatprep.subr.mxu0 0.0
  %1995 = vmatpush2.msra.mxu0 %v1938
  %1996 = vmatprep.subr.mxu0 0.0
  %1997 = vmatpush2.msra.mxu0 %v1937
  %1998 = vmatprep.subr.mxu0 0.0
  %1999 = vmatpush2.msra.mxu0 %v1936
  %2000 = vmatprep.subr.mxu0 0.0
  %2001 = vmatpush2.msra.mxu0 %v1935
  %2002 = vmatprep.subr.mxu0 0.0
  %2003 = vmatpush2.msra.mxu0 %v1934
  %2004 = vmatprep.subr.mxu0 0.0
  %2005 = vmatpush2.msra.mxu0 %v1933
  %2006 = vmatprep.subr.mxu0 0.0
  %2007 = vmatpush2.msra.mxu0 %v1932
  %2008 = vmatprep.subr.mxu0 0.0
  %2009 = vmatpush2.msra.mxu0 %v1931
  %2010 = vmatprep.subr.mxu0 0.0
  %2011 = vmatpush2.msra.mxu0 %v1930
  %2012 = vmatprep.subr.mxu0 0.0
  %2013 = vmatpush2.msra.mxu0 %v1929
  %2014 = vmatprep.mubr.f32.mxu0 %v1948
  %2015 = vmatmul.mubr.f32.gmra.mxu0 %v1944
  %v2016 = vpop.f32.mrf.mxu0
  %v2017 = vadd.f32 0.0, %v2016
  %v2018 = vpop.f32.mrf.mxu0
  %2019 = vdwg.mxu0
  %v2020 = vmul.f32 %v2017, 0.0005202914
  %v2021 = vmul.f32 %v2020, %v2020
  %2023 = vrot.lane.b32.xlu0 %v2021, 1
  %v2024 = vpop.permute.xlu0 %2023
  %v2026 = vsub.f32 %v2020, %v2024
  %v2027 = vmax.f32 %v2026, 0.0
  %v2028 = vld [vmem:[%s8] sm:$0xff]
  %v2029 = vadd.f32 %v2027, 1e-05
  %v2030 = vrsqrt.pop %v2029
  %2032 = vrot.lane.b32.xlu0 %v2030, 127
  %v2033 = vpop.permute.xlu0 %2032
  %v2035 = vmul.f32 %v2028, %v2033
  %v2036 = vmul.f32 %v2020, %v2035
  %2038 = vrot.lane.b32.xlu0 %v2036, 1
  %v2039 = vpop.permute.xlu0 %2038
  %v2041 = vsub.f32 %v2028, %v2039
  %v2042 = vsel %vm1912, %v2035, %v2041
  %v2043 = vld [vmem:[%s6] sm:$0xff]
  %v2044 = vld [vmem:[%s6 + $0x8] sm:$0xff]
  %v2045 = vld [vmem:[%s6 + $0x10] sm:$0xff]
  %v2046 = vld [vmem:[%s6 + $0x18] sm:$0xff]
  %v2047 = vld [vmem:[%s6 + $0x20] sm:$0xff]
  %v2048 = vld [vmem:[%s6 + $0x28] sm:$0xff]
  %v2049 = vld [vmem:[%s6 + $0x30] sm:$0xff]
  %v2050 = vld [vmem:[%s6 + $0x38] sm:$0xff]
  %v2051 = vld [vmem:[%s6 + $0x40] sm:$0xff]
  %v2052 = vld [vmem:[%s6 + $0x48] sm:$0xff]
  %v2053 = vld [vmem:[%s6 + $0x50] sm:$0xff]
  %v2054 = vld [vmem:[%s6 + $0x58] sm:$0xff]
  %v2055 = vld [vmem:[%s6 + $0x60] sm:$0xff]
  %v2056 = vld [vmem:[%s6 + $0x68] sm:$0xff]
  %v2057 = vld [vmem:[%s6 + $0x70] sm:$0xff]
  %v2058 = vld [vmem:[%s6 + $0x78] sm:$0xff]
  %v2059 = vld [vmem:[%s6 + $0x80] sm:$0xff]
  %v2060 = vld [vmem:[%s6 + $0x88] sm:$0xff]
  %v2061 = vld [vmem:[%s6 + $0x90] sm:$0xff]
  %v2062 = vld [vmem:[%s6 + $0x98] sm:$0xff]
  %v2063 = vld [vmem:[%s6 + $0xa0] sm:$0xff]
  %v2064 = vld [vmem:[%s6 + $0xa8] sm:$0xff]
  %v2065 = vld [vmem:[%s6 + $0xb0] sm:$0xff]
  %v2066 = vld [vmem:[%s6 + $0xb8] sm:$0xff]
  %v2067 = vld [vmem:[%s6 + $0xc0] sm:$0xff]
  %v2068 = vld [vmem:[%s6 + $0xc8] sm:$0xff]
  %v2069 = vld [vmem:[%s6 + $0xd0] sm:$0xff]
  %v2070 = vld [vmem:[%s6 + $0xd8] sm:$0xff]
  %v2071 = vld [vmem:[%s6 + $0xe0] sm:$0xff]
  %v2072 = vld [vmem:[%s6 + $0xe8] sm:$0xff]
  %v2073 = vld [vmem:[%s6 + $0xf0] sm:$0xff]
  %vm2074 = vcmask 64512
  %v2076 = vsel %vm2074, %v2043, 0
  %v2079 = vsel %vm2074, %v2044, 0
  %v2082 = vsel %vm2074, %v2045, 0
  %v2085 = vsel %vm2074, %v2046, 0
  %v2088 = vsel %vm2074, %v2047, 0
  %v2091 = vsel %vm2074, %v2048, 0
  %v2094 = vsel %vm2074, %v2049, 0
  %v2097 = vsel %vm2074, %v2050, 0
  %v2100 = vsel %vm2074, %v2051, 0
  %v2103 = vsel %vm2074, %v2052, 0
  %v2106 = vsel %vm2074, %v2053, 0
  %v2109 = vsel %vm2074, %v2054, 0
  %v2112 = vsel %vm2074, %v2055, 0
  %v2115 = vsel %vm2074, %v2056, 0
  %v2118 = vsel %vm2074, %v2057, 0
  %v2121 = vsel %vm2074, %v2058, 0
  %v2124 = vsel %vm2074, %v2059, 0
  %v2127 = vsel %vm2074, %v2060, 0
  %v2130 = vsel %vm2074, %v2061, 0
  %v2133 = vsel %vm2074, %v2062, 0
  %v2136 = vsel %vm2074, %v2063, 0
  %v2139 = vsel %vm2074, %v2064, 0
  %v2142 = vsel %vm2074, %v2065, 0
  %v2145 = vsel %vm2074, %v2066, 0
  %v2148 = vsel %vm2074, %v2067, 0
  %v2151 = vsel %vm2074, %v2068, 0
  %v2154 = vsel %vm2074, %v2069, 0
  %v2157 = vsel %vm2074, %v2070, 0
  %v2160 = vsel %vm2074, %v2071, 0
  %v2163 = vsel %vm2074, %v2072, 0
  %v2166 = vsel %vm2074, %v2073, 0
  %2168 = vmatprep.subr.mxu0 0.0
  %2169 = vmatpush1.msra.mxu0 0.0
  %2170 = vmatprep.subr.mxu0 0.0
  %2171 = vmatpush1.msra.mxu0 0.0
  %2172 = vmatprep.subr.mxu0 0.0
  %2173 = vmatpush1.msra.mxu0 0.0
  %2174 = vmatprep.subr.mxu0 0.0
  %2175 = vmatpush1.msra.mxu0 0.0
  %2176 = vmatprep.subr.mxu0 0.0
  %2177 = vmatpush1.msra.mxu0 0.0
  %2178 = vmatprep.subr.mxu0 0.0
  %2179 = vmatpush1.msra.mxu0 0.0
  %2180 = vmatprep.subr.mxu0 0.0
  %2181 = vmatpush1.msra.mxu0 0.0
  %2182 = vmatprep.subr.mxu0 0.0
  %2183 = vmatpush1.msra.mxu0 0.0
  %2184 = vmatprep.subr.mxu0 0.0
  %2185 = vmatpush1.msra.mxu0 0.0
  %2186 = vmatprep.subr.mxu0 0.0
  %2187 = vmatpush1.msra.mxu0 0.0
  %2188 = vmatprep.subr.mxu0 0.0
  %2189 = vmatpush1.msra.mxu0 0.0
  %2190 = vmatprep.subr.mxu0 0.0
  %2191 = vmatpush1.msra.mxu0 0.0
  %2192 = vmatprep.subr.mxu0 0.0
  %2193 = vmatpush1.msra.mxu0 0.0
  %2194 = vmatprep.subr.mxu0 0.0
  %2195 = vmatpush1.msra.mxu0 0.0
  %2196 = vmatprep.subr.mxu0 0.0
  %2197 = vmatpush1.msra.mxu0 0.0
  %2198 = vmatprep.subr.mxu0 0.0
  %2199 = vmatpush1.msra.mxu0 %v2042
  %2200 = vmatprep.subr.mxu0 0.0
  %2201 = vmatpush2.msra.mxu0 0.0
  %2202 = vmatprep.subr.mxu0 0.0
  %2203 = vmatpush2.msra.mxu0 0.0
  %2204 = vmatprep.subr.mxu0 0.0
  %2205 = vmatpush2.msra.mxu0 0.0
  %2206 = vmatprep.subr.mxu0 0.0
  %2207 = vmatpush2.msra.mxu0 0.0
  %2208 = vmatprep.subr.mxu0 0.0
  %2209 = vmatpush2.msra.mxu0 0.0
  %2210 = vmatprep.subr.mxu0 0.0
  %2211 = vmatpush2.msra.mxu0 0.0
  %2212 = vmatprep.subr.mxu0 0.0
  %2213 = vmatpush2.msra.mxu0 0.0
  %2214 = vmatprep.subr.mxu0 0.0
  %2215 = vmatpush2.msra.mxu0 0.0
  %2216 = vmatprep.subr.mxu0 0.0
  %2217 = vmatpush2.msra.mxu0 0.0
  %2218 = vmatprep.subr.mxu0 0.0
  %2219 = vmatpush2.msra.mxu0 0.0
  %2220 = vmatprep.subr.mxu0 0.0
  %2221 = vmatpush2.msra.mxu0 0.0
  %2222 = vmatprep.subr.mxu0 0.0
  %2223 = vmatpush2.msra.mxu0 0.0
  %2224 = vmatprep.subr.mxu0 0.0
  %2225 = vmatpush2.msra.mxu0 0.0
  %2226 = vmatprep.subr.mxu0 0.0
  %2227 = vmatpush2.msra.mxu0 0.0
  %2228 = vmatprep.subr.mxu0 0.0
  %2229 = vmatpush2.msra.mxu0 0.0
  %2230 = vmatprep.subr.mxu0 0.0
  %2231 = vmatpush2.msra.mxu0 0.0
  %2232 = vmatprep.mubr.f32.mxu0 0.0
  %2233 = vmatmul.mubr.f32.gmra.mxu0 %v2076
  %v2234 = vpop.f32.mrf.mxu0
  %v2235 = vadd.f32 0.0, %v2234
  %v2236 = vpop.f32.mrf.mxu0
  %2237 = vmatprep.mubr.f32.mxu0 0.0
  %2238 = vmatmul.mubr.f32.gmra.mxu0 %v2079
  %v2239 = vpop.f32.mrf.mxu0
  %v2240 = vadd.f32 0.0, %v2239
  %v2241 = vpop.f32.mrf.mxu0
  %2242 = vmatprep.mubr.f32.mxu0 0.0
  %2243 = vmatmul.mubr.f32.gmra.mxu0 %v2082
  %v2244 = vpop.f32.mrf.mxu0
  %v2245 = vadd.f32 0.0, %v2244
  %v2246 = vpop.f32.mrf.mxu0
  %2247 = vmatprep.mubr.f32.mxu0 0.0
  %2248 = vmatmul.mubr.f32.gmra.mxu0 %v2085
  %v2249 = vpop.f32.mrf.mxu0
  %v2250 = vadd.f32 0.0, %v2249
  %v2251 = vpop.f32.mrf.mxu0
  %2252 = vmatprep.mubr.f32.mxu0 0.0
  %2253 = vmatmul.mubr.f32.gmra.mxu0 %v2088
  %v2254 = vpop.f32.mrf.mxu0
  %v2255 = vadd.f32 0.0, %v2254
  %v2256 = vpop.f32.mrf.mxu0
  %2257 = vmatprep.mubr.f32.mxu0 0.0
  %2258 = vmatmul.mubr.f32.gmra.mxu0 %v2091
  %v2259 = vpop.f32.mrf.mxu0
  %v2260 = vadd.f32 0.0, %v2259
  %v2261 = vpop.f32.mrf.mxu0
  %2262 = vmatprep.mubr.f32.mxu0 0.0
  %2263 = vmatmul.mubr.f32.gmra.mxu0 %v2094
  %v2264 = vpop.f32.mrf.mxu0
  %v2265 = vadd.f32 0.0, %v2264
  %v2266 = vpop.f32.mrf.mxu0
  %2267 = vmatprep.mubr.f32.mxu0 0.0
  %2268 = vmatmul.mubr.f32.gmra.mxu0 %v2097
  %v2269 = vpop.f32.mrf.mxu0
  %v2270 = vadd.f32 0.0, %v2269
  %v2271 = vpop.f32.mrf.mxu0
  %2272 = vmatprep.mubr.f32.mxu0 0.0
  %2273 = vmatmul.mubr.f32.gmra.mxu0 %v2100
  %v2274 = vpop.f32.mrf.mxu0
  %v2275 = vadd.f32 0.0, %v2274
  %v2276 = vpop.f32.mrf.mxu0
  %2277 = vmatprep.mubr.f32.mxu0 0.0
  %2278 = vmatmul.mubr.f32.gmra.mxu0 %v2103
  %v2279 = vpop.f32.mrf.mxu0
  %v2280 = vadd.f32 0.0, %v2279
  %v2281 = vpop.f32.mrf.mxu0
  %2282 = vmatprep.mubr.f32.mxu0 0.0
  %2283 = vmatmul.mubr.f32.gmra.mxu0 %v2106
  %v2284 = vpop.f32.mrf.mxu0
  %v2285 = vadd.f32 0.0, %v2284
  %v2286 = vpop.f32.mrf.mxu0
  %2287 = vmatprep.mubr.f32.mxu0 0.0
  %2288 = vmatmul.mubr.f32.gmra.mxu0 %v2109
  %v2289 = vpop.f32.mrf.mxu0
  %v2290 = vadd.f32 0.0, %v2289
  %v2291 = vpop.f32.mrf.mxu0
  %2292 = vmatprep.mubr.f32.mxu0 0.0
  %2293 = vmatmul.mubr.f32.gmra.mxu0 %v2112
  %v2294 = vpop.f32.mrf.mxu0
  %v2295 = vadd.f32 0.0, %v2294
  %v2296 = vpop.f32.mrf.mxu0
  %2297 = vmatprep.mubr.f32.mxu0 0.0
  %2298 = vmatmul.mubr.f32.gmra.mxu0 %v2115
  %v2299 = vpop.f32.mrf.mxu0
  %v2300 = vadd.f32 0.0, %v2299
  %v2301 = vpop.f32.mrf.mxu0
  %2302 = vmatprep.mubr.f32.mxu0 0.0
  %2303 = vmatmul.mubr.f32.gmra.mxu0 %v2118
  %v2304 = vpop.f32.mrf.mxu0
  %v2305 = vadd.f32 0.0, %v2304
  %v2306 = vpop.f32.mrf.mxu0
  %2307 = vmatprep.mubr.f32.mxu0 0.0
  %2308 = vmatmul.mubr.f32.gmra.mxu0 %v2121
  %v2309 = vpop.f32.mrf.mxu0
  %v2310 = vadd.f32 0.0, %v2309
  %v2311 = vpop.f32.mrf.mxu0
  %2312 = vmatprep.mubr.f32.mxu0 0.0
  %2313 = vmatmul.mubr.f32.gmra.mxu0 %v2124
  %v2314 = vpop.f32.mrf.mxu0
  %v2315 = vadd.f32 0.0, %v2314
  %v2316 = vpop.f32.mrf.mxu0
  %2317 = vmatprep.mubr.f32.mxu0 0.0
  %2318 = vmatmul.mubr.f32.gmra.mxu0 %v2127
  %v2319 = vpop.f32.mrf.mxu0
  %v2320 = vadd.f32 0.0, %v2319
  %v2321 = vpop.f32.mrf.mxu0
  %2322 = vmatprep.mubr.f32.mxu0 0.0
  %2323 = vmatmul.mubr.f32.gmra.mxu0 %v2130
  %v2324 = vpop.f32.mrf.mxu0
  %v2325 = vadd.f32 0.0, %v2324
  %v2326 = vpop.f32.mrf.mxu0
  %2327 = vmatprep.mubr.f32.mxu0 0.0
  %2328 = vmatmul.mubr.f32.gmra.mxu0 %v2133
  %v2329 = vpop.f32.mrf.mxu0
  %v2330 = vadd.f32 0.0, %v2329
  %v2331 = vpop.f32.mrf.mxu0
  %2332 = vmatprep.mubr.f32.mxu0 0.0
  %2333 = vmatmul.mubr.f32.gmra.mxu0 %v2136
  %v2334 = vpop.f32.mrf.mxu0
  %v2335 = vadd.f32 0.0, %v2334
  %v2336 = vpop.f32.mrf.mxu0
  %2337 = vmatprep.mubr.f32.mxu0 0.0
  %2338 = vmatmul.mubr.f32.gmra.mxu0 %v2139
  %v2339 = vpop.f32.mrf.mxu0
  %v2340 = vadd.f32 0.0, %v2339
  %v2341 = vpop.f32.mrf.mxu0
  %2342 = vmatprep.mubr.f32.mxu0 0.0
  %2343 = vmatmul.mubr.f32.gmra.mxu0 %v2142
  %v2344 = vpop.f32.mrf.mxu0
  %v2345 = vadd.f32 0.0, %v2344
  %v2346 = vpop.f32.mrf.mxu0
  %2347 = vmatprep.mubr.f32.mxu0 0.0
  %2348 = vmatmul.mubr.f32.gmra.mxu0 %v2145
  %v2349 = vpop.f32.mrf.mxu0
  %v2350 = vadd.f32 0.0, %v2349
  %v2351 = vpop.f32.mrf.mxu0
  %2352 = vmatprep.mubr.f32.mxu0 0.0
  %2353 = vmatmul.mubr.f32.gmra.mxu0 %v2148
  %v2354 = vpop.f32.mrf.mxu0
  %v2355 = vadd.f32 0.0, %v2354
  %v2356 = vpop.f32.mrf.mxu0
  %2357 = vmatprep.mubr.f32.mxu0 0.0
  %2358 = vmatmul.mubr.f32.gmra.mxu0 %v2151
  %v2359 = vpop.f32.mrf.mxu0
  %v2360 = vadd.f32 0.0, %v2359
  %v2361 = vpop.f32.mrf.mxu0
  %2362 = vmatprep.mubr.f32.mxu0 0.0
  %2363 = vmatmul.mubr.f32.gmra.mxu0 %v2154
  %v2364 = vpop.f32.mrf.mxu0
  %v2365 = vadd.f32 0.0, %v2364
  %v2366 = vpop.f32.mrf.mxu0
  %2367 = vmatprep.mubr.f32.mxu0 0.0
  %2368 = vmatmul.mubr.f32.gmra.mxu0 %v2157
  %v2369 = vpop.f32.mrf.mxu0
  %v2370 = vadd.f32 0.0, %v2369
  %v2371 = vpop.f32.mrf.mxu0
  %2372 = vmatprep.mubr.f32.mxu0 0.0
  %2373 = vmatmul.mubr.f32.gmra.mxu0 %v2160
  %v2374 = vpop.f32.mrf.mxu0
  %v2375 = vadd.f32 0.0, %v2374
  %v2376 = vpop.f32.mrf.mxu0
  %2377 = vmatprep.mubr.f32.mxu0 0.0
  %2378 = vmatmul.mubr.f32.gmra.mxu0 %v2163
  %v2379 = vpop.f32.mrf.mxu0
  %v2380 = vadd.f32 0.0, %v2379
  %v2381 = vpop.f32.mrf.mxu0
  %2382 = vmatprep.mubr.f32.mxu0 0.0
  %2383 = vmatmul.mubr.f32.gmra.mxu0 %v2166
  %v2384 = vpop.f32.mrf.mxu0
  %v2385 = vadd.f32 0.0, %v2384
  %v2386 = vpop.f32.mrf.mxu0
  %2387 = vdwg.mxu0
  %2389 = vset.pattern.permute.xlu0 0
  %2390 = vperm.xlu0 %2389, %v2235
  %v2391 = vpop.permute.xlu0 %2390
  %2394 = vset.pattern.permute.xlu0 0
  %2395 = vperm.xlu0 %2394, %v2240
  %v2396 = vpop.permute.xlu0 %2395
  %2399 = vset.pattern.permute.xlu0 0
  %2400 = vperm.xlu0 %2399, %v2245
  %v2401 = vpop.permute.xlu0 %2400
  %2404 = vset.pattern.permute.xlu0 0
  %2405 = vperm.xlu0 %2404, %v2250
  %v2406 = vpop.permute.xlu0 %2405
  %2409 = vset.pattern.permute.xlu0 0
  %2410 = vperm.xlu0 %2409, %v2255
  %v2411 = vpop.permute.xlu0 %2410
  %2414 = vset.pattern.permute.xlu0 0
  %2415 = vperm.xlu0 %2414, %v2260
  %v2416 = vpop.permute.xlu0 %2415
  %2419 = vset.pattern.permute.xlu0 0
  %2420 = vperm.xlu0 %2419, %v2265
  %v2421 = vpop.permute.xlu0 %2420
  %2424 = vset.pattern.permute.xlu0 0
  %2425 = vperm.xlu0 %2424, %v2270
  %v2426 = vpop.permute.xlu0 %2425
  %2429 = vset.pattern.permute.xlu0 0
  %2430 = vperm.xlu0 %2429, %v2275
  %v2431 = vpop.permute.xlu0 %2430
  %2434 = vset.pattern.permute.xlu0 0
  %2435 = vperm.xlu0 %2434, %v2280
  %v2436 = vpop.permute.xlu0 %2435
  %2439 = vset.pattern.permute.xlu0 0
  %2440 = vperm.xlu0 %2439, %v2285
  %v2441 = vpop.permute.xlu0 %2440
  %2444 = vset.pattern.permute.xlu0 0
  %2445 = vperm.xlu0 %2444, %v2290
  %v2446 = vpop.permute.xlu0 %2445
  %2449 = vset.pattern.permute.xlu0 0
  %2450 = vperm.xlu0 %2449, %v2295
  %v2451 = vpop.permute.xlu0 %2450
  %2454 = vset.pattern.permute.xlu0 0
  %2455 = vperm.xlu0 %2454, %v2300
  %v2456 = vpop.permute.xlu0 %2455
  %2459 = vset.pattern.permute.xlu0 0
  %2460 = vperm.xlu0 %2459, %v2305
  %v2461 = vpop.permute.xlu0 %2460
  %2464 = vset.pattern.permute.xlu0 0
  %2465 = vperm.xlu0 %2464, %v2310
  %v2466 = vpop.permute.xlu0 %2465
  %2469 = vset.pattern.permute.xlu0 0
  %2470 = vperm.xlu0 %2469, %v2315
  %v2471 = vpop.permute.xlu0 %2470
  %2474 = vset.pattern.permute.xlu0 0
  %2475 = vperm.xlu0 %2474, %v2320
  %v2476 = vpop.permute.xlu0 %2475
  %2479 = vset.pattern.permute.xlu0 0
  %2480 = vperm.xlu0 %2479, %v2325
  %v2481 = vpop.permute.xlu0 %2480
  %2484 = vset.pattern.permute.xlu0 0
  %2485 = vperm.xlu0 %2484, %v2330
  %v2486 = vpop.permute.xlu0 %2485
  %2489 = vset.pattern.permute.xlu0 0
  %2490 = vperm.xlu0 %2489, %v2335
  %v2491 = vpop.permute.xlu0 %2490
  %2494 = vset.pattern.permute.xlu0 0
  %2495 = vperm.xlu0 %2494, %v2340
  %v2496 = vpop.permute.xlu0 %2495
  %2499 = vset.pattern.permute.xlu0 0
  %2500 = vperm.xlu0 %2499, %v2345
  %v2501 = vpop.permute.xlu0 %2500
  %2504 = vset.pattern.permute.xlu0 0
  %2505 = vperm.xlu0 %2504, %v2350
  %v2506 = vpop.permute.xlu0 %2505
  %2509 = vset.pattern.permute.xlu0 0
  %2510 = vperm.xlu0 %2509, %v2355
  %v2511 = vpop.permute.xlu0 %2510
  %2514 = vset.pattern.permute.xlu0 0
  %2515 = vperm.xlu0 %2514, %v2360
  %v2516 = vpop.permute.xlu0 %2515
  %2519 = vset.pattern.permute.xlu0 0
  %2520 = vperm.xlu0 %2519, %v2365
  %v2521 = vpop.permute.xlu0 %2520
  %2524 = vset.pattern.permute.xlu0 0
  %2525 = vperm.xlu0 %2524, %v2370
  %v2526 = vpop.permute.xlu0 %2525
  %2529 = vset.pattern.permute.xlu0 0
  %2530 = vperm.xlu0 %2529, %v2375
  %v2531 = vpop.permute.xlu0 %2530
  %2534 = vset.pattern.permute.xlu0 0
  %2535 = vperm.xlu0 %2534, %v2380
  %v2536 = vpop.permute.xlu0 %2535
  %2539 = vset.pattern.permute.xlu0 0
  %2540 = vperm.xlu0 %2539, %v2385
  %v2541 = vpop.permute.xlu0 %2540
  %v2543 = vmul.f32 %v1663, %v2391
  %v2544 = vmul.f32 %v1664, %v2396
  %v2545 = vmul.f32 %v1665, %v2401
  %v2546 = vmul.f32 %v1666, %v2406
  %v2547 = vmul.f32 %v1667, %v2411
  %v2548 = vmul.f32 %v1668, %v2416
  %v2549 = vmul.f32 %v1669, %v2421
  %v2550 = vmul.f32 %v1670, %v2426
  %v2551 = vmul.f32 %v1671, %v2431
  %v2552 = vmul.f32 %v1672, %v2436
  %v2553 = vmul.f32 %v1673, %v2441
  %v2554 = vmul.f32 %v1674, %v2446
  %v2555 = vmul.f32 %v1675, %v2451
  %v2556 = vmul.f32 %v1676, %v2456
  %v2557 = vmul.f32 %v1677, %v2461
  %v2558 = vmul.f32 %v1678, %v2466
  %v2559 = vmul.f32 %v1679, %v2471
  %v2560 = vmul.f32 %v1680, %v2476
  %v2561 = vmul.f32 %v1681, %v2481
  %v2562 = vmul.f32 %v1682, %v2486
  %v2563 = vmul.f32 %v1683, %v2491
  %v2564 = vmul.f32 %v1684, %v2496
  %v2565 = vmul.f32 %v1685, %v2501
  %v2566 = vmul.f32 %v1686, %v2506
  %v2567 = vmul.f32 %v1687, %v2511
  %v2568 = vmul.f32 %v1688, %v2516
  %v2569 = vmul.f32 %v1689, %v2521
  %v2570 = vmul.f32 %v1690, %v2526
  %v2571 = vmul.f32 %v1691, %v2531
  %v2572 = vmul.f32 %v1692, %v2536
  %v2573 = vmul.f32 %v1693, %v2541
  %2574 = vset.pattern.permute.xlu0 1
  %2575 = vperm.xlu0 %2574, %v2235
  %v2576 = vpop.permute.xlu0 %2575
  %2578 = vset.pattern.permute.xlu0 1
  %2579 = vperm.xlu0 %2578, %v2240
  %v2580 = vpop.permute.xlu0 %2579
  %2582 = vset.pattern.permute.xlu0 1
  %2583 = vperm.xlu0 %2582, %v2245
  %v2584 = vpop.permute.xlu0 %2583
  %2586 = vset.pattern.permute.xlu0 1
  %2587 = vperm.xlu0 %2586, %v2250
  %v2588 = vpop.permute.xlu0 %2587
  %2590 = vset.pattern.permute.xlu0 1
  %2591 = vperm.xlu0 %2590, %v2255
  %v2592 = vpop.permute.xlu0 %2591
  %2594 = vset.pattern.permute.xlu0 1
  %2595 = vperm.xlu0 %2594, %v2260
  %v2596 = vpop.permute.xlu0 %2595
  %2598 = vset.pattern.permute.xlu0 1
  %2599 = vperm.xlu0 %2598, %v2265
  %v2600 = vpop.permute.xlu0 %2599
  %2602 = vset.pattern.permute.xlu0 1
  %2603 = vperm.xlu0 %2602, %v2270
  %v2604 = vpop.permute.xlu0 %2603
  %2606 = vset.pattern.permute.xlu0 1
  %2607 = vperm.xlu0 %2606, %v2275
  %v2608 = vpop.permute.xlu0 %2607
  %2610 = vset.pattern.permute.xlu0 1
  %2611 = vperm.xlu0 %2610, %v2280
  %v2612 = vpop.permute.xlu0 %2611
  %2614 = vset.pattern.permute.xlu0 1
  %2615 = vperm.xlu0 %2614, %v2285
  %v2616 = vpop.permute.xlu0 %2615
  %2618 = vset.pattern.permute.xlu0 1
  %2619 = vperm.xlu0 %2618, %v2290
  %v2620 = vpop.permute.xlu0 %2619
  %2622 = vset.pattern.permute.xlu0 1
  %2623 = vperm.xlu0 %2622, %v2295
  %v2624 = vpop.permute.xlu0 %2623
  %2626 = vset.pattern.permute.xlu0 1
  %2627 = vperm.xlu0 %2626, %v2300
  %v2628 = vpop.permute.xlu0 %2627
  %2630 = vset.pattern.permute.xlu0 1
  %2631 = vperm.xlu0 %2630, %v2305
  %v2632 = vpop.permute.xlu0 %2631
  %2634 = vset.pattern.permute.xlu0 1
  %2635 = vperm.xlu0 %2634, %v2310
  %v2636 = vpop.permute.xlu0 %2635
  %2638 = vset.pattern.permute.xlu0 1
  %2639 = vperm.xlu0 %2638, %v2315
  %v2640 = vpop.permute.xlu0 %2639
  %2642 = vset.pattern.permute.xlu0 1
  %2643 = vperm.xlu0 %2642, %v2320
  %v2644 = vpop.permute.xlu0 %2643
  %2646 = vset.pattern.permute.xlu0 1
  %2647 = vperm.xlu0 %2646, %v2325
  %v2648 = vpop.permute.xlu0 %2647
  %2650 = vset.pattern.permute.xlu0 1
  %2651 = vperm.xlu0 %2650, %v2330
  %v2652 = vpop.permute.xlu0 %2651
  %2654 = vset.pattern.permute.xlu0 1
  %2655 = vperm.xlu0 %2654, %v2335
  %v2656 = vpop.permute.xlu0 %2655
  %2658 = vset.pattern.permute.xlu0 1
  %2659 = vperm.xlu0 %2658, %v2340
  %v2660 = vpop.permute.xlu0 %2659
  %2662 = vset.pattern.permute.xlu0 1
  %2663 = vperm.xlu0 %2662, %v2345
  %v2664 = vpop.permute.xlu0 %2663
  %2666 = vset.pattern.permute.xlu0 1
  %2667 = vperm.xlu0 %2666, %v2350
  %v2668 = vpop.permute.xlu0 %2667
  %2670 = vset.pattern.permute.xlu0 1
  %2671 = vperm.xlu0 %2670, %v2355
  %v2672 = vpop.permute.xlu0 %2671
  %2674 = vset.pattern.permute.xlu0 1
  %2675 = vperm.xlu0 %2674, %v2360
  %v2676 = vpop.permute.xlu0 %2675
  %2678 = vset.pattern.permute.xlu0 1
  %2679 = vperm.xlu0 %2678, %v2365
  %v2680 = vpop.permute.xlu0 %2679
  %2682 = vset.pattern.permute.xlu0 1
  %2683 = vperm.xlu0 %2682, %v2370
  %v2684 = vpop.permute.xlu0 %2683
  %2686 = vset.pattern.permute.xlu0 1
  %2687 = vperm.xlu0 %2686, %v2375
  %v2688 = vpop.permute.xlu0 %2687
  %2690 = vset.pattern.permute.xlu0 1
  %2691 = vperm.xlu0 %2690, %v2380
  %v2692 = vpop.permute.xlu0 %2691
  %2694 = vset.pattern.permute.xlu0 1
  %2695 = vperm.xlu0 %2694, %v2385
  %v2696 = vpop.permute.xlu0 %2695
  %v2698 = vadd.f32 %v2543, %v2576
  %v2699 = vadd.f32 %v2544, %v2580
  %v2700 = vadd.f32 %v2545, %v2584
  %v2701 = vadd.f32 %v2546, %v2588
  %v2702 = vadd.f32 %v2547, %v2592
  %v2703 = vadd.f32 %v2548, %v2596
  %v2704 = vadd.f32 %v2549, %v2600
  %v2705 = vadd.f32 %v2550, %v2604
  %v2706 = vadd.f32 %v2551, %v2608
  %v2707 = vadd.f32 %v2552, %v2612
  %v2708 = vadd.f32 %v2553, %v2616
  %v2709 = vadd.f32 %v2554, %v2620
  %v2710 = vadd.f32 %v2555, %v2624
  %v2711 = vadd.f32 %v2556, %v2628
  %v2712 = vadd.f32 %v2557, %v2632
  %v2713 = vadd.f32 %v2558, %v2636
  %v2714 = vadd.f32 %v2559, %v2640
  %v2715 = vadd.f32 %v2560, %v2644
  %v2716 = vadd.f32 %v2561, %v2648
  %v2717 = vadd.f32 %v2562, %v2652
  %v2718 = vadd.f32 %v2563, %v2656
  %v2719 = vadd.f32 %v2564, %v2660
  %v2720 = vadd.f32 %v2565, %v2664
  %v2721 = vadd.f32 %v2566, %v2668
  %v2722 = vadd.f32 %v2567, %v2672
  %v2723 = vadd.f32 %v2568, %v2676
  %v2724 = vadd.f32 %v2569, %v2680
  %v2725 = vadd.f32 %v2570, %v2684
  %v2726 = vadd.f32 %v2571, %v2688
  %v2727 = vadd.f32 %v2572, %v2692
  %v2728 = vadd.f32 %v2573, %v2696
  %v2729 = vmax.f32 %v2698, 0.0
  %v2730 = vmax.f32 %v2699, 0.0
  %v2731 = vmax.f32 %v2700, 0.0
  %v2732 = vmax.f32 %v2701, 0.0
  %v2733 = vmax.f32 %v2702, 0.0
  %v2734 = vmax.f32 %v2703, 0.0
  %v2735 = vmax.f32 %v2704, 0.0
  %v2736 = vmax.f32 %v2705, 0.0
  %v2737 = vmax.f32 %v2706, 0.0
  %v2738 = vmax.f32 %v2707, 0.0
  %v2739 = vmax.f32 %v2708, 0.0
  %v2740 = vmax.f32 %v2709, 0.0
  %v2741 = vmax.f32 %v2710, 0.0
  %v2742 = vmax.f32 %v2711, 0.0
  %v2743 = vmax.f32 %v2712, 0.0
  %v2744 = vmax.f32 %v2713, 0.0
  %v2745 = vmax.f32 %v2714, 0.0
  %v2746 = vmax.f32 %v2715, 0.0
  %v2747 = vmax.f32 %v2716, 0.0
  %v2748 = vmax.f32 %v2717, 0.0
  %v2749 = vmax.f32 %v2718, 0.0
  %v2750 = vmax.f32 %v2719, 0.0
  %v2751 = vmax.f32 %v2720, 0.0
  %v2752 = vmax.f32 %v2721, 0.0
  %v2753 = vmax.f32 %v2722, 0.0
  %v2754 = vmax.f32 %v2723, 0.0
  %v2755 = vmax.f32 %v2724, 0.0
  %v2756 = vmax.f32 %v2725, 0.0
  %v2757 = vmax.f32 %v2726, 0.0
  %v2758 = vmax.f32 %v2727, 0.0
  %v2759 = vmax.f32 %v2728, 0.0
  %v2760 = vld [vmem:[%s2] sm:$0xff]
  %v2761 = vld [vmem:[%s2 + $0x8] sm:$0xff]
  %v2762 = vld [vmem:[%s2 + $0x10] sm:$0xff]
  %v2763 = vld [vmem:[%s2 + $0x18] sm:$0xff]
  %v2764 = vld [vmem:[%s2 + $0x20] sm:$0xff]
  %v2765 = vld [vmem:[%s2 + $0x28] sm:$0xff]
  %v2766 = vld [vmem:[%s2 + $0x30] sm:$0xff]
  %v2767 = vld [vmem:[%s2 + $0x38] sm:$0xff]
  %v2768 = vld [vmem:[%s2 + $0x40] sm:$0xff]
  %v2769 = vld [vmem:[%s2 + $0x48] sm:$0xff]
  %v2770 = vld [vmem:[%s2 + $0x50] sm:$0xff]
  %v2771 = vld [vmem:[%s2 + $0x58] sm:$0xff]
  %v2772 = vld [vmem:[%s2 + $0x60] sm:$0xff]
  %v2773 = vld [vmem:[%s2 + $0x68] sm:$0xff]
  %v2774 = vld [vmem:[%s2 + $0x70] sm:$0xff]
  %v2775 = vld [vmem:[%s2 + $0x78] sm:$0xff]
  %v2776 = vld [vmem:[%s2 + $0x80] sm:$0xff]
  %v2777 = vld [vmem:[%s2 + $0x88] sm:$0xff]
  %v2778 = vld [vmem:[%s2 + $0x90] sm:$0xff]
  %v2779 = vld [vmem:[%s2 + $0x98] sm:$0xff]
  %v2780 = vld [vmem:[%s2 + $0xa0] sm:$0xff]
  %v2781 = vld [vmem:[%s2 + $0xa8] sm:$0xff]
  %v2782 = vld [vmem:[%s2 + $0xb0] sm:$0xff]
  %v2783 = vld [vmem:[%s2 + $0xb8] sm:$0xff]
  %v2784 = vld [vmem:[%s2 + $0xc0] sm:$0xff]
  %v2785 = vld [vmem:[%s2 + $0xc8] sm:$0xff]
  %v2786 = vld [vmem:[%s2 + $0xd0] sm:$0xff]
  %v2787 = vld [vmem:[%s2 + $0xd8] sm:$0xff]
  %v2788 = vld [vmem:[%s2 + $0xe0] sm:$0xff]
  %v2789 = vld [vmem:[%s2 + $0xe8] sm:$0xff]
  %v2790 = vld [vmem:[%s2 + $0xf0] sm:$0xff]
  %v2791 = vld [vmem:[%s2 + $0xf8] sm:$0xff]
  %v2792 = vld [vmem:[%s2 + $0x100] sm:$0xff]
  %v2793 = vld [vmem:[%s2 + $0x108] sm:$0xff]
  %v2794 = vld [vmem:[%s2 + $0x110] sm:$0xff]
  %v2795 = vld [vmem:[%s2 + $0x118] sm:$0xff]
  %v2796 = vld [vmem:[%s2 + $0x120] sm:$0xff]
  %v2797 = vld [vmem:[%s2 + $0x128] sm:$0xff]
  %v2798 = vld [vmem:[%s2 + $0x130] sm:$0xff]
  %v2799 = vld [vmem:[%s2 + $0x138] sm:$0xff]
  %v2800 = vld [vmem:[%s2 + $0x140] sm:$0xff]
  %v2801 = vld [vmem:[%s2 + $0x148] sm:$0xff]
  %v2802 = vld [vmem:[%s2 + $0x150] sm:$0xff]
  %v2803 = vld [vmem:[%s2 + $0x158] sm:$0xff]
  %v2804 = vld [vmem:[%s2 + $0x160] sm:$0xff]
  %v2805 = vpack.c.bf16 %v2730, %v2729
  %v2806 = vpack.c.bf16 %v2732, %v2731
  %v2807 = vpack.c.bf16 %v2734, %v2733
  %v2808 = vpack.c.bf16 %v2736, %v2735
  %v2809 = vpack.c.bf16 %v2738, %v2737
  %v2810 = vpack.c.bf16 %v2740, %v2739
  %v2811 = vpack.c.bf16 %v2742, %v2741
  %v2812 = vpack.c.bf16 %v2744, %v2743
  %v2813 = vpack.c.bf16 %v2746, %v2745
  %v2814 = vpack.c.bf16 %v2748, %v2747
  %v2815 = vpack.c.bf16 %v2750, %v2749
  %v2816 = vpack.c.bf16 %v2752, %v2751
  %v2817 = vpack.c.bf16 %v2754, %v2753
  %v2818 = vpack.c.bf16 %v2756, %v2755
  %v2819 = vpack.c.bf16 %v2758, %v2757
  %v2820 = vpack.c.bf16 %v2759, %v2759
  %v2866 = vunpack.c.l.b16 %v2760
  %v2867 = vunpack.c.h.b16 %v2760
  %v2868 = vunpack.c.l.b16 %v2761
  %v2869 = vunpack.c.h.b16 %v2761
  %v2870 = vunpack.c.l.b16 %v2762
  %v2871 = vunpack.c.h.b16 %v2762
  %v2872 = vunpack.c.l.b16 %v2763
  %v2873 = vunpack.c.h.b16 %v2763
  %v2874 = vunpack.c.l.b16 %v2764
  %v2875 = vunpack.c.h.b16 %v2764
  %v2876 = vunpack.c.l.b16 %v2765
  %v2877 = vunpack.c.h.b16 %v2765
  %v2878 = vunpack.c.l.b16 %v2766
  %v2879 = vunpack.c.h.b16 %v2766
  %v2880 = vunpack.c.l.b16 %v2767
  %v2881 = vunpack.c.h.b16 %v2767
  %v2882 = vunpack.c.l.b16 %v2768
  %v2883 = vunpack.c.h.b16 %v2768
  %v2884 = vunpack.c.l.b16 %v2769
  %v2885 = vunpack.c.h.b16 %v2769
  %v2886 = vunpack.c.l.b16 %v2770
  %v2887 = vunpack.c.h.b16 %v2770
  %v2888 = vunpack.c.l.b16 %v2771
  %v2889 = vunpack.c.h.b16 %v2771
  %v2890 = vunpack.c.l.b16 %v2772
  %v2891 = vunpack.c.h.b16 %v2772
  %v2892 = vunpack.c.l.b16 %v2773
  %v2893 = vunpack.c.h.b16 %v2773
  %v2894 = vunpack.c.l.b16 %v2774
  %v2895 = vunpack.c.h.b16 %v2774
  %v2896 = vunpack.c.l.b16 %v2775
  %v2897 = vunpack.c.h.b16 %v2775
  %v2898 = vunpack.c.l.b16 %v2776
  %v2899 = vunpack.c.h.b16 %v2776
  %v2900 = vunpack.c.l.b16 %v2777
  %v2901 = vunpack.c.h.b16 %v2777
  %v2902 = vunpack.c.l.b16 %v2778
  %v2903 = vunpack.c.h.b16 %v2778
  %v2904 = vunpack.c.l.b16 %v2779
  %v2905 = vunpack.c.h.b16 %v2779
  %v2906 = vunpack.c.l.b16 %v2780
  %v2907 = vunpack.c.h.b16 %v2780
  %v2908 = vunpack.c.l.b16 %v2781
  %v2909 = vunpack.c.h.b16 %v2781
  %v2910 = vunpack.c.l.b16 %v2782
  %v2911 = vunpack.c.h.b16 %v2782
  %v2912 = vunpack.c.l.b16 %v2783
  %v2913 = vunpack.c.h.b16 %v2783
  %v2914 = vunpack.c.l.b16 %v2784
  %v2915 = vunpack.c.h.b16 %v2784
  %v2916 = vunpack.c.l.b16 %v2785
  %v2917 = vunpack.c.h.b16 %v2785
  %v2918 = vunpack.c.l.b16 %v2786
  %v2919 = vunpack.c.h.b16 %v2786
  %v2920 = vunpack.c.l.b16 %v2787
  %v2921 = vunpack.c.h.b16 %v2787
  %v2922 = vunpack.c.l.b16 %v2788
  %v2923 = vunpack.c.h.b16 %v2788
  %v2924 = vunpack.c.l.b16 %v2789
  %v2925 = vunpack.c.h.b16 %v2789
  %v2926 = vunpack.c.l.b16 %v2790
  %v2927 = vunpack.c.h.b16 %v2790
  %v2928 = vunpack.c.l.b16 %v2791
  %v2929 = vunpack.c.h.b16 %v2791
  %v2930 = vunpack.c.l.b16 %v2792
  %v2931 = vunpack.c.h.b16 %v2792
  %v2932 = vunpack.c.l.b16 %v2793
  %v2933 = vunpack.c.h.b16 %v2793
  %v2934 = vunpack.c.l.b16 %v2794
  %v2935 = vunpack.c.h.b16 %v2794
  %v2936 = vunpack.c.l.b16 %v2795
  %v2937 = vunpack.c.h.b16 %v2795
  %v2938 = vunpack.c.l.b16 %v2796
  %v2939 = vunpack.c.h.b16 %v2796
  %v2940 = vunpack.c.l.b16 %v2797
  %v2941 = vunpack.c.h.b16 %v2797
  %v2942 = vunpack.c.l.b16 %v2798
  %v2943 = vunpack.c.h.b16 %v2798
  %v2944 = vunpack.c.l.b16 %v2799
  %v2945 = vunpack.c.h.b16 %v2799
  %v2946 = vunpack.c.l.b16 %v2800
  %v2947 = vunpack.c.h.b16 %v2800
  %v2948 = vunpack.c.l.b16 %v2801
  %v2949 = vunpack.c.h.b16 %v2801
  %v2950 = vunpack.c.l.b16 %v2802
  %v2951 = vunpack.c.h.b16 %v2802
  %v2952 = vunpack.c.l.b16 %v2803
  %v2953 = vunpack.c.h.b16 %v2803
  %v2954 = vunpack.c.l.b16 %v2804
  %v2955 = vunpack.c.h.b16 %v2804
  %v2956 = vpack.c.b16 %v2868, %v2866
  %v2957 = vpack.c.b16 %v2869, %v2867
  %v2958 = vpack.c.b16 %v2872, %v2870
  %v2959 = vpack.c.b16 %v2873, %v2871
  %v2960 = vpack.c.b16 %v2876, %v2874
  %v2961 = vpack.c.b16 %v2877, %v2875
  %v2962 = vpack.c.b16 %v2880, %v2878
  %v2963 = vpack.c.b16 %v2881, %v2879
  %v2964 = vpack.c.b16 %v2884, %v2882
  %v2965 = vpack.c.b16 %v2885, %v2883
  %v2966 = vpack.c.b16 %v2888, %v2886
  %v2967 = vpack.c.b16 %v2889, %v2887
  %v2968 = vpack.c.b16 %v2892, %v2890
  %v2969 = vpack.c.b16 %v2893, %v2891
  %v2970 = vpack.c.b16 %v2896, %v2894
  %v2971 = vpack.c.b16 %v2897, %v2895
  %v2972 = vpack.c.b16 %v2900, %v2898
  %v2973 = vpack.c.b16 %v2901, %v2899
  %v2974 = vpack.c.b16 %v2904, %v2902
  %v2975 = vpack.c.b16 %v2905, %v2903
  %v2976 = vpack.c.b16 %v2908, %v2906
  %v2977 = vpack.c.b16 %v2909, %v2907
  %v2978 = vpack.c.b16 %v2912, %v2910
  %v2979 = vpack.c.b16 %v2913, %v2911
  %v2980 = vpack.c.b16 %v2916, %v2914
  %v2981 = vpack.c.b16 %v2917, %v2915
  %v2982 = vpack.c.b16 %v2920, %v2918
  %v2983 = vpack.c.b16 %v2921, %v2919
  %v2984 = vpack.c.b16 %v2924, %v2922
  %v2985 = vpack.c.b16 %v2925, %v2923
  %v2986 = vpack.c.b16 %v2928, %v2926
  %v2987 = vpack.c.b16 %v2929, %v2927
  %v2988 = vpack.c.b16 %v2932, %v2930
  %v2989 = vpack.c.b16 %v2933, %v2931
  %v2990 = vpack.c.b16 %v2936, %v2934
  %v2991 = vpack.c.b16 %v2937, %v2935
  %v2992 = vpack.c.b16 %v2940, %v2938
  %v2993 = vpack.c.b16 %v2941, %v2939
  %v2994 = vpack.c.b16 %v2944, %v2942
  %v2995 = vpack.c.b16 %v2945, %v2943
  %v2996 = vpack.c.b16 %v2948, %v2946
  %v2997 = vpack.c.b16 %v2949, %v2947
  %v2998 = vpack.c.b16 %v2952, %v2950
  %v2999 = vpack.c.b16 %v2953, %v2951
  %v3000 = vpack.c.b16 %v2954, %v2954
  %v3001 = vpack.c.b16 %v2955, %v2955
  %v3026 = vsel %vm1946, %v2957, 0
  %v3029 = vsel %vm1946, %v2959, 0
  %v3032 = vsel %vm1946, %v2961, 0
  %v3035 = vsel %vm1946, %v2963, 0
  %v3038 = vsel %vm1946, %v2965, 0
  %v3041 = vsel %vm1946, %v2967, 0
  %v3044 = vsel %vm1946, %v2969, 0
  %v3047 = vsel %vm1946, %v2971, 0
  %v3050 = vsel %vm1946, %v2973, 0
  %v3053 = vsel %vm1946, %v2975, 0
  %v3056 = vsel %vm1946, %v2977, 0
  %v3059 = vsel %vm1946, %v2979, 0
  %v3062 = vsel %vm1946, %v2981, 0
  %v3065 = vsel %vm1946, %v2983, 0
  %v3068 = vsel %vm1946, %v2985, 0
  %v3071 = vsel %vm1946, %v2987, 0
  %v3074 = vsel %vm1946, %v2989, 0
  %v3077 = vsel %vm1946, %v2991, 0
  %v3080 = vsel %vm1946, %v2993, 0
  %v3083 = vsel %vm1946, %v2995, 0
  %v3086 = vsel %vm1946, %v2997, 0
  %v3089 = vsel %vm1946, %v2999, 0
  %v3092 = vsel %vm1946, %v3001, 0
  %vm3094 = vcmask 1043456
  %v3096 = vsel %vm3094, %v2820, 0
  %3098 = vmatprep.subr.bf16.mxu0 0
  %3099 = vmatpush1.bf16.msra.mxu0 %v2812
  %3100 = vmatprep.subr.bf16.mxu0 0
  %3101 = vmatpush1.bf16.msra.mxu0 %v2811
  %3102 = vmatprep.subr.bf16.mxu0 0
  %3103 = vmatpush1.bf16.msra.mxu0 %v2810
  %3104 = vmatprep.subr.bf16.mxu0 0
  %3105 = vmatpush1.bf16.msra.mxu0 %v2809
  %3106 = vmatprep.subr.bf16.mxu0 0
  %3107 = vmatpush1.bf16.msra.mxu0 %v2808
  %3108 = vmatprep.subr.bf16.mxu0 0
  %3109 = vmatpush1.bf16.msra.mxu0 %v2807
  %3110 = vmatprep.subr.bf16.mxu0 0
  %3111 = vmatpush1.bf16.msra.mxu0 %v2806
  %3112 = vmatprep.subr.bf16.mxu0 0
  %3113 = vmatpush1.bf16.msra.mxu0 %v2805
  %3114 = vmatprep.subr.bf16.mxu0 0
  %3115 = vmatpush2.bf16.msra.mxu0 %v3096
  %3116 = vmatprep.subr.bf16.mxu0 0
  %3117 = vmatpush2.bf16.msra.mxu0 %v2819
  %3118 = vmatprep.subr.bf16.mxu0 0
  %3119 = vmatpush2.bf16.msra.mxu0 %v2818
  %3120 = vmatprep.subr.bf16.mxu0 0
  %3121 = vmatpush2.bf16.msra.mxu0 %v2817
  %3122 = vmatprep.subr.bf16.mxu0 0
  %3123 = vmatpush2.bf16.msra.mxu0 %v2816
  %3124 = vmatprep.subr.bf16.mxu0 0
  %3125 = vmatpush2.bf16.msra.mxu0 %v2815
  %3126 = vmatprep.subr.bf16.mxu0 0
  %3127 = vmatpush2.bf16.msra.mxu0 %v2814
  %3128 = vmatprep.subr.bf16.mxu0 0
  %3129 = vmatpush2.bf16.msra.mxu0 %v2813
  %3130 = vmatprep.mubr.bf16.mxu0 %v3026
  %3131 = vmatmul.mubr.bf16.gmra.mxu0 %v2956
  %v3132 = vpop.f32.mrf.mxu0
  %v3133 = vadd.f32 0.0, %v3132
  %v3134 = vpop.f32.mrf.mxu0
  %v3135 = vpop.f32.mrf.mxu0
  %v3136 = vadd.f32 0.0, %v3135
  %v3137 = vpop.f32.mrf.mxu0
  %3138 = vmatprep.mubr.bf16.mxu0 %v3029
  %3139 = vmatmul.mubr.bf16.gmra.mxu0 %v2958
  %v3140 = vpop.f32.mrf.mxu0
  %v3141 = vadd.f32 0.0, %v3140
  %v3142 = vpop.f32.mrf.mxu0
  %v3143 = vpop.f32.mrf.mxu0
  %v3144 = vadd.f32 0.0, %v3143
  %v3145 = vpop.f32.mrf.mxu0
  %3146 = vmatprep.mubr.bf16.mxu0 %v3032
  %3147 = vmatmul.mubr.bf16.gmra.mxu0 %v2960
  %v3148 = vpop.f32.mrf.mxu0
  %v3149 = vadd.f32 0.0, %v3148
  %v3150 = vpop.f32.mrf.mxu0
  %v3151 = vpop.f32.mrf.mxu0
  %v3152 = vadd.f32 0.0, %v3151
  %v3153 = vpop.f32.mrf.mxu0
  %3154 = vmatprep.mubr.bf16.mxu0 %v3035
  %3155 = vmatmul.mubr.bf16.gmra.mxu0 %v2962
  %v3156 = vpop.f32.mrf.mxu0
  %v3157 = vadd.f32 0.0, %v3156
  %v3158 = vpop.f32.mrf.mxu0
  %v3159 = vpop.f32.mrf.mxu0
  %v3160 = vadd.f32 0.0, %v3159
  %v3161 = vpop.f32.mrf.mxu0
  %3162 = vmatprep.mubr.bf16.mxu0 %v3038
  %3163 = vmatmul.mubr.bf16.gmra.mxu0 %v2964
  %v3164 = vpop.f32.mrf.mxu0
  %v3165 = vadd.f32 0.0, %v3164
  %v3166 = vpop.f32.mrf.mxu0
  %v3167 = vpop.f32.mrf.mxu0
  %v3168 = vadd.f32 0.0, %v3167
  %v3169 = vpop.f32.mrf.mxu0
  %3170 = vmatprep.mubr.bf16.mxu0 %v3041
  %3171 = vmatmul.mubr.bf16.gmra.mxu0 %v2966
  %v3172 = vpop.f32.mrf.mxu0
  %v3173 = vadd.f32 0.0, %v3172
  %v3174 = vpop.f32.mrf.mxu0
  %v3175 = vpop.f32.mrf.mxu0
  %v3176 = vadd.f32 0.0, %v3175
  %v3177 = vpop.f32.mrf.mxu0
  %3178 = vmatprep.mubr.bf16.mxu0 %v3044
  %3179 = vmatmul.mubr.bf16.gmra.mxu0 %v2968
  %v3180 = vpop.f32.mrf.mxu0
  %v3181 = vadd.f32 0.0, %v3180
  %v3182 = vpop.f32.mrf.mxu0
  %v3183 = vpop.f32.mrf.mxu0
  %v3184 = vadd.f32 0.0, %v3183
  %v3185 = vpop.f32.mrf.mxu0
  %3186 = vmatprep.mubr.bf16.mxu0 %v3047
  %3187 = vmatmul.mubr.bf16.gmra.mxu0 %v2970
  %v3188 = vpop.f32.mrf.mxu0
  %v3189 = vadd.f32 0.0, %v3188
  %v3190 = vpop.f32.mrf.mxu0
  %v3191 = vpop.f32.mrf.mxu0
  %v3192 = vadd.f32 0.0, %v3191
  %v3193 = vpop.f32.mrf.mxu0
  %3194 = vmatprep.mubr.bf16.mxu0 %v3050
  %3195 = vmatmul.mubr.bf16.gmra.mxu0 %v2972
  %v3196 = vpop.f32.mrf.mxu0
  %v3197 = vadd.f32 0.0, %v3196
  %v3198 = vpop.f32.mrf.mxu0
  %v3199 = vpop.f32.mrf.mxu0
  %v3200 = vadd.f32 0.0, %v3199
  %v3201 = vpop.f32.mrf.mxu0
  %3202 = vmatprep.mubr.bf16.mxu0 %v3053
  %3203 = vmatmul.mubr.bf16.gmra.mxu0 %v2974
  %v3204 = vpop.f32.mrf.mxu0
  %v3205 = vadd.f32 0.0, %v3204
  %v3206 = vpop.f32.mrf.mxu0
  %v3207 = vpop.f32.mrf.mxu0
  %v3208 = vadd.f32 0.0, %v3207
  %v3209 = vpop.f32.mrf.mxu0
  %3210 = vmatprep.mubr.bf16.mxu0 %v3056
  %3211 = vmatmul.mubr.bf16.gmra.mxu0 %v2976
  %v3212 = vpop.f32.mrf.mxu0
  %v3213 = vadd.f32 0.0, %v3212
  %v3214 = vpop.f32.mrf.mxu0
  %v3215 = vpop.f32.mrf.mxu0
  %v3216 = vadd.f32 0.0, %v3215
  %v3217 = vpop.f32.mrf.mxu0
  %3218 = vmatprep.mubr.bf16.mxu0 %v3059
  %3219 = vmatmul.mubr.bf16.gmra.mxu0 %v2978
  %v3220 = vpop.f32.mrf.mxu0
  %v3221 = vadd.f32 0.0, %v3220
  %v3222 = vpop.f32.mrf.mxu0
  %v3223 = vpop.f32.mrf.mxu0
  %v3224 = vadd.f32 0.0, %v3223
  %v3225 = vpop.f32.mrf.mxu0
  %3226 = vmatprep.mubr.bf16.mxu0 %v3062
  %3227 = vmatmul.mubr.bf16.gmra.mxu0 %v2980
  %v3228 = vpop.f32.mrf.mxu0
  %v3229 = vadd.f32 0.0, %v3228
  %v3230 = vpop.f32.mrf.mxu0
  %v3231 = vpop.f32.mrf.mxu0
  %v3232 = vadd.f32 0.0, %v3231
  %v3233 = vpop.f32.mrf.mxu0
  %3234 = vmatprep.mubr.bf16.mxu0 %v3065
  %3235 = vmatmul.mubr.bf16.gmra.mxu0 %v2982
  %v3236 = vpop.f32.mrf.mxu0
  %v3237 = vadd.f32 0.0, %v3236
  %v3238 = vpop.f32.mrf.mxu0
  %v3239 = vpop.f32.mrf.mxu0
  %v3240 = vadd.f32 0.0, %v3239
  %v3241 = vpop.f32.mrf.mxu0
  %3242 = vmatprep.mubr.bf16.mxu0 %v3068
  %3243 = vmatmul.mubr.bf16.gmra.mxu0 %v2984
  %v3244 = vpop.f32.mrf.mxu0
  %v3245 = vadd.f32 0.0, %v3244
  %v3246 = vpop.f32.mrf.mxu0
  %v3247 = vpop.f32.mrf.mxu0
  %v3248 = vadd.f32 0.0, %v3247
  %v3249 = vpop.f32.mrf.mxu0
  %3250 = vmatprep.mubr.bf16.mxu0 %v3071
  %3251 = vmatmul.mubr.bf16.gmra.mxu0 %v2986
  %v3252 = vpop.f32.mrf.mxu0
  %v3253 = vadd.f32 0.0, %v3252
  %v3254 = vpop.f32.mrf.mxu0
  %v3255 = vpop.f32.mrf.mxu0
  %v3256 = vadd.f32 0.0, %v3255
  %v3257 = vpop.f32.mrf.mxu0
  %3258 = vmatprep.mubr.bf16.mxu0 %v3074
  %3259 = vmatmul.mubr.bf16.gmra.mxu0 %v2988
  %v3260 = vpop.f32.mrf.mxu0
  %v3261 = vadd.f32 0.0, %v3260
  %v3262 = vpop.f32.mrf.mxu0
  %v3263 = vpop.f32.mrf.mxu0
  %v3264 = vadd.f32 0.0, %v3263
  %v3265 = vpop.f32.mrf.mxu0
  %3266 = vmatprep.mubr.bf16.mxu0 %v3077
  %3267 = vmatmul.mubr.bf16.gmra.mxu0 %v2990
  %v3268 = vpop.f32.mrf.mxu0
  %v3269 = vadd.f32 0.0, %v3268
  %v3270 = vpop.f32.mrf.mxu0
  %v3271 = vpop.f32.mrf.mxu0
  %v3272 = vadd.f32 0.0, %v3271
  %v3273 = vpop.f32.mrf.mxu0
  %3274 = vmatprep.mubr.bf16.mxu0 %v3080
  %3275 = vmatmul.mubr.bf16.gmra.mxu0 %v2992
  %v3276 = vpop.f32.mrf.mxu0
  %v3277 = vadd.f32 0.0, %v3276
  %v3278 = vpop.f32.mrf.mxu0
  %v3279 = vpop.f32.mrf.mxu0
  %v3280 = vadd.f32 0.0, %v3279
  %v3281 = vpop.f32.mrf.mxu0
  %3282 = vmatprep.mubr.bf16.mxu0 %v3083
  %3283 = vmatmul.mubr.bf16.gmra.mxu0 %v2994
  %v3284 = vpop.f32.mrf.mxu0
  %v3285 = vadd.f32 0.0, %v3284
  %v3286 = vpop.f32.mrf.mxu0
  %v3287 = vpop.f32.mrf.mxu0
  %v3288 = vadd.f32 0.0, %v3287
  %v3289 = vpop.f32.mrf.mxu0
  %3290 = vmatprep.mubr.bf16.mxu0 %v3086
  %3291 = vmatmul.mubr.bf16.gmra.mxu0 %v2996
  %v3292 = vpop.f32.mrf.mxu0
  %v3293 = vadd.f32 0.0, %v3292
  %v3294 = vpop.f32.mrf.mxu0
  %v3295 = vpop.f32.mrf.mxu0
  %v3296 = vadd.f32 0.0, %v3295
  %v3297 = vpop.f32.mrf.mxu0
  %3298 = vmatprep.mubr.bf16.mxu0 %v3089
  %3299 = vmatmul.mubr.bf16.gmra.mxu0 %v2998
  %v3300 = vpop.f32.mrf.mxu0
  %v3301 = vadd.f32 0.0, %v3300
  %v3302 = vpop.f32.mrf.mxu0
  %v3303 = vpop.f32.mrf.mxu0
  %v3304 = vadd.f32 0.0, %v3303
  %v3305 = vpop.f32.mrf.mxu0
  %3306 = vmatprep.mubr.bf16.mxu0 %v3092
  %3307 = vmatmul.mubr.bf16.gmra.mxu0 %v3000
  %v3308 = vpop.f32.mrf.mxu0
  %v3309 = vadd.f32 0.0, %v3308
  %v3310 = vpop.f32.mrf.mxu0
  %v3311 = vpop.f32.mrf.mxu0
  %v3312 = vpop.f32.mrf.mxu0
  %3313 = vdwg.mxu0
  %v3314 = vpack.c.bf16 %v3136, %v3133
  %v3315 = vpack.c.bf16 %v3144, %v3141
  %v3316 = vpack.c.bf16 %v3152, %v3149
  %v3317 = vpack.c.bf16 %v3160, %v3157
  %v3318 = vpack.c.bf16 %v3168, %v3165
  %v3319 = vpack.c.bf16 %v3176, %v3173
  %v3320 = vpack.c.bf16 %v3184, %v3181
  %v3321 = vpack.c.bf16 %v3189, %v3189
  %s3322 = scalar_lea.vmem %s5, 192
  %v3323 = vld [vmem:[%s3322] sm:$0xf]
  %v3324 = vld [vmem:[%s3322 + $0x4] sm:$0xf]
  %v3325 = vld [vmem:[%s3322 + $0x8] sm:$0xf]
  %v3326 = vld [vmem:[%s3322 + $0xc] sm:$0xf]
  %v3327 = vld [vmem:[%s3322 + $0x10] sm:$0xf]
  %v3328 = vld [vmem:[%s3322 + $0x14] sm:$0xf]
  %v3329 = vld [vmem:[%s3322 + $0x18] sm:$0xf]
  %v3330 = vld [vmem:[%s3322 + $0x1c] sm:$0x7]
  %v3331 = vpack.c.bf16 %v3197, %v3192
  %v3332 = vpack.c.bf16 %v3205, %v3200
  %v3333 = vpack.c.bf16 %v3213, %v3208
  %v3334 = vpack.c.bf16 %v3221, %v3216
  %v3335 = vpack.c.bf16 %v3229, %v3224
  %v3336 = vpack.c.bf16 %v3237, %v3232
  %v3337 = vpack.c.bf16 %v3245, %v3240
  %v3338 = vpack.c.bf16 %v3248, %v3248
  %s3339 = scalar_lea.vmem %s5, 256
  %v3340 = vld [vmem:[%s3339] sm:$0xf]
  %v3341 = vld [vmem:[%s3339 + $0x4] sm:$0xf]
  %v3342 = vld [vmem:[%s3339 + $0x8] sm:$0xf]
  %v3343 = vld [vmem:[%s3339 + $0xc] sm:$0xf]
  %v3344 = vld [vmem:[%s3339 + $0x10] sm:$0xf]
  %v3345 = vld [vmem:[%s3339 + $0x14] sm:$0xf]
  %v3346 = vld [vmem:[%s3339 + $0x18] sm:$0xf]
  %v3347 = vld [vmem:[%s3339 + $0x1c] sm:$0x7]
  %v3356 = vunpack.c.l.b16 %v3340
  %v3357 = vunpack.c.l.b16 %v3341
  %v3358 = vunpack.c.l.b16 %v3342
  %v3359 = vunpack.c.l.b16 %v3343
  %v3360 = vunpack.c.l.b16 %v3344
  %v3361 = vunpack.c.l.b16 %v3345
  %v3362 = vunpack.c.l.b16 %v3346
  %v3363 = vunpack.c.l.b16 %v3347
  %v3364 = vpack.c.b16 %v3357, %v3356
  %v3365 = vpack.c.b16 %v3359, %v3358
  %v3366 = vpack.c.b16 %v3361, %v3360
  %v3367 = vpack.c.b16 %v3363, %v3362
  %v3372 = vsel %vm1694, %v3331, 0
  %v3375 = vsel %vm1694, %v3332, 0
  %v3378 = vsel %vm1694, %v3333, 0
  %v3381 = vsel %vm1694, %v3334, 0
  %v3384 = vsel %vm1694, %v3335, 0
  %v3387 = vsel %vm1694, %v3336, 0
  %v3390 = vsel %vm1694, %v3337, 0
  %v3393 = vsel %vm1694, %v3338, 0
  %vm3395 = vcmask 1046528
  %v3397 = vsel %vm3395, %v3367, 0
  %3399 = vmatprep.subr.bf16.mxu0 0
  %3400 = vmatpush1.bf16.msra.mxu0 0
  %3401 = vmatprep.subr.bf16.mxu0 0
  %3402 = vmatpush1.bf16.msra.mxu0 0
  %3403 = vmatprep.subr.bf16.mxu0 0
  %3404 = vmatpush1.bf16.msra.mxu0 0
  %3405 = vmatprep.subr.bf16.mxu0 0
  %3406 = vmatpush1.bf16.msra.mxu0 0
  %3407 = vmatprep.subr.bf16.mxu0 0
  %3408 = vmatpush1.bf16.msra.mxu0 %v3397
  %3409 = vmatprep.subr.bf16.mxu0 0
  %3410 = vmatpush1.bf16.msra.mxu0 %v3366
  %3411 = vmatprep.subr.bf16.mxu0 0
  %3412 = vmatpush1.bf16.msra.mxu0 %v3365
  %3413 = vmatprep.subr.bf16.mxu0 0
  %3414 = vmatpush1.bf16.msra.mxu0 %v3364
  %3415 = vmatprep.subr.bf16.mxu0 0
  %3416 = vmatpush2.bf16.msra.mxu0 0
  %3417 = vmatprep.subr.bf16.mxu0 0
  %3418 = vmatpush2.bf16.msra.mxu0 0
  %3419 = vmatprep.subr.bf16.mxu0 0
  %3420 = vmatpush2.bf16.msra.mxu0 0
  %3421 = vmatprep.subr.bf16.mxu0 0
  %3422 = vmatpush2.bf16.msra.mxu0 0
  %3423 = vmatprep.subr.bf16.mxu0 0
  %3424 = vmatpush2.bf16.msra.mxu0 0
  %3425 = vmatprep.subr.bf16.mxu0 0
  %3426 = vmatpush2.bf16.msra.mxu0 0
  %3427 = vmatprep.subr.bf16.mxu0 0
  %3428 = vmatpush2.bf16.msra.mxu0 0
  %3429 = vmatprep.subr.bf16.mxu0 0
  %3430 = vmatpush2.bf16.msra.mxu0 0
  %3431 = vmatprep.mubr.bf16.mxu0 0
  %3432 = vmatmul.mubr.bf16.gmra.mxu0 %v3372
  %v3433 = vpop.f32.mrf.mxu0
  %v3434 = vadd.f32 0.0, %v3433
  %v3435 = vpop.f32.mrf.mxu0
  %v3436 = vpop.f32.mrf.mxu0
  %v3437 = vadd.f32 0.0, %v3436
  %v3438 = vpop.f32.mrf.mxu0
  %3439 = vmatprep.mubr.bf16.mxu0 0
  %3440 = vmatmul.mubr.bf16.gmra.mxu0 %v3375
  %v3441 = vpop.f32.mrf.mxu0
  %v3442 = vadd.f32 0.0, %v3441
  %v3443 = vpop.f32.mrf.mxu0
  %v3444 = vpop.f32.mrf.mxu0
  %v3445 = vadd.f32 0.0, %v3444
  %v3446 = vpop.f32.mrf.mxu0
  %3447 = vmatprep.mubr.bf16.mxu0 0
  %3448 = vmatmul.mubr.bf16.gmra.mxu0 %v3378
  %v3449 = vpop.f32.mrf.mxu0
  %v3450 = vadd.f32 0.0, %v3449
  %v3451 = vpop.f32.mrf.mxu0
  %v3452 = vpop.f32.mrf.mxu0
  %v3453 = vadd.f32 0.0, %v3452
  %v3454 = vpop.f32.mrf.mxu0
  %3455 = vmatprep.mubr.bf16.mxu0 0
  %3456 = vmatmul.mubr.bf16.gmra.mxu0 %v3381
  %v3457 = vpop.f32.mrf.mxu0
  %v3458 = vadd.f32 0.0, %v3457
  %v3459 = vpop.f32.mrf.mxu0
  %v3460 = vpop.f32.mrf.mxu0
  %v3461 = vadd.f32 0.0, %v3460
  %v3462 = vpop.f32.mrf.mxu0
  %3463 = vmatprep.mubr.bf16.mxu0 0
  %3464 = vmatmul.mubr.bf16.gmra.mxu0 %v3384
  %v3465 = vpop.f32.mrf.mxu0
  %v3466 = vadd.f32 0.0, %v3465
  %v3467 = vpop.f32.mrf.mxu0
  %v3468 = vpop.f32.mrf.mxu0
  %v3469 = vadd.f32 0.0, %v3468
  %v3470 = vpop.f32.mrf.mxu0
  %3471 = vmatprep.mubr.bf16.mxu0 0
  %3472 = vmatmul.mubr.bf16.gmra.mxu0 %v3387
  %v3473 = vpop.f32.mrf.mxu0
  %v3474 = vadd.f32 0.0, %v3473
  %v3475 = vpop.f32.mrf.mxu0
  %v3476 = vpop.f32.mrf.mxu0
  %v3477 = vadd.f32 0.0, %v3476
  %v3478 = vpop.f32.mrf.mxu0
  %3479 = vmatprep.mubr.bf16.mxu0 0
  %3480 = vmatmul.mubr.bf16.gmra.mxu0 %v3390
  %v3481 = vpop.f32.mrf.mxu0
  %v3482 = vadd.f32 0.0, %v3481
  %v3483 = vpop.f32.mrf.mxu0
  %v3484 = vpop.f32.mrf.mxu0
  %v3485 = vadd.f32 0.0, %v3484
  %v3486 = vpop.f32.mrf.mxu0
  %3487 = vmatprep.mubr.bf16.mxu0 0
  %3488 = vmatmul.mubr.bf16.gmra.mxu0 %v3393
  %v3489 = vpop.f32.mrf.mxu0
  %v3490 = vadd.f32 0.0, %v3489
  %v3491 = vpop.f32.mrf.mxu0
  %v3492 = vpop.f32.mrf.mxu0
  %v3493 = vpop.f32.mrf.mxu0
  %3494 = vdwg.mxu0
  %v3503 = vunpack.c.l.b16 %v3323
  %v3504 = vunpack.c.l.b16 %v3324
  %v3505 = vunpack.c.l.b16 %v3325
  %v3506 = vunpack.c.l.b16 %v3326
  %v3507 = vunpack.c.l.b16 %v3327
  %v3508 = vunpack.c.l.b16 %v3328
  %v3509 = vunpack.c.l.b16 %v3329
  %v3510 = vunpack.c.l.b16 %v3330
  %v3511 = vpack.c.b16 %v3504, %v3503
  %v3512 = vpack.c.b16 %v3506, %v3505
  %v3513 = vpack.c.b16 %v3508, %v3507
  %v3514 = vpack.c.b16 %v3510, %v3509
  %v3519 = vsel %vm1694, %v3314, 0
  %v3522 = vsel %vm1694, %v3315, 0
  %v3525 = vsel %vm1694, %v3316, 0
  %v3528 = vsel %vm1694, %v3317, 0
  %v3531 = vsel %vm1694, %v3318, 0
  %v3534 = vsel %vm1694, %v3319, 0
  %v3537 = vsel %vm1694, %v3320, 0
  %v3540 = vsel %vm1694, %v3321, 0
  %v3543 = vsel %vm3395, %v3514, 0
  %3545 = vmatprep.subr.bf16.mxu0 0
  %3546 = vmatpush1.bf16.msra.mxu0 0
  %3547 = vmatprep.subr.bf16.mxu0 0
  %3548 = vmatpush1.bf16.msra.mxu0 0
  %3549 = vmatprep.subr.bf16.mxu0 0
  %3550 = vmatpush1.bf16.msra.mxu0 0
  %3551 = vmatprep.subr.bf16.mxu0 0
  %3552 = vmatpush1.bf16.msra.mxu0 0
  %3553 = vmatprep.subr.bf16.mxu0 0
  %3554 = vmatpush1.bf16.msra.mxu0 %v3543
  %3555 = vmatprep.subr.bf16.mxu0 0
  %3556 = vmatpush1.bf16.msra.mxu0 %v3513
  %3557 = vmatprep.subr.bf16.mxu0 0
  %3558 = vmatpush1.bf16.msra.mxu0 %v3512
  %3559 = vmatprep.subr.bf16.mxu0 0
  %3560 = vmatpush1.bf16.msra.mxu0 %v3511
  %3561 = vmatprep.subr.bf16.mxu0 0
  %3562 = vmatpush2.bf16.msra.mxu0 0
  %3563 = vmatprep.subr.bf16.mxu0 0
  %3564 = vmatpush2.bf16.msra.mxu0 0
  %3565 = vmatprep.subr.bf16.mxu0 0
  %3566 = vmatpush2.bf16.msra.mxu0 0
  %3567 = vmatprep.subr.bf16.mxu0 0
  %3568 = vmatpush2.bf16.msra.mxu0 0
  %3569 = vmatprep.subr.bf16.mxu0 0
  %3570 = vmatpush2.bf16.msra.mxu0 0
  %3571 = vmatprep.subr.bf16.mxu0 0
  %3572 = vmatpush2.bf16.msra.mxu0 0
  %3573 = vmatprep.subr.bf16.mxu0 0
  %3574 = vmatpush2.bf16.msra.mxu0 0
  %3575 = vmatprep.subr.bf16.mxu0 0
  %3576 = vmatpush2.bf16.msra.mxu0 0
  %3577 = vmatprep.mubr.bf16.mxu0 0
  %3578 = vmatmul.mubr.bf16.gmra.mxu0 %v3519
  %v3579 = vpop.f32.mrf.mxu0
  %v3580 = vadd.f32 %v3434, %v3579
  %v3581 = vpop.f32.mrf.mxu0
  %v3582 = vpop.f32.mrf.mxu0
  %v3583 = vadd.f32 %v3437, %v3582
  %v3584 = vpop.f32.mrf.mxu0
  %3585 = vmatprep.mubr.bf16.mxu0 0
  %3586 = vmatmul.mubr.bf16.gmra.mxu0 %v3522
  %v3587 = vpop.f32.mrf.mxu0
  %v3588 = vadd.f32 %v3442, %v3587
  %v3589 = vpop.f32.mrf.mxu0
  %v3590 = vpop.f32.mrf.mxu0
  %v3591 = vadd.f32 %v3445, %v3590
  %v3592 = vpop.f32.mrf.mxu0
  %3593 = vmatprep.mubr.bf16.mxu0 0
  %3594 = vmatmul.mubr.bf16.gmra.mxu0 %v3525
  %v3595 = vpop.f32.mrf.mxu0
  %v3596 = vadd.f32 %v3450, %v3595
  %v3597 = vpop.f32.mrf.mxu0
  %v3598 = vpop.f32.mrf.mxu0
  %v3599 = vadd.f32 %v3453, %v3598
  %v3600 = vpop.f32.mrf.mxu0
  %3601 = vmatprep.mubr.bf16.mxu0 0
  %3602 = vmatmul.mubr.bf16.gmra.mxu0 %v3528
  %v3603 = vpop.f32.mrf.mxu0
  %v3604 = vadd.f32 %v3458, %v3603
  %v3605 = vpop.f32.mrf.mxu0
  %v3606 = vpop.f32.mrf.mxu0
  %v3607 = vadd.f32 %v3461, %v3606
  %v3608 = vpop.f32.mrf.mxu0
  %3609 = vmatprep.mubr.bf16.mxu0 0
  %3610 = vmatmul.mubr.bf16.gmra.mxu0 %v3531
  %v3611 = vpop.f32.mrf.mxu0
  %v3612 = vadd.f32 %v3466, %v3611
  %v3613 = vpop.f32.mrf.mxu0
  %v3614 = vpop.f32.mrf.mxu0
  %v3615 = vadd.f32 %v3469, %v3614
  %v3616 = vpop.f32.mrf.mxu0
  %3617 = vmatprep.mubr.bf16.mxu0 0
  %3618 = vmatmul.mubr.bf16.gmra.mxu0 %v3534
  %v3619 = vpop.f32.mrf.mxu0
  %v3620 = vadd.f32 %v3474, %v3619
  %v3621 = vpop.f32.mrf.mxu0
  %v3622 = vpop.f32.mrf.mxu0
  %v3623 = vadd.f32 %v3477, %v3622
  %v3624 = vpop.f32.mrf.mxu0
  %3625 = vmatprep.mubr.bf16.mxu0 0
  %3626 = vmatmul.mubr.bf16.gmra.mxu0 %v3537
  %v3627 = vpop.f32.mrf.mxu0
  %v3628 = vadd.f32 %v3482, %v3627
  %v3629 = vpop.f32.mrf.mxu0
  %v3630 = vpop.f32.mrf.mxu0
  %v3631 = vadd.f32 %v3485, %v3630
  %v3632 = vpop.f32.mrf.mxu0
  %3633 = vmatprep.mubr.bf16.mxu0 0
  %3634 = vmatmul.mubr.bf16.gmra.mxu0 %v3540
  %v3635 = vpop.f32.mrf.mxu0
  %v3636 = vadd.f32 %v3490, %v3635
  %v3637 = vpop.f32.mrf.mxu0
  %v3638 = vpop.f32.mrf.mxu0
  %v3639 = vpop.f32.mrf.mxu0
  %3640 = vdwg.mxu0
  %v3641 = vpack.c.bf16 %v3256, %v3253
  %v3642 = vpack.c.bf16 %v3264, %v3261
  %v3643 = vpack.c.bf16 %v3272, %v3269
  %v3644 = vpack.c.bf16 %v3280, %v3277
  %v3645 = vpack.c.bf16 %v3288, %v3285
  %v3646 = vpack.c.bf16 %v3296, %v3293
  %v3647 = vpack.c.bf16 %v3304, %v3301
  %v3648 = vpack.c.bf16 %v3309, %v3309
  %s3649 = scalar_lea.vmem %s5, 320
  %v3650 = vld [vmem:[%s3649] sm:$0xf]
  %v3651 = vld [vmem:[%s3649 + $0x4] sm:$0xf]
  %v3652 = vld [vmem:[%s3649 + $0x8] sm:$0xf]
  %v3653 = vld [vmem:[%s3649 + $0xc] sm:$0xf]
  %v3654 = vld [vmem:[%s3649 + $0x10] sm:$0xf]
  %v3655 = vld [vmem:[%s3649 + $0x14] sm:$0xf]
  %v3656 = vld [vmem:[%s3649 + $0x18] sm:$0xf]
  %v3657 = vld [vmem:[%s3649 + $0x1c] sm:$0x7]
  %v3666 = vunpack.c.l.b16 %v3650
  %v3667 = vunpack.c.l.b16 %v3651
  %v3668 = vunpack.c.l.b16 %v3652
  %v3669 = vunpack.c.l.b16 %v3653
  %v3670 = vunpack.c.l.b16 %v3654
  %v3671 = vunpack.c.l.b16 %v3655
  %v3672 = vunpack.c.l.b16 %v3656
  %v3673 = vunpack.c.l.b16 %v3657
  %v3674 = vpack.c.b16 %v3667, %v3666
  %v3675 = vpack.c.b16 %v3669, %v3668
  %v3676 = vpack.c.b16 %v3671, %v3670
  %v3677 = vpack.c.b16 %v3673, %v3672
  %v3682 = vsel %vm1694, %v3641, 0
  %v3685 = vsel %vm1694, %v3642, 0
  %v3688 = vsel %vm1694, %v3643, 0
  %v3691 = vsel %vm1694, %v3644, 0
  %v3694 = vsel %vm1694, %v3645, 0
  %v3697 = vsel %vm1694, %v3646, 0
  %v3700 = vsel %vm1694, %v3647, 0
  %v3703 = vsel %vm1694, %v3648, 0
  %v3706 = vsel %vm3395, %v3677, 0
  %3708 = vmatprep.subr.bf16.mxu0 0
  %3709 = vmatpush1.bf16.msra.mxu0 0
  %3710 = vmatprep.subr.bf16.mxu0 0
  %3711 = vmatpush1.bf16.msra.mxu0 0
  %3712 = vmatprep.subr.bf16.mxu0 0
  %3713 = vmatpush1.bf16.msra.mxu0 0
  %3714 = vmatprep.subr.bf16.mxu0 0
  %3715 = vmatpush1.bf16.msra.mxu0 0
  %3716 = vmatprep.subr.bf16.mxu0 0
  %3717 = vmatpush1.bf16.msra.mxu0 %v3706
  %3718 = vmatprep.subr.bf16.mxu0 0
  %3719 = vmatpush1.bf16.msra.mxu0 %v3676
  %3720 = vmatprep.subr.bf16.mxu0 0
  %3721 = vmatpush1.bf16.msra.mxu0 %v3675
  %3722 = vmatprep.subr.bf16.mxu0 0
  %3723 = vmatpush1.bf16.msra.mxu0 %v3674
  %3724 = vmatprep.subr.bf16.mxu0 0
  %3725 = vmatpush2.bf16.msra.mxu0 0
  %3726 = vmatprep.subr.bf16.mxu0 0
  %3727 = vmatpush2.bf16.msra.mxu0 0
  %3728 = vmatprep.subr.bf16.mxu0 0
  %3729 = vmatpush2.bf16.msra.mxu0 0
  %3730 = vmatprep.subr.bf16.mxu0 0
  %3731 = vmatpush2.bf16.msra.mxu0 0
  %3732 = vmatprep.subr.bf16.mxu0 0
  %3733 = vmatpush2.bf16.msra.mxu0 0
  %3734 = vmatprep.subr.bf16.mxu0 0
  %3735 = vmatpush2.bf16.msra.mxu0 0
  %3736 = vmatprep.subr.bf16.mxu0 0
  %3737 = vmatpush2.bf16.msra.mxu0 0
  %3738 = vmatprep.subr.bf16.mxu0 0
  %3739 = vmatpush2.bf16.msra.mxu0 0
  %3740 = vmatprep.mubr.bf16.mxu0 0
  %3741 = vmatmul.mubr.bf16.gmra.mxu0 %v3682
  %v3742 = vpop.f32.mrf.mxu0
  %v3743 = vadd.f32 0.0, %v3742
  %v3744 = vpop.f32.mrf.mxu0
  %v3745 = vpop.f32.mrf.mxu0
  %v3746 = vadd.f32 0.0, %v3745
  %v3747 = vpop.f32.mrf.mxu0
  %3748 = vmatprep.mubr.bf16.mxu0 0
  %3749 = vmatmul.mubr.bf16.gmra.mxu0 %v3685
  %v3750 = vpop.f32.mrf.mxu0
  %v3751 = vadd.f32 0.0, %v3750
  %v3752 = vpop.f32.mrf.mxu0
  %v3753 = vpop.f32.mrf.mxu0
  %v3754 = vadd.f32 0.0, %v3753
  %v3755 = vpop.f32.mrf.mxu0
  %3756 = vmatprep.mubr.bf16.mxu0 0
  %3757 = vmatmul.mubr.bf16.gmra.mxu0 %v3688
  %v3758 = vpop.f32.mrf.mxu0
  %v3759 = vadd.f32 0.0, %v3758
  %v3760 = vpop.f32.mrf.mxu0
  %v3761 = vpop.f32.mrf.mxu0
  %v3762 = vadd.f32 0.0, %v3761
  %v3763 = vpop.f32.mrf.mxu0
  %3764 = vmatprep.mubr.bf16.mxu0 0
  %3765 = vmatmul.mubr.bf16.gmra.mxu0 %v3691
  %v3766 = vpop.f32.mrf.mxu0
  %v3767 = vadd.f32 0.0, %v3766
  %v3768 = vpop.f32.mrf.mxu0
  %v3769 = vpop.f32.mrf.mxu0
  %v3770 = vadd.f32 0.0, %v3769
  %v3771 = vpop.f32.mrf.mxu0
  %3772 = vmatprep.mubr.bf16.mxu0 0
  %3773 = vmatmul.mubr.bf16.gmra.mxu0 %v3694
  %v3774 = vpop.f32.mrf.mxu0
  %v3775 = vadd.f32 0.0, %v3774
  %v3776 = vpop.f32.mrf.mxu0
  %v3777 = vpop.f32.mrf.mxu0
  %v3778 = vadd.f32 0.0, %v3777
  %v3779 = vpop.f32.mrf.mxu0
  %3780 = vmatprep.mubr.bf16.mxu0 0
  %3781 = vmatmul.mubr.bf16.gmra.mxu0 %v3697
  %v3782 = vpop.f32.mrf.mxu0
  %v3783 = vadd.f32 0.0, %v3782
  %v3784 = vpop.f32.mrf.mxu0
  %v3785 = vpop.f32.mrf.mxu0
  %v3786 = vadd.f32 0.0, %v3785
  %v3787 = vpop.f32.mrf.mxu0
  %3788 = vmatprep.mubr.bf16.mxu0 0
  %3789 = vmatmul.mubr.bf16.gmra.mxu0 %v3700
  %v3790 = vpop.f32.mrf.mxu0
  %v3791 = vadd.f32 0.0, %v3790
  %v3792 = vpop.f32.mrf.mxu0
  %v3793 = vpop.f32.mrf.mxu0
  %v3794 = vadd.f32 0.0, %v3793
  %v3795 = vpop.f32.mrf.mxu0
  %3796 = vmatprep.mubr.bf16.mxu0 0
  %3797 = vmatmul.mubr.bf16.gmra.mxu0 %v3703
  %v3798 = vpop.f32.mrf.mxu0
  %v3799 = vadd.f32 0.0, %v3798
  %v3800 = vpop.f32.mrf.mxu0
  %v3801 = vpop.f32.mrf.mxu0
  %v3802 = vpop.f32.mrf.mxu0
  %3803 = vdwg.mxu0
  %v3804 = vadd.f32 %v3580, %v3743
  %v3805 = vadd.f32 %v3583, %v3746
  %v3806 = vadd.f32 %v3588, %v3751
  %v3807 = vadd.f32 %v3591, %v3754
  %v3808 = vadd.f32 %v3596, %v3759
  %v3809 = vadd.f32 %v3599, %v3762
  %v3810 = vadd.f32 %v3604, %v3767
  %v3811 = vadd.f32 %v3607, %v3770
  %v3812 = vadd.f32 %v3612, %v3775
  %v3813 = vadd.f32 %v3615, %v3778
  %v3814 = vadd.f32 %v3620, %v3783
  %v3815 = vadd.f32 %v3623, %v3786
  %v3816 = vadd.f32 %v3628, %v3791
  %v3817 = vadd.f32 %v3631, %v3794
  %v3818 = vadd.f32 %v3636, %v3799
  %vm3819 = vcmask 244736
  %v3820 = vsel %vm3819, %v3804, 0.0
  %3821 = vadd.xlane.f32.xlu0 %v3820
  %v3822 = vpop.xlane.xlu0 %3821
  %v3823 = vsel %vm3819, %v3805, 0.0
  %3824 = vadd.xlane.f32.xlu0 %v3823
  %v3825 = vpop.xlane.xlu0 %3824
  %v3826 = vsel %vm3819, %v3806, 0.0
  %3827 = vadd.xlane.f32.xlu0 %v3826
  %v3828 = vpop.xlane.xlu0 %3827
  %v3829 = vsel %vm3819, %v3807, 0.0
  %3830 = vadd.xlane.f32.xlu0 %v3829
  %v3831 = vpop.xlane.xlu0 %3830
  %v3832 = vsel %vm3819, %v3808, 0.0
  %3833 = vadd.xlane.f32.xlu0 %v3832
  %v3834 = vpop.xlane.xlu0 %3833
  %v3835 = vsel %vm3819, %v3809, 0.0
  %3836 = vadd.xlane.f32.xlu0 %v3835
  %v3837 = vpop.xlane.xlu0 %3836
  %v3838 = vsel %vm3819, %v3810, 0.0
  %3839 = vadd.xlane.f32.xlu0 %v3838
  %v3840 = vpop.xlane.xlu0 %3839
  %v3841 = vsel %vm3819, %v3811, 0.0
  %3842 = vadd.xlane.f32.xlu0 %v3841
  %v3843 = vpop.xlane.xlu0 %3842
  %v3844 = vsel %vm3819, %v3812, 0.0
  %3845 = vadd.xlane.f32.xlu0 %v3844
  %v3846 = vpop.xlane.xlu0 %3845
  %v3847 = vsel %vm3819, %v3813, 0.0
  %3848 = vadd.xlane.f32.xlu0 %v3847
  %v3849 = vpop.xlane.xlu0 %3848
  %v3850 = vsel %vm3819, %v3814, 0.0
  %3851 = vadd.xlane.f32.xlu0 %v3850
  %v3852 = vpop.xlane.xlu0 %3851
  %v3853 = vsel %vm3819, %v3815, 0.0
  %3854 = vadd.xlane.f32.xlu0 %v3853
  %v3855 = vpop.xlane.xlu0 %3854
  %v3856 = vsel %vm3819, %v3816, 0.0
  %3857 = vadd.xlane.f32.xlu0 %v3856
  %v3858 = vpop.xlane.xlu0 %3857
  %v3859 = vsel %vm3819, %v3817, 0.0
  %3860 = vadd.xlane.f32.xlu0 %v3859
  %v3861 = vpop.xlane.xlu0 %3860
  %v3862 = vsel %vm3819, %v3818, 0.0
  %3863 = vadd.xlane.f32.xlu0 %v3862
  %v3864 = vpop.xlane.xlu0 %3863
  %v3865 = vmul.f32 %v3804, %v3804
  %v3866 = vmul.f32 %v3805, %v3805
  %v3867 = vmul.f32 %v3806, %v3806
  %v3868 = vmul.f32 %v3807, %v3807
  %v3869 = vmul.f32 %v3808, %v3808
  %v3870 = vmul.f32 %v3809, %v3809
  %v3871 = vmul.f32 %v3810, %v3810
  %v3872 = vmul.f32 %v3811, %v3811
  %v3873 = vmul.f32 %v3812, %v3812
  %v3874 = vmul.f32 %v3813, %v3813
  %v3875 = vmul.f32 %v3814, %v3814
  %v3876 = vmul.f32 %v3815, %v3815
  %v3877 = vmul.f32 %v3816, %v3816
  %v3878 = vmul.f32 %v3817, %v3817
  %v3879 = vmul.f32 %v3818, %v3818
  %v3880 = vsel %vm3819, %v3865, 0.0
  %3881 = vadd.xlane.f32.xlu0 %v3880
  %v3882 = vpop.xlane.xlu0 %3881
  %v3883 = vsel %vm3819, %v3866, 0.0
  %3884 = vadd.xlane.f32.xlu0 %v3883
  %v3885 = vpop.xlane.xlu0 %3884
  %v3886 = vsel %vm3819, %v3867, 0.0
  %3887 = vadd.xlane.f32.xlu0 %v3886
  %v3888 = vpop.xlane.xlu0 %3887
  %v3889 = vsel %vm3819, %v3868, 0.0
  %3890 = vadd.xlane.f32.xlu0 %v3889
  %v3891 = vpop.xlane.xlu0 %3890
  %v3892 = vsel %vm3819, %v3869, 0.0
  %3893 = vadd.xlane.f32.xlu0 %v3892
  %v3894 = vpop.xlane.xlu0 %3893
  %v3895 = vsel %vm3819, %v3870, 0.0
  %3896 = vadd.xlane.f32.xlu0 %v3895
  %v3897 = vpop.xlane.xlu0 %3896
  %v3898 = vsel %vm3819, %v3871, 0.0
  %3899 = vadd.xlane.f32.xlu0 %v3898
  %v3900 = vpop.xlane.xlu0 %3899
  %v3901 = vsel %vm3819, %v3872, 0.0
  %3902 = vadd.xlane.f32.xlu0 %v3901
  %v3903 = vpop.xlane.xlu0 %3902
  %v3904 = vsel %vm3819, %v3873, 0.0
  %3905 = vadd.xlane.f32.xlu0 %v3904
  %v3906 = vpop.xlane.xlu0 %3905
  %v3907 = vsel %vm3819, %v3874, 0.0
  %3908 = vadd.xlane.f32.xlu0 %v3907
  %v3909 = vpop.xlane.xlu0 %3908
  %v3910 = vsel %vm3819, %v3875, 0.0
  %3911 = vadd.xlane.f32.xlu0 %v3910
  %v3912 = vpop.xlane.xlu0 %3911
  %v3913 = vsel %vm3819, %v3876, 0.0
  %3914 = vadd.xlane.f32.xlu0 %v3913
  %v3915 = vpop.xlane.xlu0 %3914
  %v3916 = vsel %vm3819, %v3877, 0.0
  %3917 = vadd.xlane.f32.xlu0 %v3916
  %v3918 = vpop.xlane.xlu0 %3917
  %v3919 = vsel %vm3819, %v3878, 0.0
  %3920 = vadd.xlane.f32.xlu0 %v3919
  %v3921 = vpop.xlane.xlu0 %3920
  %v3922 = vsel %vm3819, %v3879, 0.0
  %3923 = vadd.xlane.f32.xlu0 %v3922
  %v3924 = vpop.xlane.xlu0 %3923
  %v3925 = vsel %vm1912, %v3822, %v3882
  %v3926 = vsel %vm1912, %v3825, %v3885
  %v3927 = vsel %vm1912, %v3828, %v3888
  %v3928 = vsel %vm1912, %v3831, %v3891
  %v3929 = vsel %vm1912, %v3834, %v3894
  %v3930 = vsel %vm1912, %v3837, %v3897
  %v3931 = vsel %vm1912, %v3840, %v3900
  %v3932 = vsel %vm1912, %v3843, %v3903
  %v3933 = vsel %vm1912, %v3846, %v3906
  %v3934 = vsel %vm1912, %v3849, %v3909
  %v3935 = vsel %vm1912, %v3852, %v3912
  %v3936 = vsel %vm1912, %v3855, %v3915
  %v3937 = vsel %vm1912, %v3858, %v3918
  %v3938 = vsel %vm1912, %v3861, %v3921
  %v3939 = vsel %vm1912, %v3864, %v3924
  %v3940 = vld [vmem:[%s7] sm:$0xff]
  %v3942 = vsel %vm1946, %v3940, 0
  %3944 = vmatprep.subr.mxu0 0.0
  %3945 = vmatpush1.msra.mxu0 0.0
  %3946 = vmatprep.subr.mxu0 0.0
  %3947 = vmatpush1.msra.mxu0 %v3939
  %3948 = vmatprep.subr.mxu0 0.0
  %3949 = vmatpush1.msra.mxu0 %v3938
  %3950 = vmatprep.subr.mxu0 0.0
  %3951 = vmatpush1.msra.mxu0 %v3937
  %3952 = vmatprep.subr.mxu0 0.0
  %3953 = vmatpush1.msra.mxu0 %v3936
  %3954 = vmatprep.subr.mxu0 0.0
  %3955 = vmatpush1.msra.mxu0 %v3935
  %3956 = vmatprep.subr.mxu0 0.0
  %3957 = vmatpush1.msra.mxu0 %v3934
  %3958 = vmatprep.subr.mxu0 0.0
  %3959 = vmatpush1.msra.mxu0 %v3933
  %3960 = vmatprep.subr.mxu0 0.0
  %3961 = vmatpush1.msra.mxu0 %v3932
  %3962 = vmatprep.subr.mxu0 0.0
  %3963 = vmatpush1.msra.mxu0 %v3931
  %3964 = vmatprep.subr.mxu0 0.0
  %3965 = vmatpush1.msra.mxu0 %v3930
  %3966 = vmatprep.subr.mxu0 0.0
  %3967 = vmatpush1.msra.mxu0 %v3929
  %3968 = vmatprep.subr.mxu0 0.0
  %3969 = vmatpush1.msra.mxu0 %v3928
  %3970 = vmatprep.subr.mxu0 0.0
  %3971 = vmatpush1.msra.mxu0 %v3927
  %3972 = vmatprep.subr.mxu0 0.0
  %3973 = vmatpush1.msra.mxu0 %v3926
  %3974 = vmatprep.subr.mxu0 0.0
  %3975 = vmatpush1.msra.mxu0 %v3925
  %3976 = vmatprep.subr.mxu0 0.0
  %3977 = vmatpush2.msra.mxu0 0.0
  %3978 = vmatprep.subr.mxu0 0.0
  %3979 = vmatpush2.msra.mxu0 0.0
  %3980 = vmatprep.subr.mxu0 0.0
  %3981 = vmatpush2.msra.mxu0 0.0
  %3982 = vmatprep.subr.mxu0 0.0
  %3983 = vmatpush2.msra.mxu0 0.0
  %3984 = vmatprep.subr.mxu0 0.0
  %3985 = vmatpush2.msra.mxu0 0.0
  %3986 = vmatprep.subr.mxu0 0.0
  %3987 = vmatpush2.msra.mxu0 0.0
  %3988 = vmatprep.subr.mxu0 0.0
  %3989 = vmatpush2.msra.mxu0 0.0
  %3990 = vmatprep.subr.mxu0 0.0
  %3991 = vmatpush2.msra.mxu0 0.0
  %3992 = vmatprep.subr.mxu0 0.0
  %3993 = vmatpush2.msra.mxu0 0.0
  %3994 = vmatprep.subr.mxu0 0.0
  %3995 = vmatpush2.msra.mxu0 0.0
  %3996 = vmatprep.subr.mxu0 0.0
  %3997 = vmatpush2.msra.mxu0 0.0
  %3998 = vmatprep.subr.mxu0 0.0
  %3999 = vmatpush2.msra.mxu0 0.0
  %4000 = vmatprep.subr.mxu0 0.0
  %4001 = vmatpush2.msra.mxu0 0.0
  %4002 = vmatprep.subr.mxu0 0.0
  %4003 = vmatpush2.msra.mxu0 0.0
  %4004 = vmatprep.subr.mxu0 0.0
  %4005 = vmatpush2.msra.mxu0 0.0
  %4006 = vmatprep.subr.mxu0 0.0
  %4007 = vmatpush2.msra.mxu0 0.0
  %4008 = vmatprep.mubr.f32.mxu0 0.0
  %4009 = vmatmul.mubr.f32.gmra.mxu0 %v3942
  %v4010 = vpop.f32.mrf.mxu0
  %v4011 = vadd.f32 0.0, %v4010
  %v4012 = vpop.f32.mrf.mxu0
  %4013 = vdwg.mxu0
  %v4014 = vmul.f32 %v4011, 0.0022222223
  %v4015 = vmul.f32 %v4014, %v4014
  %4017 = vrot.lane.b32.xlu0 %v4015, 1
  %v4018 = vpop.permute.xlu0 %4017
  %v4020 = vsub.f32 %v4014, %v4018
  %v4021 = vmax.f32 %v4020, 0.0
  %s4022 = scalar_lea.vmem %s8, 8
  %v4023 = vld [vmem:[%s4022] sm:$0xff]
  %v4024 = vadd.f32 %v4021, 1e-05
  %v4025 = vrsqrt.pop %v4024
  %4027 = vrot.lane.b32.xlu0 %v4025, 127
  %v4028 = vpop.permute.xlu0 %4027
  %v4030 = vmul.f32 %v4023, %v4028
  %v4031 = vmul.f32 %v4014, %v4030
  %4033 = vrot.lane.b32.xlu0 %v4031, 1
  %v4034 = vpop.permute.xlu0 %4033
  %v4036 = vsub.f32 %v4023, %v4034
  %v4037 = vsel %vm1912, %v4030, %v4036
  %v4038 = vld [vmem:[%s6] sm:$0xff]
  %v4039 = vld [vmem:[%s6 + $0x8] sm:$0xff]
  %v4040 = vld [vmem:[%s6 + $0x10] sm:$0xff]
  %v4041 = vld [vmem:[%s6 + $0x18] sm:$0xff]
  %v4042 = vld [vmem:[%s6 + $0x20] sm:$0xff]
  %v4043 = vld [vmem:[%s6 + $0x28] sm:$0xff]
  %v4044 = vld [vmem:[%s6 + $0x30] sm:$0xff]
  %v4045 = vld [vmem:[%s6 + $0x38] sm:$0xff]
  %v4046 = vld [vmem:[%s6 + $0x40] sm:$0xff]
  %v4047 = vld [vmem:[%s6 + $0x48] sm:$0xff]
  %v4048 = vld [vmem:[%s6 + $0x50] sm:$0xff]
  %v4049 = vld [vmem:[%s6 + $0x58] sm:$0xff]
  %v4050 = vld [vmem:[%s6 + $0x60] sm:$0xff]
  %v4051 = vld [vmem:[%s6 + $0x68] sm:$0xff]
  %v4052 = vld [vmem:[%s6 + $0x70] sm:$0xff]
  %v4054 = vsel %vm2074, %v4038, 0
  %v4057 = vsel %vm2074, %v4039, 0
  %v4060 = vsel %vm2074, %v4040, 0
  %v4063 = vsel %vm2074, %v4041, 0
  %v4066 = vsel %vm2074, %v4042, 0
  %v4069 = vsel %vm2074, %v4043, 0
  %v4072 = vsel %vm2074, %v4044, 0
  %v4075 = vsel %vm2074, %v4045, 0
  %v4078 = vsel %vm2074, %v4046, 0
  %v4081 = vsel %vm2074, %v4047, 0
  %v4084 = vsel %vm2074, %v4048, 0
  %v4087 = vsel %vm2074, %v4049, 0
  %v4090 = vsel %vm2074, %v4050, 0
  %v4093 = vsel %vm2074, %v4051, 0
  %v4096 = vsel %vm2074, %v4052, 0
  %4098 = vmatprep.subr.mxu0 0.0
  %4099 = vmatpush1.msra.mxu0 0.0
  %4100 = vmatprep.subr.mxu0 0.0
  %4101 = vmatpush1.msra.mxu0 0.0
  %4102 = vmatprep.subr.mxu0 0.0
  %4103 = vmatpush1.msra.mxu0 0.0
  %4104 = vmatprep.subr.mxu0 0.0
  %4105 = vmatpush1.msra.mxu0 0.0
  %4106 = vmatprep.subr.mxu0 0.0
  %4107 = vmatpush1.msra.mxu0 0.0
  %4108 = vmatprep.subr.mxu0 0.0
  %4109 = vmatpush1.msra.mxu0 0.0
  %4110 = vmatprep.subr.mxu0 0.0
  %4111 = vmatpush1.msra.mxu0 0.0
  %4112 = vmatprep.subr.mxu0 0.0
  %4113 = vmatpush1.msra.mxu0 0.0
  %4114 = vmatprep.subr.mxu0 0.0
  %4115 = vmatpush1.msra.mxu0 0.0
  %4116 = vmatprep.subr.mxu0 0.0
  %4117 = vmatpush1.msra.mxu0 0.0
  %4118 = vmatprep.subr.mxu0 0.0
  %4119 = vmatpush1.msra.mxu0 0.0
  %4120 = vmatprep.subr.mxu0 0.0
  %4121 = vmatpush1.msra.mxu0 0.0
  %4122 = vmatprep.subr.mxu0 0.0
  %4123 = vmatpush1.msra.mxu0 0.0
  %4124 = vmatprep.subr.mxu0 0.0
  %4125 = vmatpush1.msra.mxu0 0.0
  %4126 = vmatprep.subr.mxu0 0.0
  %4127 = vmatpush1.msra.mxu0 0.0
  %4128 = vmatprep.subr.mxu0 0.0
  %4129 = vmatpush1.msra.mxu0 %v4037
  %4130 = vmatprep.subr.mxu0 0.0
  %4131 = vmatpush2.msra.mxu0 0.0
  %4132 = vmatprep.subr.mxu0 0.0
  %4133 = vmatpush2.msra.mxu0 0.0
  %4134 = vmatprep.subr.mxu0 0.0
  %4135 = vmatpush2.msra.mxu0 0.0
  %4136 = vmatprep.subr.mxu0 0.0
  %4137 = vmatpush2.msra.mxu0 0.0
  %4138 = vmatprep.subr.mxu0 0.0
  %4139 = vmatpush2.msra.mxu0 0.0
  %4140 = vmatprep.subr.mxu0 0.0
  %4141 = vmatpush2.msra.mxu0 0.0
  %4142 = vmatprep.subr.mxu0 0.0
  %4143 = vmatpush2.msra.mxu0 0.0
  %4144 = vmatprep.subr.mxu0 0.0
  %4145 = vmatpush2.msra.mxu0 0.0
  %4146 = vmatprep.subr.mxu0 0.0
  %4147 = vmatpush2.msra.mxu0 0.0
  %4148 = vmatprep.subr.mxu0 0.0
  %4149 = vmatpush2.msra.mxu0 0.0
  %4150 = vmatprep.subr.mxu0 0.0
  %4151 = vmatpush2.msra.mxu0 0.0
  %4152 = vmatprep.subr.mxu0 0.0
  %4153 = vmatpush2.msra.mxu0 0.0
  %4154 = vmatprep.subr.mxu0 0.0
  %4155 = vmatpush2.msra.mxu0 0.0
  %4156 = vmatprep.subr.mxu0 0.0
  %4157 = vmatpush2.msra.mxu0 0.0
  %4158 = vmatprep.subr.mxu0 0.0
  %4159 = vmatpush2.msra.mxu0 0.0
  %4160 = vmatprep.subr.mxu0 0.0
  %4161 = vmatpush2.msra.mxu0 0.0
  %4162 = vmatprep.mubr.f32.mxu0 0.0
  %4163 = vmatmul.mubr.f32.gmra.mxu0 %v4054
  %v4164 = vpop.f32.mrf.mxu0
  %v4165 = vadd.f32 0.0, %v4164
  %v4166 = vpop.f32.mrf.mxu0
  %4167 = vmatprep.mubr.f32.mxu0 0.0
  %4168 = vmatmul.mubr.f32.gmra.mxu0 %v4057
  %v4169 = vpop.f32.mrf.mxu0
  %v4170 = vadd.f32 0.0, %v4169
  %v4171 = vpop.f32.mrf.mxu0
  %4172 = vmatprep.mubr.f32.mxu0 0.0
  %4173 = vmatmul.mubr.f32.gmra.mxu0 %v4060
  %v4174 = vpop.f32.mrf.mxu0
  %v4175 = vadd.f32 0.0, %v4174
  %v4176 = vpop.f32.mrf.mxu0
  %4177 = vmatprep.mubr.f32.mxu0 0.0
  %4178 = vmatmul.mubr.f32.gmra.mxu0 %v4063
  %v4179 = vpop.f32.mrf.mxu0
  %v4180 = vadd.f32 0.0, %v4179
  %v4181 = vpop.f32.mrf.mxu0
  %4182 = vmatprep.mubr.f32.mxu0 0.0
  %4183 = vmatmul.mubr.f32.gmra.mxu0 %v4066
  %v4184 = vpop.f32.mrf.mxu0
  %v4185 = vadd.f32 0.0, %v4184
  %v4186 = vpop.f32.mrf.mxu0
  %4187 = vmatprep.mubr.f32.mxu0 0.0
  %4188 = vmatmul.mubr.f32.gmra.mxu0 %v4069
  %v4189 = vpop.f32.mrf.mxu0
  %v4190 = vadd.f32 0.0, %v4189
  %v4191 = vpop.f32.mrf.mxu0
  %4192 = vmatprep.mubr.f32.mxu0 0.0
  %4193 = vmatmul.mubr.f32.gmra.mxu0 %v4072
  %v4194 = vpop.f32.mrf.mxu0
  %v4195 = vadd.f32 0.0, %v4194
  %v4196 = vpop.f32.mrf.mxu0
  %4197 = vmatprep.mubr.f32.mxu0 0.0
  %4198 = vmatmul.mubr.f32.gmra.mxu0 %v4075
  %v4199 = vpop.f32.mrf.mxu0
  %v4200 = vadd.f32 0.0, %v4199
  %v4201 = vpop.f32.mrf.mxu0
  %4202 = vmatprep.mubr.f32.mxu0 0.0
  %4203 = vmatmul.mubr.f32.gmra.mxu0 %v4078
  %v4204 = vpop.f32.mrf.mxu0
  %v4205 = vadd.f32 0.0, %v4204
  %v4206 = vpop.f32.mrf.mxu0
  %4207 = vmatprep.mubr.f32.mxu0 0.0
  %4208 = vmatmul.mubr.f32.gmra.mxu0 %v4081
  %v4209 = vpop.f32.mrf.mxu0
  %v4210 = vadd.f32 0.0, %v4209
  %v4211 = vpop.f32.mrf.mxu0
  %4212 = vmatprep.mubr.f32.mxu0 0.0
  %4213 = vmatmul.mubr.f32.gmra.mxu0 %v4084
  %v4214 = vpop.f32.mrf.mxu0
  %v4215 = vadd.f32 0.0, %v4214
  %v4216 = vpop.f32.mrf.mxu0
  %4217 = vmatprep.mubr.f32.mxu0 0.0
  %4218 = vmatmul.mubr.f32.gmra.mxu0 %v4087
  %v4219 = vpop.f32.mrf.mxu0
  %v4220 = vadd.f32 0.0, %v4219
  %v4221 = vpop.f32.mrf.mxu0
  %4222 = vmatprep.mubr.f32.mxu0 0.0
  %4223 = vmatmul.mubr.f32.gmra.mxu0 %v4090
  %v4224 = vpop.f32.mrf.mxu0
  %v4225 = vadd.f32 0.0, %v4224
  %v4226 = vpop.f32.mrf.mxu0
  %4227 = vmatprep.mubr.f32.mxu0 0.0
  %4228 = vmatmul.mubr.f32.gmra.mxu0 %v4093
  %v4229 = vpop.f32.mrf.mxu0
  %v4230 = vadd.f32 0.0, %v4229
  %v4231 = vpop.f32.mrf.mxu0
  %4232 = vmatprep.mubr.f32.mxu0 0.0
  %4233 = vmatmul.mubr.f32.gmra.mxu0 %v4096
  %v4234 = vpop.f32.mrf.mxu0
  %v4235 = vadd.f32 0.0, %v4234
  %v4236 = vpop.f32.mrf.mxu0
  %4237 = vdwg.mxu0
  %4239 = vset.pattern.permute.xlu0 0
  %4240 = vperm.xlu0 %4239, %v4165
  %v4241 = vpop.permute.xlu0 %4240
  %4244 = vset.pattern.permute.xlu0 0
  %4245 = vperm.xlu0 %4244, %v4170
  %v4246 = vpop.permute.xlu0 %4245
  %4249 = vset.pattern.permute.xlu0 0
  %4250 = vperm.xlu0 %4249, %v4175
  %v4251 = vpop.permute.xlu0 %4250
  %4254 = vset.pattern.permute.xlu0 0
  %4255 = vperm.xlu0 %4254, %v4180
  %v4256 = vpop.permute.xlu0 %4255
  %4259 = vset.pattern.permute.xlu0 0
  %4260 = vperm.xlu0 %4259, %v4185
  %v4261 = vpop.permute.xlu0 %4260
  %4264 = vset.pattern.permute.xlu0 0
  %4265 = vperm.xlu0 %4264, %v4190
  %v4266 = vpop.permute.xlu0 %4265
  %4269 = vset.pattern.permute.xlu0 0
  %4270 = vperm.xlu0 %4269, %v4195
  %v4271 = vpop.permute.xlu0 %4270
  %4274 = vset.pattern.permute.xlu0 0
  %4275 = vperm.xlu0 %4274, %v4200
  %v4276 = vpop.permute.xlu0 %4275
  %4279 = vset.pattern.permute.xlu0 0
  %4280 = vperm.xlu0 %4279, %v4205
  %v4281 = vpop.permute.xlu0 %4280
  %4284 = vset.pattern.permute.xlu0 0
  %4285 = vperm.xlu0 %4284, %v4210
  %v4286 = vpop.permute.xlu0 %4285
  %4289 = vset.pattern.permute.xlu0 0
  %4290 = vperm.xlu0 %4289, %v4215
  %v4291 = vpop.permute.xlu0 %4290
  %4294 = vset.pattern.permute.xlu0 0
  %4295 = vperm.xlu0 %4294, %v4220
  %v4296 = vpop.permute.xlu0 %4295
  %4299 = vset.pattern.permute.xlu0 0
  %4300 = vperm.xlu0 %4299, %v4225
  %v4301 = vpop.permute.xlu0 %4300
  %4304 = vset.pattern.permute.xlu0 0
  %4305 = vperm.xlu0 %4304, %v4230
  %v4306 = vpop.permute.xlu0 %4305
  %4309 = vset.pattern.permute.xlu0 0
  %4310 = vperm.xlu0 %4309, %v4235
  %v4311 = vpop.permute.xlu0 %4310
  %v4313 = vmul.f32 %v3804, %v4241
  %v4314 = vmul.f32 %v3805, %v4246
  %v4315 = vmul.f32 %v3806, %v4251
  %v4316 = vmul.f32 %v3807, %v4256
  %v4317 = vmul.f32 %v3808, %v4261
  %v4318 = vmul.f32 %v3809, %v4266
  %v4319 = vmul.f32 %v3810, %v4271
  %v4320 = vmul.f32 %v3811, %v4276
  %v4321 = vmul.f32 %v3812, %v4281
  %v4322 = vmul.f32 %v3813, %v4286
  %v4323 = vmul.f32 %v3814, %v4291
  %v4324 = vmul.f32 %v3815, %v4296
  %v4325 = vmul.f32 %v3816, %v4301
  %v4326 = vmul.f32 %v3817, %v4306
  %v4327 = vmul.f32 %v3818, %v4311
  %4328 = vset.pattern.permute.xlu0 1
  %4329 = vperm.xlu0 %4328, %v4165
  %v4330 = vpop.permute.xlu0 %4329
  %4332 = vset.pattern.permute.xlu0 1
  %4333 = vperm.xlu0 %4332, %v4170
  %v4334 = vpop.permute.xlu0 %4333
  %4336 = vset.pattern.permute.xlu0 1
  %4337 = vperm.xlu0 %4336, %v4175
  %v4338 = vpop.permute.xlu0 %4337
  %4340 = vset.pattern.permute.xlu0 1
  %4341 = vperm.xlu0 %4340, %v4180
  %v4342 = vpop.permute.xlu0 %4341
  %4344 = vset.pattern.permute.xlu0 1
  %4345 = vperm.xlu0 %4344, %v4185
  %v4346 = vpop.permute.xlu0 %4345
  %4348 = vset.pattern.permute.xlu0 1
  %4349 = vperm.xlu0 %4348, %v4190
  %v4350 = vpop.permute.xlu0 %4349
  %4352 = vset.pattern.permute.xlu0 1
  %4353 = vperm.xlu0 %4352, %v4195
  %v4354 = vpop.permute.xlu0 %4353
  %4356 = vset.pattern.permute.xlu0 1
  %4357 = vperm.xlu0 %4356, %v4200
  %v4358 = vpop.permute.xlu0 %4357
  %4360 = vset.pattern.permute.xlu0 1
  %4361 = vperm.xlu0 %4360, %v4205
  %v4362 = vpop.permute.xlu0 %4361
  %4364 = vset.pattern.permute.xlu0 1
  %4365 = vperm.xlu0 %4364, %v4210
  %v4366 = vpop.permute.xlu0 %4365
  %4368 = vset.pattern.permute.xlu0 1
  %4369 = vperm.xlu0 %4368, %v4215
  %v4370 = vpop.permute.xlu0 %4369
  %4372 = vset.pattern.permute.xlu0 1
  %4373 = vperm.xlu0 %4372, %v4220
  %v4374 = vpop.permute.xlu0 %4373
  %4376 = vset.pattern.permute.xlu0 1
  %4377 = vperm.xlu0 %4376, %v4225
  %v4378 = vpop.permute.xlu0 %4377
  %4380 = vset.pattern.permute.xlu0 1
  %4381 = vperm.xlu0 %4380, %v4230
  %v4382 = vpop.permute.xlu0 %4381
  %4384 = vset.pattern.permute.xlu0 1
  %4385 = vperm.xlu0 %4384, %v4235
  %v4386 = vpop.permute.xlu0 %4385
  %v4388 = vadd.f32 %v4313, %v4330
  %v4389 = vadd.f32 %v4314, %v4334
  %v4390 = vadd.f32 %v4315, %v4338
  %v4391 = vadd.f32 %v4316, %v4342
  %v4392 = vadd.f32 %v4317, %v4346
  %v4393 = vadd.f32 %v4318, %v4350
  %v4394 = vadd.f32 %v4319, %v4354
  %v4395 = vadd.f32 %v4320, %v4358
  %v4396 = vadd.f32 %v4321, %v4362
  %v4397 = vadd.f32 %v4322, %v4366
  %v4398 = vadd.f32 %v4323, %v4370
  %v4399 = vadd.f32 %v4324, %v4374
  %v4400 = vadd.f32 %v4325, %v4378
  %v4401 = vadd.f32 %v4326, %v4382
  %v4402 = vadd.f32 %v4327, %v4386
  %v4403 = vmax.f32 %v4388, 0.0
  %v4404 = vmax.f32 %v4389, 0.0
  %v4405 = vmax.f32 %v4390, 0.0
  %v4406 = vmax.f32 %v4391, 0.0
  %v4407 = vmax.f32 %v4392, 0.0
  %v4408 = vmax.f32 %v4393, 0.0
  %v4409 = vmax.f32 %v4394, 0.0
  %v4410 = vmax.f32 %v4395, 0.0
  %v4411 = vmax.f32 %v4396, 0.0
  %v4412 = vmax.f32 %v4397, 0.0
  %v4413 = vmax.f32 %v4398, 0.0
  %v4414 = vmax.f32 %v4399, 0.0
  %v4415 = vmax.f32 %v4400, 0.0
  %v4416 = vmax.f32 %v4401, 0.0
  %v4417 = vmax.f32 %v4402, 0.0
  %v4418 = vld [vmem:[%s3] sm:$0xf]
  %v4419 = vld [vmem:[%s3 + $0x4] sm:$0xf]
  %v4420 = vld [vmem:[%s3 + $0x8] sm:$0xf]
  %v4421 = vld [vmem:[%s3 + $0xc] sm:$0xf]
  %v4422 = vld [vmem:[%s3 + $0x10] sm:$0xf]
  %v4423 = vld [vmem:[%s3 + $0x14] sm:$0xf]
  %v4424 = vld [vmem:[%s3 + $0x18] sm:$0xf]
  %v4425 = vld [vmem:[%s3 + $0x1c] sm:$0xf]
  %v4426 = vld [vmem:[%s3 + $0x20] sm:$0xf]
  %v4427 = vld [vmem:[%s3 + $0x24] sm:$0xf]
  %v4428 = vld [vmem:[%s3 + $0x28] sm:$0xf]
  %v4429 = vld [vmem:[%s3 + $0x2c] sm:$0xf]
  %v4430 = vld [vmem:[%s3 + $0x30] sm:$0xf]
  %v4431 = vld [vmem:[%s3 + $0x34] sm:$0xf]
  %v4432 = vld [vmem:[%s3 + $0x38] sm:$0xf]
  %v4433 = vld [vmem:[%s3 + $0x3c] sm:$0xf]
  %v4434 = vld [vmem:[%s3 + $0x40] sm:$0xf]
  %v4435 = vld [vmem:[%s3 + $0x44] sm:$0xf]
  %v4436 = vld [vmem:[%s3 + $0x48] sm:$0xf]
  %v4437 = vld [vmem:[%s3 + $0x4c] sm:$0xf]
  %v4438 = vld [vmem:[%s3 + $0x50] sm:$0xf]
  %v4439 = vpack.c.bf16 %v4404, %v4403
  %v4440 = vpack.c.bf16 %v4406, %v4405
  %v4441 = vpack.c.bf16 %v4408, %v4407
  %v4442 = vpack.c.bf16 %v4410, %v4409
  %v4443 = vpack.c.bf16 %v4412, %v4411
  %v4444 = vpack.c.bf16 %v4414, %v4413
  %v4445 = vpack.c.bf16 %v4416, %v4415
  %v4446 = vpack.c.bf16 %v4417, %v4417
  %v4468 = vunpack.c.l.b16 %v4418
  %v4469 = vunpack.c.l.b16 %v4419
  %v4470 = vunpack.c.l.b16 %v4420
  %v4471 = vunpack.c.l.b16 %v4421
  %v4472 = vunpack.c.l.b16 %v4422
  %v4473 = vunpack.c.l.b16 %v4423
  %v4474 = vunpack.c.l.b16 %v4424
  %v4475 = vunpack.c.l.b16 %v4425
  %v4476 = vunpack.c.l.b16 %v4426
  %v4477 = vunpack.c.l.b16 %v4427
  %v4478 = vunpack.c.l.b16 %v4428
  %v4479 = vunpack.c.l.b16 %v4429
  %v4480 = vunpack.c.l.b16 %v4430
  %v4481 = vunpack.c.l.b16 %v4431
  %v4482 = vunpack.c.l.b16 %v4432
  %v4483 = vunpack.c.l.b16 %v4433
  %v4484 = vunpack.c.l.b16 %v4434
  %v4485 = vunpack.c.l.b16 %v4435
  %v4486 = vunpack.c.l.b16 %v4436
  %v4487 = vunpack.c.l.b16 %v4437
  %v4488 = vunpack.c.l.b16 %v4438
  %v4489 = vpack.c.b16 %v4469, %v4468
  %v4490 = vpack.c.b16 %v4471, %v4470
  %v4491 = vpack.c.b16 %v4473, %v4472
  %v4492 = vpack.c.b16 %v4475, %v4474
  %v4493 = vpack.c.b16 %v4477, %v4476
  %v4494 = vpack.c.b16 %v4479, %v4478
  %v4495 = vpack.c.b16 %v4481, %v4480
  %v4496 = vpack.c.b16 %v4483, %v4482
  %v4497 = vpack.c.b16 %v4485, %v4484
  %v4498 = vpack.c.b16 %v4487, %v4486
  %v4499 = vpack.c.b16 %v4488, %v4488
  %v4501 = vsel %vm1946, %v4489, 0
  %v4504 = vsel %vm1946, %v4490, 0
  %v4507 = vsel %vm1946, %v4491, 0
  %v4510 = vsel %vm1946, %v4492, 0
  %v4513 = vsel %vm1946, %v4493, 0
  %v4516 = vsel %vm1946, %v4494, 0
  %v4519 = vsel %vm1946, %v4495, 0
  %v4522 = vsel %vm1946, %v4496, 0
  %v4525 = vsel %vm1946, %v4497, 0
  %v4528 = vsel %vm1946, %v4498, 0
  %v4531 = vsel %vm1946, %v4499, 0
  %v4534 = vsel %vm3094, %v4446, 0
  %4536 = vmatprep.subr.bf16.mxu0 0
  %4537 = vmatpush1.bf16.msra.mxu0 %v4534
  %4538 = vmatprep.subr.bf16.mxu0 0
  %4539 = vmatpush1.bf16.msra.mxu0 %v4445
  %4540 = vmatprep.subr.bf16.mxu0 0
  %4541 = vmatpush1.bf16.msra.mxu0 %v4444
  %4542 = vmatprep.subr.bf16.mxu0 0
  %4543 = vmatpush1.bf16.msra.mxu0 %v4443
  %4544 = vmatprep.subr.bf16.mxu0 0
  %4545 = vmatpush1.bf16.msra.mxu0 %v4442
  %4546 = vmatprep.subr.bf16.mxu0 0
  %4547 = vmatpush1.bf16.msra.mxu0 %v4441
  %4548 = vmatprep.subr.bf16.mxu0 0
  %4549 = vmatpush1.bf16.msra.mxu0 %v4440
  %4550 = vmatprep.subr.bf16.mxu0 0
  %4551 = vmatpush1.bf16.msra.mxu0 %v4439
  %4552 = vmatprep.subr.bf16.mxu0 0
  %4553 = vmatpush2.bf16.msra.mxu0 0
  %4554 = vmatprep.subr.bf16.mxu0 0
  %4555 = vmatpush2.bf16.msra.mxu0 0
  %4556 = vmatprep.subr.bf16.mxu0 0
  %4557 = vmatpush2.bf16.msra.mxu0 0
  %4558 = vmatprep.subr.bf16.mxu0 0
  %4559 = vmatpush2.bf16.msra.mxu0 0
  %4560 = vmatprep.subr.bf16.mxu0 0
  %4561 = vmatpush2.bf16.msra.mxu0 0
  %4562 = vmatprep.subr.bf16.mxu0 0
  %4563 = vmatpush2.bf16.msra.mxu0 0
  %4564 = vmatprep.subr.bf16.mxu0 0
  %4565 = vmatpush2.bf16.msra.mxu0 0
  %4566 = vmatprep.subr.bf16.mxu0 0
  %4567 = vmatpush2.bf16.msra.mxu0 0
  %4568 = vmatprep.mubr.bf16.mxu0 0
  %4569 = vmatmul.mubr.bf16.gmra.mxu0 %v4501
  %v4570 = vpop.f32.mrf.mxu0
  %v4571 = vadd.f32 0.0, %v4570
  %v4572 = vpop.f32.mrf.mxu0
  %v4573 = vpop.f32.mrf.mxu0
  %v4574 = vadd.f32 0.0, %v4573
  %v4575 = vpop.f32.mrf.mxu0
  %4576 = vmatprep.mubr.bf16.mxu0 0
  %4577 = vmatmul.mubr.bf16.gmra.mxu0 %v4504
  %v4578 = vpop.f32.mrf.mxu0
  %v4579 = vadd.f32 0.0, %v4578
  %v4580 = vpop.f32.mrf.mxu0
  %v4581 = vpop.f32.mrf.mxu0
  %v4582 = vadd.f32 0.0, %v4581
  %v4583 = vpop.f32.mrf.mxu0
  %4584 = vmatprep.mubr.bf16.mxu0 0
  %4585 = vmatmul.mubr.bf16.gmra.mxu0 %v4507
  %v4586 = vpop.f32.mrf.mxu0
  %v4587 = vadd.f32 0.0, %v4586
  %v4588 = vpop.f32.mrf.mxu0
  %v4589 = vpop.f32.mrf.mxu0
  %v4590 = vadd.f32 0.0, %v4589
  %v4591 = vpop.f32.mrf.mxu0
  %4592 = vmatprep.mubr.bf16.mxu0 0
  %4593 = vmatmul.mubr.bf16.gmra.mxu0 %v4510
  %v4594 = vpop.f32.mrf.mxu0
  %v4595 = vadd.f32 0.0, %v4594
  %v4596 = vpop.f32.mrf.mxu0
  %v4597 = vpop.f32.mrf.mxu0
  %v4598 = vadd.f32 0.0, %v4597
  %v4599 = vpop.f32.mrf.mxu0
  %4600 = vmatprep.mubr.bf16.mxu0 0
  %4601 = vmatmul.mubr.bf16.gmra.mxu0 %v4513
  %v4602 = vpop.f32.mrf.mxu0
  %v4603 = vadd.f32 0.0, %v4602
  %v4604 = vpop.f32.mrf.mxu0
  %v4605 = vpop.f32.mrf.mxu0
  %v4606 = vadd.f32 0.0, %v4605
  %v4607 = vpop.f32.mrf.mxu0
  %4608 = vmatprep.mubr.bf16.mxu0 0
  %4609 = vmatmul.mubr.bf16.gmra.mxu0 %v4516
  %v4610 = vpop.f32.mrf.mxu0
  %v4611 = vadd.f32 0.0, %v4610
  %v4612 = vpop.f32.mrf.mxu0
  %v4613 = vpop.f32.mrf.mxu0
  %v4614 = vadd.f32 0.0, %v4613
  %v4615 = vpop.f32.mrf.mxu0
  %4616 = vmatprep.mubr.bf16.mxu0 0
  %4617 = vmatmul.mubr.bf16.gmra.mxu0 %v4519
  %v4618 = vpop.f32.mrf.mxu0
  %v4619 = vadd.f32 0.0, %v4618
  %v4620 = vpop.f32.mrf.mxu0
  %v4621 = vpop.f32.mrf.mxu0
  %v4622 = vadd.f32 0.0, %v4621
  %v4623 = vpop.f32.mrf.mxu0
  %4624 = vmatprep.mubr.bf16.mxu0 0
  %4625 = vmatmul.mubr.bf16.gmra.mxu0 %v4522
  %v4626 = vpop.f32.mrf.mxu0
  %v4627 = vadd.f32 0.0, %v4626
  %v4628 = vpop.f32.mrf.mxu0
  %v4629 = vpop.f32.mrf.mxu0
  %v4630 = vadd.f32 0.0, %v4629
  %v4631 = vpop.f32.mrf.mxu0
  %4632 = vmatprep.mubr.bf16.mxu0 0
  %4633 = vmatmul.mubr.bf16.gmra.mxu0 %v4525
  %v4634 = vpop.f32.mrf.mxu0
  %v4635 = vadd.f32 0.0, %v4634
  %v4636 = vpop.f32.mrf.mxu0
  %v4637 = vpop.f32.mrf.mxu0
  %v4638 = vadd.f32 0.0, %v4637
  %v4639 = vpop.f32.mrf.mxu0
  %4640 = vmatprep.mubr.bf16.mxu0 0
  %4641 = vmatmul.mubr.bf16.gmra.mxu0 %v4528
  %v4642 = vpop.f32.mrf.mxu0
  %v4643 = vadd.f32 0.0, %v4642
  %v4644 = vpop.f32.mrf.mxu0
  %v4645 = vpop.f32.mrf.mxu0
  %v4646 = vadd.f32 0.0, %v4645
  %v4647 = vpop.f32.mrf.mxu0
  %4648 = vmatprep.mubr.bf16.mxu0 0
  %4649 = vmatmul.mubr.bf16.gmra.mxu0 %v4531
  %v4650 = vpop.f32.mrf.mxu0
  %v4651 = vadd.f32 0.0, %v4650
  %v4652 = vpop.f32.mrf.mxu0
  %v4653 = vpop.f32.mrf.mxu0
  %v4654 = vpop.f32.mrf.mxu0
  %4655 = vdwg.mxu0
  %v4656 = vpack.c.bf16 %v4574, %v4571
  %v4657 = vpack.c.bf16 %v4582, %v4579
  %v4658 = vpack.c.bf16 %v4590, %v4587
  %v4659 = vpack.c.bf16 %v4595, %v4595
  %s4660 = scalar_lea.vmem %s5, 384
  %v4661 = vld [vmem:[%s4660] sm:$0xf]
  %v4662 = vld [vmem:[%s4660 + $0x4] sm:$0xf]
  %v4663 = vld [vmem:[%s4660 + $0x8] sm:$0xf]
  %v4664 = vld [vmem:[%s4660 + $0xc] sm:$0x7]
  %v4665 = vpack.c.bf16 %v4603, %v4598
  %v4666 = vpack.c.bf16 %v4611, %v4606
  %v4667 = vpack.c.bf16 %v4619, %v4614
  %v4668 = vpack.c.bf16 %v4622, %v4622
  %s4669 = scalar_lea.vmem %s5, 448
  %v4670 = vld [vmem:[%s4669] sm:$0xf]
  %v4671 = vld [vmem:[%s4669 + $0x4] sm:$0xf]
  %v4672 = vld [vmem:[%s4669 + $0x8] sm:$0xf]
  %v4673 = vld [vmem:[%s4669 + $0xc] sm:$0x7]
  %v4678 = vunpack.c.l.b16 %v4670
  %v4679 = vunpack.c.l.b16 %v4671
  %v4680 = vunpack.c.l.b16 %v4672
  %v4681 = vunpack.c.l.b16 %v4673
  %v4682 = vpack.c.b16 %v4679, %v4678
  %v4683 = vpack.c.b16 %v4681, %v4680
  %v4686 = vsel %vm3819, %v4665, 0
  %v4689 = vsel %vm3819, %v4666, 0
  %v4692 = vsel %vm3819, %v4667, 0
  %v4695 = vsel %vm3819, %v4668, 0
  %v4698 = vsel %vm3395, %v4683, 0
  %4700 = vmatprep.subr.bf16.mxu0 0
  %4701 = vmatpush1.bf16.msra.mxu0 0
  %4702 = vmatprep.subr.bf16.mxu0 0
  %4703 = vmatpush1.bf16.msra.mxu0 0
  %4704 = vmatprep.subr.bf16.mxu0 0
  %4705 = vmatpush1.bf16.msra.mxu0 0
  %4706 = vmatprep.subr.bf16.mxu0 0
  %4707 = vmatpush1.bf16.msra.mxu0 0
  %4708 = vmatprep.subr.bf16.mxu0 0
  %4709 = vmatpush1.bf16.msra.mxu0 0
  %4710 = vmatprep.subr.bf16.mxu0 0
  %4711 = vmatpush1.bf16.msra.mxu0 0
  %4712 = vmatprep.subr.bf16.mxu0 0
  %4713 = vmatpush1.bf16.msra.mxu0 %v4698
  %4714 = vmatprep.subr.bf16.mxu0 0
  %4715 = vmatpush1.bf16.msra.mxu0 %v4682
  %4716 = vmatprep.subr.bf16.mxu0 0
  %4717 = vmatpush2.bf16.msra.mxu0 0
  %4718 = vmatprep.subr.bf16.mxu0 0
  %4719 = vmatpush2.bf16.msra.mxu0 0
  %4720 = vmatprep.subr.bf16.mxu0 0
  %4721 = vmatpush2.bf16.msra.mxu0 0
  %4722 = vmatprep.subr.bf16.mxu0 0
  %4723 = vmatpush2.bf16.msra.mxu0 0
  %4724 = vmatprep.subr.bf16.mxu0 0
  %4725 = vmatpush2.bf16.msra.mxu0 0
  %4726 = vmatprep.subr.bf16.mxu0 0
  %4727 = vmatpush2.bf16.msra.mxu0 0
  %4728 = vmatprep.subr.bf16.mxu0 0
  %4729 = vmatpush2.bf16.msra.mxu0 0
  %4730 = vmatprep.subr.bf16.mxu0 0
  %4731 = vmatpush2.bf16.msra.mxu0 0
  %4732 = vmatprep.mubr.bf16.mxu0 0
  %4733 = vmatmul.mubr.bf16.gmra.mxu0 %v4686
  %v4734 = vpop.f32.mrf.mxu0
  %v4735 = vadd.f32 0.0, %v4734
  %v4736 = vpop.f32.mrf.mxu0
  %v4737 = vpop.f32.mrf.mxu0
  %v4738 = vadd.f32 0.0, %v4737
  %v4739 = vpop.f32.mrf.mxu0
  %4740 = vmatprep.mubr.bf16.mxu0 0
  %4741 = vmatmul.mubr.bf16.gmra.mxu0 %v4689
  %v4742 = vpop.f32.mrf.mxu0
  %v4743 = vadd.f32 0.0, %v4742
  %v4744 = vpop.f32.mrf.mxu0
  %v4745 = vpop.f32.mrf.mxu0
  %v4746 = vadd.f32 0.0, %v4745
  %v4747 = vpop.f32.mrf.mxu0
  %4748 = vmatprep.mubr.bf16.mxu0 0
  %4749 = vmatmul.mubr.bf16.gmra.mxu0 %v4692
  %v4750 = vpop.f32.mrf.mxu0
  %v4751 = vadd.f32 0.0, %v4750
  %v4752 = vpop.f32.mrf.mxu0
  %v4753 = vpop.f32.mrf.mxu0
  %v4754 = vadd.f32 0.0, %v4753
  %v4755 = vpop.f32.mrf.mxu0
  %4756 = vmatprep.mubr.bf16.mxu0 0
  %4757 = vmatmul.mubr.bf16.gmra.mxu0 %v4695
  %v4758 = vpop.f32.mrf.mxu0
  %v4759 = vadd.f32 0.0, %v4758
  %v4760 = vpop.f32.mrf.mxu0
  %v4761 = vpop.f32.mrf.mxu0
  %v4762 = vpop.f32.mrf.mxu0
  %4763 = vdwg.mxu0
  %v4768 = vunpack.c.l.b16 %v4661
  %v4769 = vunpack.c.l.b16 %v4662
  %v4770 = vunpack.c.l.b16 %v4663
  %v4771 = vunpack.c.l.b16 %v4664
  %v4772 = vpack.c.b16 %v4769, %v4768
  %v4773 = vpack.c.b16 %v4771, %v4770
  %v4776 = vsel %vm3819, %v4656, 0
  %v4779 = vsel %vm3819, %v4657, 0
  %v4782 = vsel %vm3819, %v4658, 0
  %v4785 = vsel %vm3819, %v4659, 0
  %v4788 = vsel %vm3395, %v4773, 0
  %4790 = vmatprep.subr.bf16.mxu0 0
  %4791 = vmatpush1.bf16.msra.mxu0 0
  %4792 = vmatprep.subr.bf16.mxu0 0
  %4793 = vmatpush1.bf16.msra.mxu0 0
  %4794 = vmatprep.subr.bf16.mxu0 0
  %4795 = vmatpush1.bf16.msra.mxu0 0
  %4796 = vmatprep.subr.bf16.mxu0 0
  %4797 = vmatpush1.bf16.msra.mxu0 0
  %4798 = vmatprep.subr.bf16.mxu0 0
  %4799 = vmatpush1.bf16.msra.mxu0 0
  %4800 = vmatprep.subr.bf16.mxu0 0
  %4801 = vmatpush1.bf16.msra.mxu0 0
  %4802 = vmatprep.subr.bf16.mxu0 0
  %4803 = vmatpush1.bf16.msra.mxu0 %v4788
  %4804 = vmatprep.subr.bf16.mxu0 0
  %4805 = vmatpush1.bf16.msra.mxu0 %v4772
  %4806 = vmatprep.subr.bf16.mxu0 0
  %4807 = vmatpush2.bf16.msra.mxu0 0
  %4808 = vmatprep.subr.bf16.mxu0 0
  %4809 = vmatpush2.bf16.msra.mxu0 0
  %4810 = vmatprep.subr.bf16.mxu0 0
  %4811 = vmatpush2.bf16.msra.mxu0 0
  %4812 = vmatprep.subr.bf16.mxu0 0
  %4813 = vmatpush2.bf16.msra.mxu0 0
  %4814 = vmatprep.subr.bf16.mxu0 0
  %4815 = vmatpush2.bf16.msra.mxu0 0
  %4816 = vmatprep.subr.bf16.mxu0 0
  %4817 = vmatpush2.bf16.msra.mxu0 0
  %4818 = vmatprep.subr.bf16.mxu0 0
  %4819 = vmatpush2.bf16.msra.mxu0 0
  %4820 = vmatprep.subr.bf16.mxu0 0
  %4821 = vmatpush2.bf16.msra.mxu0 0
  %4822 = vmatprep.mubr.bf16.mxu0 0
  %4823 = vmatmul.mubr.bf16.gmra.mxu0 %v4776
  %v4824 = vpop.f32.mrf.mxu0
  %v4825 = vadd.f32 %v4735, %v4824
  %v4826 = vpop.f32.mrf.mxu0
  %v4827 = vpop.f32.mrf.mxu0
  %v4828 = vadd.f32 %v4738, %v4827
  %v4829 = vpop.f32.mrf.mxu0
  %4830 = vmatprep.mubr.bf16.mxu0 0
  %4831 = vmatmul.mubr.bf16.gmra.mxu0 %v4779
  %v4832 = vpop.f32.mrf.mxu0
  %v4833 = vadd.f32 %v4743, %v4832
  %v4834 = vpop.f32.mrf.mxu0
  %v4835 = vpop.f32.mrf.mxu0
  %v4836 = vadd.f32 %v4746, %v4835
  %v4837 = vpop.f32.mrf.mxu0
  %4838 = vmatprep.mubr.bf16.mxu0 0
  %4839 = vmatmul.mubr.bf16.gmra.mxu0 %v4782
  %v4840 = vpop.f32.mrf.mxu0
  %v4841 = vadd.f32 %v4751, %v4840
  %v4842 = vpop.f32.mrf.mxu0
  %v4843 = vpop.f32.mrf.mxu0
  %v4844 = vadd.f32 %v4754, %v4843
  %v4845 = vpop.f32.mrf.mxu0
  %4846 = vmatprep.mubr.bf16.mxu0 0
  %4847 = vmatmul.mubr.bf16.gmra.mxu0 %v4785
  %v4848 = vpop.f32.mrf.mxu0
  %v4849 = vadd.f32 %v4759, %v4848
  %v4850 = vpop.f32.mrf.mxu0
  %v4851 = vpop.f32.mrf.mxu0
  %v4852 = vpop.f32.mrf.mxu0
  %4853 = vdwg.mxu0
  %v4854 = vpack.c.bf16 %v4630, %v4627
  %v4855 = vpack.c.bf16 %v4638, %v4635
  %v4856 = vpack.c.bf16 %v4646, %v4643
  %v4857 = vpack.c.bf16 %v4651, %v4651
  %s4858 = scalar_lea.vmem %s5, 512
  %v4859 = vld [vmem:[%s4858] sm:$0xf]
  %v4860 = vld [vmem:[%s4858 + $0x4] sm:$0xf]
  %v4861 = vld [vmem:[%s4858 + $0x8] sm:$0xf]
  %v4862 = vld [vmem:[%s4858 + $0xc] sm:$0x7]
  %v4867 = vunpack.c.l.b16 %v4859
  %v4868 = vunpack.c.l.b16 %v4860
  %v4869 = vunpack.c.l.b16 %v4861
  %v4870 = vunpack.c.l.b16 %v4862
  %v4871 = vpack.c.b16 %v4868, %v4867
  %v4872 = vpack.c.b16 %v4870, %v4869
  %v4875 = vsel %vm3819, %v4854, 0
  %v4878 = vsel %vm3819, %v4855, 0
  %v4881 = vsel %vm3819, %v4856, 0
  %v4884 = vsel %vm3819, %v4857, 0
  %v4887 = vsel %vm3395, %v4872, 0
  %4889 = vmatprep.subr.bf16.mxu0 0
  %4890 = vmatpush1.bf16.msra.mxu0 0
  %4891 = vmatprep.subr.bf16.mxu0 0
  %4892 = vmatpush1.bf16.msra.mxu0 0
  %4893 = vmatprep.subr.bf16.mxu0 0
  %4894 = vmatpush1.bf16.msra.mxu0 0
  %4895 = vmatprep.subr.bf16.mxu0 0
  %4896 = vmatpush1.bf16.msra.mxu0 0
  %4897 = vmatprep.subr.bf16.mxu0 0
  %4898 = vmatpush1.bf16.msra.mxu0 0
  %4899 = vmatprep.subr.bf16.mxu0 0
  %4900 = vmatpush1.bf16.msra.mxu0 0
  %4901 = vmatprep.subr.bf16.mxu0 0
  %4902 = vmatpush1.bf16.msra.mxu0 %v4887
  %4903 = vmatprep.subr.bf16.mxu0 0
  %4904 = vmatpush1.bf16.msra.mxu0 %v4871
  %4905 = vmatprep.subr.bf16.mxu0 0
  %4906 = vmatpush2.bf16.msra.mxu0 0
  %4907 = vmatprep.subr.bf16.mxu0 0
  %4908 = vmatpush2.bf16.msra.mxu0 0
  %4909 = vmatprep.subr.bf16.mxu0 0
  %4910 = vmatpush2.bf16.msra.mxu0 0
  %4911 = vmatprep.subr.bf16.mxu0 0
  %4912 = vmatpush2.bf16.msra.mxu0 0
  %4913 = vmatprep.subr.bf16.mxu0 0
  %4914 = vmatpush2.bf16.msra.mxu0 0
  %4915 = vmatprep.subr.bf16.mxu0 0
  %4916 = vmatpush2.bf16.msra.mxu0 0
  %4917 = vmatprep.subr.bf16.mxu0 0
  %4918 = vmatpush2.bf16.msra.mxu0 0
  %4919 = vmatprep.subr.bf16.mxu0 0
  %4920 = vmatpush2.bf16.msra.mxu0 0
  %4921 = vmatprep.mubr.bf16.mxu0 0
  %4922 = vmatmul.mubr.bf16.gmra.mxu0 %v4875
  %v4923 = vpop.f32.mrf.mxu0
  %v4924 = vadd.f32 0.0, %v4923
  %v4925 = vpop.f32.mrf.mxu0
  %v4926 = vpop.f32.mrf.mxu0
  %v4927 = vadd.f32 0.0, %v4926
  %v4928 = vpop.f32.mrf.mxu0
  %4929 = vmatprep.mubr.bf16.mxu0 0
  %4930 = vmatmul.mubr.bf16.gmra.mxu0 %v4878
  %v4931 = vpop.f32.mrf.mxu0
  %v4932 = vadd.f32 0.0, %v4931
  %v4933 = vpop.f32.mrf.mxu0
  %v4934 = vpop.f32.mrf.mxu0
  %v4935 = vadd.f32 0.0, %v4934
  %v4936 = vpop.f32.mrf.mxu0
  %4937 = vmatprep.mubr.bf16.mxu0 0
  %4938 = vmatmul.mubr.bf16.gmra.mxu0 %v4881
  %v4939 = vpop.f32.mrf.mxu0
  %v4940 = vadd.f32 0.0, %v4939
  %v4941 = vpop.f32.mrf.mxu0
  %v4942 = vpop.f32.mrf.mxu0
  %v4943 = vadd.f32 0.0, %v4942
  %v4944 = vpop.f32.mrf.mxu0
  %4945 = vmatprep.mubr.bf16.mxu0 0
  %4946 = vmatmul.mubr.bf16.gmra.mxu0 %v4884
  %v4947 = vpop.f32.mrf.mxu0
  %v4948 = vadd.f32 0.0, %v4947
  %v4949 = vpop.f32.mrf.mxu0
  %v4950 = vpop.f32.mrf.mxu0
  %v4951 = vpop.f32.mrf.mxu0
  %4952 = vdwg.mxu0
  %v4953 = vadd.f32 %v4825, %v4924
  %v4954 = vadd.f32 %v4828, %v4927
  %v4955 = vadd.f32 %v4833, %v4932
  %v4956 = vadd.f32 %v4836, %v4935
  %v4957 = vadd.f32 %v4841, %v4940
  %v4958 = vadd.f32 %v4844, %v4943
  %v4959 = vadd.f32 %v4849, %v4948
  %vm4960 = vcmask 113664
  %v4961 = vsel %vm4960, %v4953, 0.0
  %4962 = vadd.xlane.f32.xlu0 %v4961
  %v4963 = vpop.xlane.xlu0 %4962
  %v4964 = vsel %vm4960, %v4954, 0.0
  %4965 = vadd.xlane.f32.xlu0 %v4964
  %v4966 = vpop.xlane.xlu0 %4965
  %v4967 = vsel %vm4960, %v4955, 0.0
  %4968 = vadd.xlane.f32.xlu0 %v4967
  %v4969 = vpop.xlane.xlu0 %4968
  %v4970 = vsel %vm4960, %v4956, 0.0
  %4971 = vadd.xlane.f32.xlu0 %v4970
  %v4972 = vpop.xlane.xlu0 %4971
  %v4973 = vsel %vm4960, %v4957, 0.0
  %4974 = vadd.xlane.f32.xlu0 %v4973
  %v4975 = vpop.xlane.xlu0 %4974
  %v4976 = vsel %vm4960, %v4958, 0.0
  %4977 = vadd.xlane.f32.xlu0 %v4976
  %v4978 = vpop.xlane.xlu0 %4977
  %v4979 = vsel %vm4960, %v4959, 0.0
  %4980 = vadd.xlane.f32.xlu0 %v4979
  %v4981 = vpop.xlane.xlu0 %4980
  %v4982 = vmul.f32 %v4953, %v4953
  %v4983 = vmul.f32 %v4954, %v4954
  %v4984 = vmul.f32 %v4955, %v4955
  %v4985 = vmul.f32 %v4956, %v4956
  %v4986 = vmul.f32 %v4957, %v4957
  %v4987 = vmul.f32 %v4958, %v4958
  %v4988 = vmul.f32 %v4959, %v4959
  %v4989 = vsel %vm4960, %v4982, 0.0
  %4990 = vadd.xlane.f32.xlu0 %v4989
  %v4991 = vpop.xlane.xlu0 %4990
  %v4992 = vsel %vm4960, %v4983, 0.0
  %4993 = vadd.xlane.f32.xlu0 %v4992
  %v4994 = vpop.xlane.xlu0 %4993
  %v4995 = vsel %vm4960, %v4984, 0.0
  %4996 = vadd.xlane.f32.xlu0 %v4995
  %v4997 = vpop.xlane.xlu0 %4996
  %v4998 = vsel %vm4960, %v4985, 0.0
  %4999 = vadd.xlane.f32.xlu0 %v4998
  %v5000 = vpop.xlane.xlu0 %4999
  %v5001 = vsel %vm4960, %v4986, 0.0
  %5002 = vadd.xlane.f32.xlu0 %v5001
  %v5003 = vpop.xlane.xlu0 %5002
  %v5004 = vsel %vm4960, %v4987, 0.0
  %5005 = vadd.xlane.f32.xlu0 %v5004
  %v5006 = vpop.xlane.xlu0 %5005
  %v5007 = vsel %vm4960, %v4988, 0.0
  %5008 = vadd.xlane.f32.xlu0 %v5007
  %v5009 = vpop.xlane.xlu0 %5008
  %v5010 = vsel %vm1912, %v4963, %v4991
  %v5011 = vsel %vm1912, %v4966, %v4994
  %v5012 = vsel %vm1912, %v4969, %v4997
  %v5013 = vsel %vm1912, %v4972, %v5000
  %v5014 = vsel %vm1912, %v4975, %v5003
  %v5015 = vsel %vm1912, %v4978, %v5006
  %v5016 = vsel %vm1912, %v4981, %v5009
  %vm5017 = vcmask 457728
  %v5018 = vsel %vm5017, %v3940, 0
  %5020 = vmatprep.subr.mxu0 0.0
  %5021 = vmatpush1.msra.mxu0 0.0
  %5022 = vmatprep.subr.mxu0 0.0
  %5023 = vmatpush1.msra.mxu0 0.0
  %5024 = vmatprep.subr.mxu0 0.0
  %5025 = vmatpush1.msra.mxu0 0.0
  %5026 = vmatprep.subr.mxu0 0.0
  %5027 = vmatpush1.msra.mxu0 0.0
  %5028 = vmatprep.subr.mxu0 0.0
  %5029 = vmatpush1.msra.mxu0 0.0
  %5030 = vmatprep.subr.mxu0 0.0
  %5031 = vmatpush1.msra.mxu0 0.0
  %5032 = vmatprep.subr.mxu0 0.0
  %5033 = vmatpush1.msra.mxu0 0.0
  %5034 = vmatprep.subr.mxu0 0.0
  %5035 = vmatpush1.msra.mxu0 0.0
  %5036 = vmatprep.subr.mxu0 0.0
  %5037 = vmatpush1.msra.mxu0 0.0
  %5038 = vmatprep.subr.mxu0 0.0
  %5039 = vmatpush1.msra.mxu0 %v5016
  %5040 = vmatprep.subr.mxu0 0.0
  %5041 = vmatpush1.msra.mxu0 %v5015
  %5042 = vmatprep.subr.mxu0 0.0
  %5043 = vmatpush1.msra.mxu0 %v5014
  %5044 = vmatprep.subr.mxu0 0.0
  %5045 = vmatpush1.msra.mxu0 %v5013
  %5046 = vmatprep.subr.mxu0 0.0
  %5047 = vmatpush1.msra.mxu0 %v5012
  %5048 = vmatprep.subr.mxu0 0.0
  %5049 = vmatpush1.msra.mxu0 %v5011
  %5050 = vmatprep.subr.mxu0 0.0
  %5051 = vmatpush1.msra.mxu0 %v5010
  %5052 = vmatprep.subr.mxu0 0.0
  %5053 = vmatpush2.msra.mxu0 0.0
  %5054 = vmatprep.subr.mxu0 0.0
  %5055 = vmatpush2.msra.mxu0 0.0
  %5056 = vmatprep.subr.mxu0 0.0
  %5057 = vmatpush2.msra.mxu0 0.0
  %5058 = vmatprep.subr.mxu0 0.0
  %5059 = vmatpush2.msra.mxu0 0.0
  %5060 = vmatprep.subr.mxu0 0.0
  %5061 = vmatpush2.msra.mxu0 0.0
  %5062 = vmatprep.subr.mxu0 0.0
  %5063 = vmatpush2.msra.mxu0 0.0
  %5064 = vmatprep.subr.mxu0 0.0
  %5065 = vmatpush2.msra.mxu0 0.0
  %5066 = vmatprep.subr.mxu0 0.0
  %5067 = vmatpush2.msra.mxu0 0.0
  %5068 = vmatprep.subr.mxu0 0.0
  %5069 = vmatpush2.msra.mxu0 0.0
  %5070 = vmatprep.subr.mxu0 0.0
  %5071 = vmatpush2.msra.mxu0 0.0
  %5072 = vmatprep.subr.mxu0 0.0
  %5073 = vmatpush2.msra.mxu0 0.0
  %5074 = vmatprep.subr.mxu0 0.0
  %5075 = vmatpush2.msra.mxu0 0.0
  %5076 = vmatprep.subr.mxu0 0.0
  %5077 = vmatpush2.msra.mxu0 0.0
  %5078 = vmatprep.subr.mxu0 0.0
  %5079 = vmatpush2.msra.mxu0 0.0
  %5080 = vmatprep.subr.mxu0 0.0
  %5081 = vmatpush2.msra.mxu0 0.0
  %5082 = vmatprep.subr.mxu0 0.0
  %5083 = vmatpush2.msra.mxu0 0.0
  %5084 = vmatprep.mubr.f32.mxu0 0.0
  %5085 = vmatmul.mubr.f32.gmra.mxu0 %v5018
  %v5086 = vpop.f32.mrf.mxu0
  %v5087 = vadd.f32 0.0, %v5086
  %v5088 = vpop.f32.mrf.mxu0
  %5089 = vdwg.mxu0
  %v5090 = vmul.f32 %v5087, 0.010204081
  %v5091 = vmul.f32 %v5090, %v5090
  %5093 = vrot.lane.b32.xlu0 %v5091, 1
  %v5094 = vpop.permute.xlu0 %5093
  %v5096 = vsub.f32 %v5090, %v5094
  %v5097 = vmax.f32 %v5096, 0.0
  %s5098 = scalar_lea.vmem %s8, 16
  %v5099 = vld [vmem:[%s5098] sm:$0xff]
  %v5100 = vadd.f32 %v5097, 1e-05
  %v5101 = vrsqrt.pop %v5100
  %5103 = vrot.lane.b32.xlu0 %v5101, 127
  %v5104 = vpop.permute.xlu0 %5103
  %v5106 = vmul.f32 %v5099, %v5104
  %v5107 = vmul.f32 %v5090, %v5106
  %5109 = vrot.lane.b32.xlu0 %v5107, 1
  %v5110 = vpop.permute.xlu0 %5109
  %v5112 = vsub.f32 %v5099, %v5110
  %v5113 = vsel %vm1912, %v5106, %v5112
  %v5114 = vld [vmem:[%s6] sm:$0xff]
  %v5115 = vld [vmem:[%s6 + $0x8] sm:$0xff]
  %v5116 = vld [vmem:[%s6 + $0x10] sm:$0xff]
  %v5117 = vld [vmem:[%s6 + $0x18] sm:$0xff]
  %v5118 = vld [vmem:[%s6 + $0x20] sm:$0xff]
  %v5119 = vld [vmem:[%s6 + $0x28] sm:$0xff]
  %v5120 = vld [vmem:[%s6 + $0x30] sm:$0xff]
  %v5122 = vsel %vm2074, %v5114, 0
  %v5125 = vsel %vm2074, %v5115, 0
  %v5128 = vsel %vm2074, %v5116, 0
  %v5131 = vsel %vm2074, %v5117, 0
  %v5134 = vsel %vm2074, %v5118, 0
  %v5137 = vsel %vm2074, %v5119, 0
  %v5140 = vsel %vm2074, %v5120, 0
  %5142 = vmatprep.subr.mxu0 0.0
  %5143 = vmatpush1.msra.mxu0 0.0
  %5144 = vmatprep.subr.mxu0 0.0
  %5145 = vmatpush1.msra.mxu0 0.0
  %5146 = vmatprep.subr.mxu0 0.0
  %5147 = vmatpush1.msra.mxu0 0.0
  %5148 = vmatprep.subr.mxu0 0.0
  %5149 = vmatpush1.msra.mxu0 0.0
  %5150 = vmatprep.subr.mxu0 0.0
  %5151 = vmatpush1.msra.mxu0 0.0
  %5152 = vmatprep.subr.mxu0 0.0
  %5153 = vmatpush1.msra.mxu0 0.0
  %5154 = vmatprep.subr.mxu0 0.0
  %5155 = vmatpush1.msra.mxu0 0.0
  %5156 = vmatprep.subr.mxu0 0.0
  %5157 = vmatpush1.msra.mxu0 0.0
  %5158 = vmatprep.subr.mxu0 0.0
  %5159 = vmatpush1.msra.mxu0 0.0
  %5160 = vmatprep.subr.mxu0 0.0
  %5161 = vmatpush1.msra.mxu0 0.0
  %5162 = vmatprep.subr.mxu0 0.0
  %5163 = vmatpush1.msra.mxu0 0.0
  %5164 = vmatprep.subr.mxu0 0.0
  %5165 = vmatpush1.msra.mxu0 0.0
  %5166 = vmatprep.subr.mxu0 0.0
  %5167 = vmatpush1.msra.mxu0 0.0
  %5168 = vmatprep.subr.mxu0 0.0
  %5169 = vmatpush1.msra.mxu0 0.0
  %5170 = vmatprep.subr.mxu0 0.0
  %5171 = vmatpush1.msra.mxu0 0.0
  %5172 = vmatprep.subr.mxu0 0.0
  %5173 = vmatpush1.msra.mxu0 %v5113
  %5174 = vmatprep.subr.mxu0 0.0
  %5175 = vmatpush2.msra.mxu0 0.0
  %5176 = vmatprep.subr.mxu0 0.0
  %5177 = vmatpush2.msra.mxu0 0.0
  %5178 = vmatprep.subr.mxu0 0.0
  %5179 = vmatpush2.msra.mxu0 0.0
  %5180 = vmatprep.subr.mxu0 0.0
  %5181 = vmatpush2.msra.mxu0 0.0
  %5182 = vmatprep.subr.mxu0 0.0
  %5183 = vmatpush2.msra.mxu0 0.0
  %5184 = vmatprep.subr.mxu0 0.0
  %5185 = vmatpush2.msra.mxu0 0.0
  %5186 = vmatprep.subr.mxu0 0.0
  %5187 = vmatpush2.msra.mxu0 0.0
  %5188 = vmatprep.subr.mxu0 0.0
  %5189 = vmatpush2.msra.mxu0 0.0
  %5190 = vmatprep.subr.mxu0 0.0
  %5191 = vmatpush2.msra.mxu0 0.0
  %5192 = vmatprep.subr.mxu0 0.0
  %5193 = vmatpush2.msra.mxu0 0.0
  %5194 = vmatprep.subr.mxu0 0.0
  %5195 = vmatpush2.msra.mxu0 0.0
  %5196 = vmatprep.subr.mxu0 0.0
  %5197 = vmatpush2.msra.mxu0 0.0
  %5198 = vmatprep.subr.mxu0 0.0
  %5199 = vmatpush2.msra.mxu0 0.0
  %5200 = vmatprep.subr.mxu0 0.0
  %5201 = vmatpush2.msra.mxu0 0.0
  %5202 = vmatprep.subr.mxu0 0.0
  %5203 = vmatpush2.msra.mxu0 0.0
  %5204 = vmatprep.subr.mxu0 0.0
  %5205 = vmatpush2.msra.mxu0 0.0
  %5206 = vmatprep.mubr.f32.mxu0 0.0
  %5207 = vmatmul.mubr.f32.gmra.mxu0 %v5122
  %v5208 = vpop.f32.mrf.mxu0
  %v5209 = vadd.f32 0.0, %v5208
  %v5210 = vpop.f32.mrf.mxu0
  %5211 = vmatprep.mubr.f32.mxu0 0.0
  %5212 = vmatmul.mubr.f32.gmra.mxu0 %v5125
  %v5213 = vpop.f32.mrf.mxu0
  %v5214 = vadd.f32 0.0, %v5213
  %v5215 = vpop.f32.mrf.mxu0
  %5216 = vmatprep.mubr.f32.mxu0 0.0
  %5217 = vmatmul.mubr.f32.gmra.mxu0 %v5128
  %v5218 = vpop.f32.mrf.mxu0
  %v5219 = vadd.f32 0.0, %v5218
  %v5220 = vpop.f32.mrf.mxu0
  %5221 = vmatprep.mubr.f32.mxu0 0.0
  %5222 = vmatmul.mubr.f32.gmra.mxu0 %v5131
  %v5223 = vpop.f32.mrf.mxu0
  %v5224 = vadd.f32 0.0, %v5223
  %v5225 = vpop.f32.mrf.mxu0
  %5226 = vmatprep.mubr.f32.mxu0 0.0
  %5227 = vmatmul.mubr.f32.gmra.mxu0 %v5134
  %v5228 = vpop.f32.mrf.mxu0
  %v5229 = vadd.f32 0.0, %v5228
  %v5230 = vpop.f32.mrf.mxu0
  %5231 = vmatprep.mubr.f32.mxu0 0.0
  %5232 = vmatmul.mubr.f32.gmra.mxu0 %v5137
  %v5233 = vpop.f32.mrf.mxu0
  %v5234 = vadd.f32 0.0, %v5233
  %v5235 = vpop.f32.mrf.mxu0
  %5236 = vmatprep.mubr.f32.mxu0 0.0
  %5237 = vmatmul.mubr.f32.gmra.mxu0 %v5140
  %v5238 = vpop.f32.mrf.mxu0
  %v5239 = vadd.f32 0.0, %v5238
  %v5240 = vpop.f32.mrf.mxu0
  %5241 = vdwg.mxu0
  %5243 = vset.pattern.permute.xlu0 0
  %5244 = vperm.xlu0 %5243, %v5209
  %v5245 = vpop.permute.xlu0 %5244
  %5248 = vset.pattern.permute.xlu0 0
  %5249 = vperm.xlu0 %5248, %v5214
  %v5250 = vpop.permute.xlu0 %5249
  %5253 = vset.pattern.permute.xlu0 0
  %5254 = vperm.xlu0 %5253, %v5219
  %v5255 = vpop.permute.xlu0 %5254
  %5258 = vset.pattern.permute.xlu0 0
  %5259 = vperm.xlu0 %5258, %v5224
  %v5260 = vpop.permute.xlu0 %5259
  %5263 = vset.pattern.permute.xlu0 0
  %5264 = vperm.xlu0 %5263, %v5229
  %v5265 = vpop.permute.xlu0 %5264
  %5268 = vset.pattern.permute.xlu0 0
  %5269 = vperm.xlu0 %5268, %v5234
  %v5270 = vpop.permute.xlu0 %5269
  %5273 = vset.pattern.permute.xlu0 0
  %5274 = vperm.xlu0 %5273, %v5239
  %v5275 = vpop.permute.xlu0 %5274
  %v5277 = vmul.f32 %v4953, %v5245
  %v5278 = vmul.f32 %v4954, %v5250
  %v5279 = vmul.f32 %v4955, %v5255
  %v5280 = vmul.f32 %v4956, %v5260
  %v5281 = vmul.f32 %v4957, %v5265
  %v5282 = vmul.f32 %v4958, %v5270
  %v5283 = vmul.f32 %v4959, %v5275
  %5284 = vset.pattern.permute.xlu0 1
  %5285 = vperm.xlu0 %5284, %v5209
  %v5286 = vpop.permute.xlu0 %5285
  %5288 = vset.pattern.permute.xlu0 1
  %5289 = vperm.xlu0 %5288, %v5214
  %v5290 = vpop.permute.xlu0 %5289
  %5292 = vset.pattern.permute.xlu0 1
  %5293 = vperm.xlu0 %5292, %v5219
  %v5294 = vpop.permute.xlu0 %5293
  %5296 = vset.pattern.permute.xlu0 1
  %5297 = vperm.xlu0 %5296, %v5224
  %v5298 = vpop.permute.xlu0 %5297
  %5300 = vset.pattern.permute.xlu0 1
  %5301 = vperm.xlu0 %5300, %v5229
  %v5302 = vpop.permute.xlu0 %5301
  %5304 = vset.pattern.permute.xlu0 1
  %5305 = vperm.xlu0 %5304, %v5234
  %v5306 = vpop.permute.xlu0 %5305
  %5308 = vset.pattern.permute.xlu0 1
  %5309 = vperm.xlu0 %5308, %v5239
  %v5310 = vpop.permute.xlu0 %5309
  %v5312 = vadd.f32 %v5277, %v5286
  %v5313 = vadd.f32 %v5278, %v5290
  %v5314 = vadd.f32 %v5279, %v5294
  %v5315 = vadd.f32 %v5280, %v5298
  %v5316 = vadd.f32 %v5281, %v5302
  %v5317 = vadd.f32 %v5282, %v5306
  %v5318 = vadd.f32 %v5283, %v5310
  %v5319 = vmax.f32 %v5312, 0.0
  %v5320 = vmax.f32 %v5313, 0.0
  %v5321 = vmax.f32 %v5314, 0.0
  %v5322 = vmax.f32 %v5315, 0.0
  %v5323 = vmax.f32 %v5316, 0.0
  %v5324 = vmax.f32 %v5317, 0.0
  %v5325 = vmax.f32 %v5318, 0.0
  %v5326 = vld [vmem:[%s4] sm:$0xf]
  %v5327 = vld [vmem:[%s4 + $0x4] sm:$0xf]
  %v5328 = vld [vmem:[%s4 + $0x8] sm:$0xf]
  %v5329 = vld [vmem:[%s4 + $0xc] sm:$0xf]
  %v5330 = vld [vmem:[%s4 + $0x10] sm:$0xf]
  %v5331 = vld [vmem:[%s4 + $0x14] sm:$0xf]
  %v5332 = vld [vmem:[%s4 + $0x18] sm:$0xf]
  %v5333 = vld [vmem:[%s4 + $0x1c] sm:$0xf]
  %v5334 = vld [vmem:[%s4 + $0x20] sm:$0xf]
  %v5335 = vpack.c.bf16 %v5320, %v5319
  %v5336 = vpack.c.bf16 %v5322, %v5321
  %v5337 = vpack.c.bf16 %v5324, %v5323
  %v5338 = vpack.c.bf16 %v5325, %v5325
  %v5348 = vunpack.c.l.b16 %v5326
  %v5349 = vunpack.c.l.b16 %v5327
  %v5350 = vunpack.c.l.b16 %v5328
  %v5351 = vunpack.c.l.b16 %v5329
  %v5352 = vunpack.c.l.b16 %v5330
  %v5353 = vunpack.c.l.b16 %v5331
  %v5354 = vunpack.c.l.b16 %v5332
  %v5355 = vunpack.c.l.b16 %v5333
  %v5356 = vunpack.c.l.b16 %v5334
  %v5357 = vpack.c.b16 %v5349, %v5348
  %v5358 = vpack.c.b16 %v5351, %v5350
  %v5359 = vpack.c.b16 %v5353, %v5352
  %v5360 = vpack.c.b16 %v5355, %v5354
  %v5361 = vpack.c.b16 %v5356, %v5356
  %v5363 = vsel %vm5017, %v5357, 0
  %v5366 = vsel %vm5017, %v5358, 0
  %v5369 = vsel %vm5017, %v5359, 0
  %v5372 = vsel %vm5017, %v5360, 0
  %v5375 = vsel %vm5017, %v5361, 0
  %v5378 = vsel %vm3094, %v5338, 0
  %5380 = vmatprep.subr.bf16.mxu0 0
  %5381 = vmatpush1.bf16.msra.mxu0 0
  %5382 = vmatprep.subr.bf16.mxu0 0
  %5383 = vmatpush1.bf16.msra.mxu0 0
  %5384 = vmatprep.subr.bf16.mxu0 0
  %5385 = vmatpush1.bf16.msra.mxu0 0
  %5386 = vmatprep.subr.bf16.mxu0 0
  %5387 = vmatpush1.bf16.msra.mxu0 0
  %5388 = vmatprep.subr.bf16.mxu0 0
  %5389 = vmatpush1.bf16.msra.mxu0 %v5378
  %5390 = vmatprep.subr.bf16.mxu0 0
  %5391 = vmatpush1.bf16.msra.mxu0 %v5337
  %5392 = vmatprep.subr.bf16.mxu0 0
  %5393 = vmatpush1.bf16.msra.mxu0 %v5336
  %5394 = vmatprep.subr.bf16.mxu0 0
  %5395 = vmatpush1.bf16.msra.mxu0 %v5335
  %5396 = vmatprep.subr.bf16.mxu0 0
  %5397 = vmatpush2.bf16.msra.mxu0 0
  %5398 = vmatprep.subr.bf16.mxu0 0
  %5399 = vmatpush2.bf16.msra.mxu0 0
  %5400 = vmatprep.subr.bf16.mxu0 0
  %5401 = vmatpush2.bf16.msra.mxu0 0
  %5402 = vmatprep.subr.bf16.mxu0 0
  %5403 = vmatpush2.bf16.msra.mxu0 0
  %5404 = vmatprep.subr.bf16.mxu0 0
  %5405 = vmatpush2.bf16.msra.mxu0 0
  %5406 = vmatprep.subr.bf16.mxu0 0
  %5407 = vmatpush2.bf16.msra.mxu0 0
  %5408 = vmatprep.subr.bf16.mxu0 0
  %5409 = vmatpush2.bf16.msra.mxu0 0
  %5410 = vmatprep.subr.bf16.mxu0 0
  %5411 = vmatpush2.bf16.msra.mxu0 0
  %5412 = vmatprep.mubr.bf16.mxu0 0
  %5413 = vmatmul.mubr.bf16.gmra.mxu0 %v5363
  %v5414 = vpop.f32.mrf.mxu0
  %v5415 = vadd.f32 0.0, %v5414
  %v5416 = vpop.f32.mrf.mxu0
  %v5417 = vpop.f32.mrf.mxu0
  %v5418 = vadd.f32 0.0, %v5417
  %v5419 = vpop.f32.mrf.mxu0
  %5420 = vmatprep.mubr.bf16.mxu0 0
  %5421 = vmatmul.mubr.bf16.gmra.mxu0 %v5366
  %v5422 = vpop.f32.mrf.mxu0
  %v5423 = vadd.f32 0.0, %v5422
  %v5424 = vpop.f32.mrf.mxu0
  %v5425 = vpop.f32.mrf.mxu0
  %v5426 = vadd.f32 0.0, %v5425
  %v5427 = vpop.f32.mrf.mxu0
  %5428 = vmatprep.mubr.bf16.mxu0 0
  %5429 = vmatmul.mubr.bf16.gmra.mxu0 %v5369
  %v5430 = vpop.f32.mrf.mxu0
  %v5431 = vadd.f32 0.0, %v5430
  %v5432 = vpop.f32.mrf.mxu0
  %v5433 = vpop.f32.mrf.mxu0
  %v5434 = vadd.f32 0.0, %v5433
  %v5435 = vpop.f32.mrf.mxu0
  %5436 = vmatprep.mubr.bf16.mxu0 0
  %5437 = vmatmul.mubr.bf16.gmra.mxu0 %v5372
  %v5438 = vpop.f32.mrf.mxu0
  %v5439 = vadd.f32 0.0, %v5438
  %v5440 = vpop.f32.mrf.mxu0
  %v5441 = vpop.f32.mrf.mxu0
  %v5442 = vadd.f32 0.0, %v5441
  %v5443 = vpop.f32.mrf.mxu0
  %5444 = vmatprep.mubr.bf16.mxu0 0
  %5445 = vmatmul.mubr.bf16.gmra.mxu0 %v5375
  %v5446 = vpop.f32.mrf.mxu0
  %v5447 = vadd.f32 0.0, %v5446
  %v5448 = vpop.f32.mrf.mxu0
  %v5449 = vpop.f32.mrf.mxu0
  %v5450 = vpop.f32.mrf.mxu0
  %5451 = vdwg.mxu0
  %v5452 = vpack.c.bf16 %v5418, %v5415
  %v5453 = vpack.c.bf16 %v5423, %v5423
  %s5454 = scalar_lea.vmem %s5, 576
  %v5455 = vld [vmem:[%s5454] sm:$0xf]
  %v5456 = vld [vmem:[%s5454 + $0x4] sm:$0x7]
  %v5457 = vpack.c.bf16 %v5431, %v5426
  %v5458 = vpack.c.bf16 %v5434, %v5434
  %s5459 = scalar_lea.vmem %s5, 640
  %v5460 = vld [vmem:[%s5459] sm:$0xf]
  %v5461 = vld [vmem:[%s5459 + $0x4] sm:$0x7]
  %v5464 = vunpack.c.l.b16 %v5460
  %v5465 = vunpack.c.l.b16 %v5461
  %v5466 = vpack.c.b16 %v5465, %v5464
  %v5468 = vsel %vm4960, %v5457, 0
  %v5471 = vsel %vm4960, %v5458, 0
  %v5474 = vsel %vm3395, %v5466, 0
  %5476 = vmatprep.subr.bf16.mxu0 0
  %5477 = vmatpush1.bf16.msra.mxu0 0
  %5478 = vmatprep.subr.bf16.mxu0 0
  %5479 = vmatpush1.bf16.msra.mxu0 0
  %5480 = vmatprep.subr.bf16.mxu0 0
  %5481 = vmatpush1.bf16.msra.mxu0 0
  %5482 = vmatprep.subr.bf16.mxu0 0
  %5483 = vmatpush1.bf16.msra.mxu0 0
  %5484 = vmatprep.subr.bf16.mxu0 0
  %5485 = vmatpush1.bf16.msra.mxu0 0
  %5486 = vmatprep.subr.bf16.mxu0 0
  %5487 = vmatpush1.bf16.msra.mxu0 0
  %5488 = vmatprep.subr.bf16.mxu0 0
  %5489 = vmatpush1.bf16.msra.mxu0 0
  %5490 = vmatprep.subr.bf16.mxu0 0
  %5491 = vmatpush1.bf16.msra.mxu0 %v5474
  %5492 = vmatprep.subr.bf16.mxu0 0
  %5493 = vmatpush2.bf16.msra.mxu0 0
  %5494 = vmatprep.subr.bf16.mxu0 0
  %5495 = vmatpush2.bf16.msra.mxu0 0
  %5496 = vmatprep.subr.bf16.mxu0 0
  %5497 = vmatpush2.bf16.msra.mxu0 0
  %5498 = vmatprep.subr.bf16.mxu0 0
  %5499 = vmatpush2.bf16.msra.mxu0 0
  %5500 = vmatprep.subr.bf16.mxu0 0
  %5501 = vmatpush2.bf16.msra.mxu0 0
  %5502 = vmatprep.subr.bf16.mxu0 0
  %5503 = vmatpush2.bf16.msra.mxu0 0
  %5504 = vmatprep.subr.bf16.mxu0 0
  %5505 = vmatpush2.bf16.msra.mxu0 0
  %5506 = vmatprep.subr.bf16.mxu0 0
  %5507 = vmatpush2.bf16.msra.mxu0 0
  %5508 = vmatprep.mubr.bf16.mxu0 0
  %5509 = vmatmul.mubr.bf16.gmra.mxu0 %v5468
  %v5510 = vpop.f32.mrf.mxu0
  %v5511 = vadd.f32 0.0, %v5510
  %v5512 = vpop.f32.mrf.mxu0
  %v5513 = vpop.f32.mrf.mxu0
  %v5514 = vadd.f32 0.0, %v5513
  %v5515 = vpop.f32.mrf.mxu0
  %5516 = vmatprep.mubr.bf16.mxu0 0
  %5517 = vmatmul.mubr.bf16.gmra.mxu0 %v5471
  %v5518 = vpop.f32.mrf.mxu0
  %v5519 = vadd.f32 0.0, %v5518
  %v5520 = vpop.f32.mrf.mxu0
  %v5521 = vpop.f32.mrf.mxu0
  %v5522 = vpop.f32.mrf.mxu0
  %5523 = vdwg.mxu0
  %v5526 = vunpack.c.l.b16 %v5455
  %v5527 = vunpack.c.l.b16 %v5456
  %v5528 = vpack.c.b16 %v5527, %v5526
  %v5530 = vsel %vm4960, %v5452, 0
  %v5533 = vsel %vm4960, %v5453, 0
  %v5536 = vsel %vm3395, %v5528, 0
  %5538 = vmatprep.subr.bf16.mxu0 0
  %5539 = vmatpush1.bf16.msra.mxu0 0
  %5540 = vmatprep.subr.bf16.mxu0 0
  %5541 = vmatpush1.bf16.msra.mxu0 0
  %5542 = vmatprep.subr.bf16.mxu0 0
  %5543 = vmatpush1.bf16.msra.mxu0 0
  %5544 = vmatprep.subr.bf16.mxu0 0
  %5545 = vmatpush1.bf16.msra.mxu0 0
  %5546 = vmatprep.subr.bf16.mxu0 0
  %5547 = vmatpush1.bf16.msra.mxu0 0
  %5548 = vmatprep.subr.bf16.mxu0 0
  %5549 = vmatpush1.bf16.msra.mxu0 0
  %5550 = vmatprep.subr.bf16.mxu0 0
  %5551 = vmatpush1.bf16.msra.mxu0 0
  %5552 = vmatprep.subr.bf16.mxu0 0
  %5553 = vmatpush1.bf16.msra.mxu0 %v5536
  %5554 = vmatprep.subr.bf16.mxu0 0
  %5555 = vmatpush2.bf16.msra.mxu0 0
  %5556 = vmatprep.subr.bf16.mxu0 0
  %5557 = vmatpush2.bf16.msra.mxu0 0
  %5558 = vmatprep.subr.bf16.mxu0 0
  %5559 = vmatpush2.bf16.msra.mxu0 0
  %5560 = vmatprep.subr.bf16.mxu0 0
  %5561 = vmatpush2.bf16.msra.mxu0 0
  %5562 = vmatprep.subr.bf16.mxu0 0
  %5563 = vmatpush2.bf16.msra.mxu0 0
  %5564 = vmatprep.subr.bf16.mxu0 0
  %5565 = vmatpush2.bf16.msra.mxu0 0
  %5566 = vmatprep.subr.bf16.mxu0 0
  %5567 = vmatpush2.bf16.msra.mxu0 0
  %5568 = vmatprep.subr.bf16.mxu0 0
  %5569 = vmatpush2.bf16.msra.mxu0 0
  %5570 = vmatprep.mubr.bf16.mxu0 0
  %5571 = vmatmul.mubr.bf16.gmra.mxu0 %v5530
  %v5572 = vpop.f32.mrf.mxu0
  %v5573 = vadd.f32 %v5511, %v5572
  %v5574 = vpop.f32.mrf.mxu0
  %v5575 = vpop.f32.mrf.mxu0
  %v5576 = vadd.f32 %v5514, %v5575
  %v5577 = vpop.f32.mrf.mxu0
  %5578 = vmatprep.mubr.bf16.mxu0 0
  %5579 = vmatmul.mubr.bf16.gmra.mxu0 %v5533
  %v5580 = vpop.f32.mrf.mxu0
  %v5581 = vadd.f32 %v5519, %v5580
  %v5582 = vpop.f32.mrf.mxu0
  %v5583 = vpop.f32.mrf.mxu0
  %v5584 = vpop.f32.mrf.mxu0
  %5585 = vdwg.mxu0
  %v5586 = vpack.c.bf16 %v5442, %v5439
  %v5587 = vpack.c.bf16 %v5447, %v5447
  %s5588 = scalar_lea.vmem %s5, 704
  %v5589 = vld [vmem:[%s5588] sm:$0xf]
  %v5590 = vld [vmem:[%s5588 + $0x4] sm:$0x7]
  %v5593 = vunpack.c.l.b16 %v5589
  %v5594 = vunpack.c.l.b16 %v5590
  %v5595 = vpack.c.b16 %v5594, %v5593
  %v5597 = vsel %vm4960, %v5586, 0
  %v5600 = vsel %vm4960, %v5587, 0
  %v5603 = vsel %vm3395, %v5595, 0
  %5605 = vmatprep.subr.bf16.mxu0 0
  %5606 = vmatpush1.bf16.msra.mxu0 0
  %5607 = vmatprep.subr.bf16.mxu0 0
  %5608 = vmatpush1.bf16.msra.mxu0 0
  %5609 = vmatprep.subr.bf16.mxu0 0
  %5610 = vmatpush1.bf16.msra.mxu0 0
  %5611 = vmatprep.subr.bf16.mxu0 0
  %5612 = vmatpush1.bf16.msra.mxu0 0
  %5613 = vmatprep.subr.bf16.mxu0 0
  %5614 = vmatpush1.bf16.msra.mxu0 0
  %5615 = vmatprep.subr.bf16.mxu0 0
  %5616 = vmatpush1.bf16.msra.mxu0 0
  %5617 = vmatprep.subr.bf16.mxu0 0
  %5618 = vmatpush1.bf16.msra.mxu0 0
  %5619 = vmatprep.subr.bf16.mxu0 0
  %5620 = vmatpush1.bf16.msra.mxu0 %v5603
  %5621 = vmatprep.subr.bf16.mxu0 0
  %5622 = vmatpush2.bf16.msra.mxu0 0
  %5623 = vmatprep.subr.bf16.mxu0 0
  %5624 = vmatpush2.bf16.msra.mxu0 0
  %5625 = vmatprep.subr.bf16.mxu0 0
  %5626 = vmatpush2.bf16.msra.mxu0 0
  %5627 = vmatprep.subr.bf16.mxu0 0
  %5628 = vmatpush2.bf16.msra.mxu0 0
  %5629 = vmatprep.subr.bf16.mxu0 0
  %5630 = vmatpush2.bf16.msra.mxu0 0
  %5631 = vmatprep.subr.bf16.mxu0 0
  %5632 = vmatpush2.bf16.msra.mxu0 0
  %5633 = vmatprep.subr.bf16.mxu0 0
  %5634 = vmatpush2.bf16.msra.mxu0 0
  %5635 = vmatprep.subr.bf16.mxu0 0
  %5636 = vmatpush2.bf16.msra.mxu0 0
  %5637 = vmatprep.mubr.bf16.mxu0 0
  %5638 = vmatmul.mubr.bf16.gmra.mxu0 %v5597
  %v5639 = vpop.f32.mrf.mxu0
  %v5640 = vadd.f32 0.0, %v5639
  %v5641 = vpop.f32.mrf.mxu0
  %v5642 = vpop.f32.mrf.mxu0
  %v5643 = vadd.f32 0.0, %v5642
  %v5644 = vpop.f32.mrf.mxu0
  %5645 = vmatprep.mubr.bf16.mxu0 0
  %5646 = vmatmul.mubr.bf16.gmra.mxu0 %v5600
  %v5647 = vpop.f32.mrf.mxu0
  %v5648 = vadd.f32 0.0, %v5647
  %v5649 = vpop.f32.mrf.mxu0
  %v5650 = vpop.f32.mrf.mxu0
  %v5651 = vpop.f32.mrf.mxu0
  %5652 = vdwg.mxu0
  %v5653 = vadd.f32 %v5573, %v5640
  %v5654 = vadd.f32 %v5576, %v5643
  %v5655 = vadd.f32 %v5581, %v5648
  %vm5656 = vcmask 48128
  %v5657 = vsel %vm5656, %v5653, 0.0
  %5658 = vadd.xlane.f32.xlu0 %v5657
  %v5659 = vpop.xlane.xlu0 %5658
  %v5660 = vsel %vm5656, %v5654, 0.0
  %5661 = vadd.xlane.f32.xlu0 %v5660
  %v5662 = vpop.xlane.xlu0 %5661
  %v5663 = vsel %vm5656, %v5655, 0.0
  %5664 = vadd.xlane.f32.xlu0 %v5663
  %v5665 = vpop.xlane.xlu0 %5664
  %v5666 = vmul.f32 %v5653, %v5653
  %v5667 = vmul.f32 %v5654, %v5654
  %v5668 = vmul.f32 %v5655, %v5655
  %v5669 = vsel %vm5656, %v5666, 0.0
  %5670 = vadd.xlane.f32.xlu0 %v5669
  %v5671 = vpop.xlane.xlu0 %5670
  %v5672 = vsel %vm5656, %v5667, 0.0
  %5673 = vadd.xlane.f32.xlu0 %v5672
  %v5674 = vpop.xlane.xlu0 %5673
  %v5675 = vsel %vm5656, %v5668, 0.0
  %5676 = vadd.xlane.f32.xlu0 %v5675
  %v5677 = vpop.xlane.xlu0 %5676
  %v5678 = vsel %vm1912, %v5659, %v5671
  %v5679 = vsel %vm1912, %v5662, %v5674
  %v5680 = vsel %vm1912, %v5665, %v5677
  %vm5681 = vcmask 195584
  %v5682 = vsel %vm5681, %v3940, 0
  %5684 = vmatprep.subr.mxu0 0.0
  %5685 = vmatpush1.msra.mxu0 0.0
  %5686 = vmatprep.subr.mxu0 0.0
  %5687 = vmatpush1.msra.mxu0 0.0
  %5688 = vmatprep.subr.mxu0 0.0
  %5689 = vmatpush1.msra.mxu0 0.0
  %5690 = vmatprep.subr.mxu0 0.0
  %5691 = vmatpush1.msra.mxu0 0.0
  %5692 = vmatprep.subr.mxu0 0.0
  %5693 = vmatpush1.msra.mxu0 0.0
  %5694 = vmatprep.subr.mxu0 0.0
  %5695 = vmatpush1.msra.mxu0 0.0
  %5696 = vmatprep.subr.mxu0 0.0
  %5697 = vmatpush1.msra.mxu0 0.0
  %5698 = vmatprep.subr.mxu0 0.0
  %5699 = vmatpush1.msra.mxu0 0.0
  %5700 = vmatprep.subr.mxu0 0.0
  %5701 = vmatpush1.msra.mxu0 0.0
  %5702 = vmatprep.subr.mxu0 0.0
  %5703 = vmatpush1.msra.mxu0 0.0
  %5704 = vmatprep.subr.mxu0 0.0
  %5705 = vmatpush1.msra.mxu0 0.0
  %5706 = vmatprep.subr.mxu0 0.0
  %5707 = vmatpush1.msra.mxu0 0.0
  %5708 = vmatprep.subr.mxu0 0.0
  %5709 = vmatpush1.msra.mxu0 0.0
  %5710 = vmatprep.subr.mxu0 0.0
  %5711 = vmatpush1.msra.mxu0 %v5680
  %5712 = vmatprep.subr.mxu0 0.0
  %5713 = vmatpush1.msra.mxu0 %v5679
  %5714 = vmatprep.subr.mxu0 0.0
  %5715 = vmatpush1.msra.mxu0 %v5678
  %5716 = vmatprep.subr.mxu0 0.0
  %5717 = vmatpush2.msra.mxu0 0.0
  %5718 = vmatprep.subr.mxu0 0.0
  %5719 = vmatpush2.msra.mxu0 0.0
  %5720 = vmatprep.subr.mxu0 0.0
  %5721 = vmatpush2.msra.mxu0 0.0
  %5722 = vmatprep.subr.mxu0 0.0
  %5723 = vmatpush2.msra.mxu0 0.0
  %5724 = vmatprep.subr.mxu0 0.0
  %5725 = vmatpush2.msra.mxu0 0.0
  %5726 = vmatprep.subr.mxu0 0.0
  %5727 = vmatpush2.msra.mxu0 0.0
  %5728 = vmatprep.subr.mxu0 0.0
  %5729 = vmatpush2.msra.mxu0 0.0
  %5730 = vmatprep.subr.mxu0 0.0
  %5731 = vmatpush2.msra.mxu0 0.0
  %5732 = vmatprep.subr.mxu0 0.0
  %5733 = vmatpush2.msra.mxu0 0.0
  %5734 = vmatprep.subr.mxu0 0.0
  %5735 = vmatpush2.msra.mxu0 0.0
  %5736 = vmatprep.subr.mxu0 0.0
  %5737 = vmatpush2.msra.mxu0 0.0
  %5738 = vmatprep.subr.mxu0 0.0
  %5739 = vmatpush2.msra.mxu0 0.0
  %5740 = vmatprep.subr.mxu0 0.0
  %5741 = vmatpush2.msra.mxu0 0.0
  %5742 = vmatprep.subr.mxu0 0.0
  %5743 = vmatpush2.msra.mxu0 0.0
  %5744 = vmatprep.subr.mxu0 0.0
  %5745 = vmatpush2.msra.mxu0 0.0
  %5746 = vmatprep.subr.mxu0 0.0
  %5747 = vmatpush2.msra.mxu0 0.0
  %5748 = vmatprep.mubr.f32.mxu0 0.0
  %5749 = vmatmul.mubr.f32.gmra.mxu0 %v5682
  %v5750 = vpop.f32.mrf.mxu0
  %v5751 = vadd.f32 0.0, %v5750
  %v5752 = vpop.f32.mrf.mxu0
  %5753 = vdwg.mxu0
  %v5754 = vmul.f32 %v5751, 0.055555556
  %v5755 = vmul.f32 %v5754, %v5754
  %5757 = vrot.lane.b32.xlu0 %v5755, 1
  %v5758 = vpop.permute.xlu0 %5757
  %v5760 = vsub.f32 %v5754, %v5758
  %v5761 = vmax.f32 %v5760, 0.0
  %s5762 = scalar_lea.vmem %s8, 24
  %v5763 = vld [vmem:[%s5762] sm:$0xff]
  %v5764 = vadd.f32 %v5761, 1e-05
  %v5765 = vrsqrt.pop %v5764
  %5767 = vrot.lane.b32.xlu0 %v5765, 127
  %v5768 = vpop.permute.xlu0 %5767
  %v5770 = vmul.f32 %v5763, %v5768
  %v5771 = vmul.f32 %v5754, %v5770
  %5773 = vrot.lane.b32.xlu0 %v5771, 1
  %v5774 = vpop.permute.xlu0 %5773
  %v5776 = vsub.f32 %v5763, %v5774
  %v5777 = vsel %vm1912, %v5770, %v5776
  %v5778 = vld [vmem:[%s6] sm:$0xff]
  %v5779 = vld [vmem:[%s6 + $0x8] sm:$0xff]
  %v5780 = vld [vmem:[%s6 + $0x10] sm:$0xff]
  %v5782 = vsel %vm2074, %v5778, 0
  %v5785 = vsel %vm2074, %v5779, 0
  %v5788 = vsel %vm2074, %v5780, 0
  %5790 = vmatprep.subr.mxu0 0.0
  %5791 = vmatpush1.msra.mxu0 0.0
  %5792 = vmatprep.subr.mxu0 0.0
  %5793 = vmatpush1.msra.mxu0 0.0
  %5794 = vmatprep.subr.mxu0 0.0
  %5795 = vmatpush1.msra.mxu0 0.0
  %5796 = vmatprep.subr.mxu0 0.0
  %5797 = vmatpush1.msra.mxu0 0.0
  %5798 = vmatprep.subr.mxu0 0.0
  %5799 = vmatpush1.msra.mxu0 0.0
  %5800 = vmatprep.subr.mxu0 0.0
  %5801 = vmatpush1.msra.mxu0 0.0
  %5802 = vmatprep.subr.mxu0 0.0
  %5803 = vmatpush1.msra.mxu0 0.0
  %5804 = vmatprep.subr.mxu0 0.0
  %5805 = vmatpush1.msra.mxu0 0.0
  %5806 = vmatprep.subr.mxu0 0.0
  %5807 = vmatpush1.msra.mxu0 0.0
  %5808 = vmatprep.subr.mxu0 0.0
  %5809 = vmatpush1.msra.mxu0 0.0
  %5810 = vmatprep.subr.mxu0 0.0
  %5811 = vmatpush1.msra.mxu0 0.0
  %5812 = vmatprep.subr.mxu0 0.0
  %5813 = vmatpush1.msra.mxu0 0.0
  %5814 = vmatprep.subr.mxu0 0.0
  %5815 = vmatpush1.msra.mxu0 0.0
  %5816 = vmatprep.subr.mxu0 0.0
  %5817 = vmatpush1.msra.mxu0 0.0
  %5818 = vmatprep.subr.mxu0 0.0
  %5819 = vmatpush1.msra.mxu0 0.0
  %5820 = vmatprep.subr.mxu0 0.0
  %5821 = vmatpush1.msra.mxu0 %v5777
  %5822 = vmatprep.subr.mxu0 0.0
  %5823 = vmatpush2.msra.mxu0 0.0
  %5824 = vmatprep.subr.mxu0 0.0
  %5825 = vmatpush2.msra.mxu0 0.0
  %5826 = vmatprep.subr.mxu0 0.0
  %5827 = vmatpush2.msra.mxu0 0.0
  %5828 = vmatprep.subr.mxu0 0.0
  %5829 = vmatpush2.msra.mxu0 0.0
  %5830 = vmatprep.subr.mxu0 0.0
  %5831 = vmatpush2.msra.mxu0 0.0
  %5832 = vmatprep.subr.mxu0 0.0
  %5833 = vmatpush2.msra.mxu0 0.0
  %5834 = vmatprep.subr.mxu0 0.0
  %5835 = vmatpush2.msra.mxu0 0.0
  %5836 = vmatprep.subr.mxu0 0.0
  %5837 = vmatpush2.msra.mxu0 0.0
  %5838 = vmatprep.subr.mxu0 0.0
  %5839 = vmatpush2.msra.mxu0 0.0
  %5840 = vmatprep.subr.mxu0 0.0
  %5841 = vmatpush2.msra.mxu0 0.0
  %5842 = vmatprep.subr.mxu0 0.0
  %5843 = vmatpush2.msra.mxu0 0.0
  %5844 = vmatprep.subr.mxu0 0.0
  %5845 = vmatpush2.msra.mxu0 0.0
  %5846 = vmatprep.subr.mxu0 0.0
  %5847 = vmatpush2.msra.mxu0 0.0
  %5848 = vmatprep.subr.mxu0 0.0
  %5849 = vmatpush2.msra.mxu0 0.0
  %5850 = vmatprep.subr.mxu0 0.0
  %5851 = vmatpush2.msra.mxu0 0.0
  %5852 = vmatprep.subr.mxu0 0.0
  %5853 = vmatpush2.msra.mxu0 0.0
  %5854 = vmatprep.mubr.f32.mxu0 0.0
  %5855 = vmatmul.mubr.f32.gmra.mxu0 %v5782
  %v5856 = vpop.f32.mrf.mxu0
  %v5857 = vadd.f32 0.0, %v5856
  %v5858 = vpop.f32.mrf.mxu0
  %5859 = vmatprep.mubr.f32.mxu0 0.0
  %5860 = vmatmul.mubr.f32.gmra.mxu0 %v5785
  %v5861 = vpop.f32.mrf.mxu0
  %v5862 = vadd.f32 0.0, %v5861
  %v5863 = vpop.f32.mrf.mxu0
  %5864 = vmatprep.mubr.f32.mxu0 0.0
  %5865 = vmatmul.mubr.f32.gmra.mxu0 %v5788
  %v5866 = vpop.f32.mrf.mxu0
  %v5867 = vadd.f32 0.0, %v5866
  %v5868 = vpop.f32.mrf.mxu0
  %5869 = vdwg.mxu0
  %5871 = vset.pattern.permute.xlu0 0
  %5872 = vperm.xlu0 %5871, %v5857
  %v5873 = vpop.permute.xlu0 %5872
  %5876 = vset.pattern.permute.xlu0 0
  %5877 = vperm.xlu0 %5876, %v5862
  %v5878 = vpop.permute.xlu0 %5877
  %5881 = vset.pattern.permute.xlu0 0
  %5882 = vperm.xlu0 %5881, %v5867
  %v5883 = vpop.permute.xlu0 %5882
  %v5885 = vmul.f32 %v5653, %v5873
  %v5886 = vmul.f32 %v5654, %v5878
  %v5887 = vmul.f32 %v5655, %v5883
  %5888 = vset.pattern.permute.xlu0 1
  %5889 = vperm.xlu0 %5888, %v5857
  %v5890 = vpop.permute.xlu0 %5889
  %5892 = vset.pattern.permute.xlu0 1
  %5893 = vperm.xlu0 %5892, %v5862
  %v5894 = vpop.permute.xlu0 %5893
  %5896 = vset.pattern.permute.xlu0 1
  %5897 = vperm.xlu0 %5896, %v5867
  %v5898 = vpop.permute.xlu0 %5897
  %v5900 = vadd.f32 %v5885, %v5890
  %v5901 = vadd.f32 %v5886, %v5894
  %v5902 = vadd.f32 %v5887, %v5898
  %v5903 = vmax.f32 %v5900, 0.0
  %v5904 = vmax.f32 %v5901, 0.0
  %v5905 = vmax.f32 %v5902, 0.0
  %5906 = vst.msk [vmem:[%s9] sm:$0xff] %vm5656, %v5903
  %5907 = vst.msk [vmem:[%s9 + $0x8] sm:$0xff] %vm5656, %v5904
  %5908 = vst.msk [vmem:[%s9 + $0x10] sm:$0xff] %vm5656, %v5905
  // Predicated region
  $region38: #{forward.1} parent=0 // pred_check
    _
  $region39: #{forward.1} parent=0 // pred_check_branch
    %5910 = sbr.rel (0) target = $region41
  $region40: #{forward.1} parent=0 // pred_region
    _
  $region41: #{forward.1} parent=0 // pred_fallthru
    _
  // Predicated region
  $region42: #{forward.1} parent=0 // pred_check
    _
  $region43: #{forward.1} parent=0 // pred_check_branch
    %5912 = sbr.rel (0) target = $region45
  $region44: #{forward.1} parent=0 // pred_region
    _
  $region45: #{forward.1} parent=0 // pred_fallthru
    _

</llo_original>
